<compile_context>
chip_gen: v5e
topology: v5e:2x2
jax: 0.10.0
libtpu: 0.0.40
codegen_flags: <defaults>
</compile_context>

<pallas_src>
import math

import jax
import jax.numpy as jnp
from jax.experimental import pallas as pl

# ---- model hyper-parameters (small, consistent with the module) ----
D_MODEL = 32          # args.d_model
HEADS = 4             # args.heads
D_K = D_MODEL // HEADS
D_FF = 2048           # FeedForward default d_ff
N_LAYERS = 2          # args.num_layer
EPS = 1e-6            # Norm eps
SEQ = 8
BATCH = 2

_ROWS_PER_LAYER = 6   # n1_alpha, n1_bias, n2_alpha, n2_bias, b_eff, b2
INV_SQRT_DK = 1.0 / math.sqrt(D_K)


def _layernorm(v, alpha, bias):
    # PyTorch Norm: alpha * (x - mean) / (std + eps) + bias, torch.std's
    # *unbiased* (d-1) estimator.  Exact divide here (the approx reciprocal is
    # kept only for the softmax denominator) -- layernorm scale error would
    # compound across layers.
    mu = jnp.mean(v, axis=-1, keepdims=True)
    var = jnp.sum((v - mu) ** 2, axis=-1, keepdims=True) * (1.0 / (D_MODEL - 1))
    return alpha * (v - mu) / (jnp.sqrt(var) + EPS) + bias


def transformer_kernel(x_ref, mask_ref, rows_ref, b1_ref, a_ref, m_ref,
                       w1_ref, w2_ref, o_ref):
    """Fully fused forward: N_LAYERS pre-norm encoder layers + final norm.

    x_ref    : (B*S, D)            activations, batch folded into matmul M dim
    mask_ref : (B*S, B*S)          additive mask (0 = attend, -1e9 = blocked)
    rows_ref : (6*L + 2, D)  f32   packed small rows (norm params, b_eff, b2, final)
    b1_ref   : (L, D_FF)     f32   FFN first bias per layer
    a_ref    : (L, H, D, D)  bf16  folded Wq_h @ Wk_h^T / sqrt(d_k)
    m_ref    : (L, H, D, D)  bf16  folded Wv_h @ Wo_h
    w1_ref   : (L, D, D_FF)  bf16  FFN first weight
    w2_ref   : (L, D_FF, D)  bf16  FFN second weight
    """
    x = x_ref[...]                      # (BS, D) f32 -- stays on-chip throughout
    mask_add = mask_ref[...]            # additive mask, shared by all heads/layers
    bs = x.shape[0]

    def row(r):                         # (1, D) f32 slice of the packed rows
        return rows_ref[r:r + 1, :]

    for layer in range(N_LAYERS):       # static unroll over layers
        r0 = layer * _ROWS_PER_LAYER

        # ---- sub-layer 1: pre-norm multi-head self-attention + residual ----
        x2 = _layernorm(x, row(r0 + 0), row(r0 + 1))
        x2_b = x2.astype(jnp.bfloat16)              # MXU operand
        x2t_b = x2.T.astype(jnp.bfloat16)           # one transpose per layer
        acc = jnp.zeros((bs, D_MODEL), jnp.float32)
        for h in range(HEADS):                       # static unroll over heads
            # s_h = (x2 @ A_h) @ x2^T   (scale already folded into A_h)
            qa = jnp.dot(x2_b, a_ref[layer, h, :, :],
                         preferred_element_type=jnp.float32)         # (BS, D)
            s = jnp.dot(qa.astype(jnp.bfloat16), x2t_b,
                        preferred_element_type=jnp.float32)          # (BS, BS)
            s = s + mask_add
            s = s - jnp.max(s, axis=-1, keepdims=True)
            e = jnp.exp(s)
            p = e * pl.reciprocal(jnp.sum(e, axis=-1, keepdims=True),
                                  approx=True)
            # head contribution: softmax(s_h) @ (x2 @ M_h), accumulated in f32
            xm = jnp.dot(x2_b, m_ref[layer, h, :, :],
                         preferred_element_type=jnp.float32)         # (BS, D)
            acc = acc + jnp.dot(p.astype(jnp.bfloat16),
                                xm.astype(jnp.bfloat16),
                                preferred_element_type=jnp.float32)
        x = x + acc + row(r0 + 4)        # b_eff = bo + bv @ Wo; dropout_1 == id

        # ---- sub-layer 2: pre-norm feed-forward + residual ----
        x2 = _layernorm(x, row(r0 + 2), row(r0 + 3))
        h1 = jnp.maximum(
            jnp.dot(x2.astype(jnp.bfloat16), w1_ref[layer, :, :],
                    preferred_element_type=jnp.float32)
            + b1_ref[layer:layer + 1, :], 0.0)
        ff = jnp.dot(h1.astype(jnp.bfloat16), w2_ref[layer, :, :],
                     preferred_element_type=jnp.float32) + row(r0 + 5)
        x = x + ff                       # dropout_2 == identity (eval)

    # ---- final norm ----
    fr = N_LAYERS * _ROWS_PER_LAYER
    o_ref[...] = _layernorm(x, row(fr), row(fr + 1))


def _build_additive_mask(mask):
    """mask: (B, 1, S), 1.0 = attend.  Returns a (B*S, B*S) additive mask that
    is 0 within a batch on valid keys and -1e9 elsewhere (cross-batch or
    padded), so folding batch into the matmul M dimension reproduces the
    per-batch masked softmax exactly."""
    B = mask.shape[0]
    S = mask.shape[2]
    attend = mask[:, 0, :]                                        # (B, S)
    eye = jnp.eye(B, dtype=jnp.float32)
    allowed = eye[:, None, :, None] * attend[None, None, :, :]    # (B,1,B,S)
    allowed = jnp.broadcast_to(allowed, (B, S, B, S)).reshape(B * S, B * S)
    return (allowed - 1.0) * 1e9                                  # 0 / -1e9


def pack_params(layer_params, final_a, final_b):
    """One-time (load-time) parameter preprocessing: fold the per-head
    attention projections and stack all small operands into 6 arrays."""
    rows, a_l, m_l, w1_l, b1_l, w2_l = [], [], [], [], [], []
    for (n1a, n1b, wq, wk, wv, wo, bv, bo, n2a, n2b, w1, b1, w2, b2) in layer_params:
        a_heads, m_heads = [], []
        for h in range(HEADS):
            lo = h * D_K
            a_heads.append((wq[:, lo:lo + D_K] @ wk[:, lo:lo + D_K].T) * INV_SQRT_DK)
            m_heads.append(wv[:, lo:lo + D_K] @ wo[lo:lo + D_K, :])
        b_eff = bo + bv @ wo          # exact: softmax rows sum to 1
        rows += [n1a, n1b, n2a, n2b, b_eff, b2]
        a_l.append(jnp.stack(a_heads))
        m_l.append(jnp.stack(m_heads))
        w1_l.append(w1)
        b1_l.append(b1)
        w2_l.append(w2)
    rows += [final_a, final_b]
    return (jnp.concatenate(rows, axis=0).astype(jnp.float32),     # (6L+2, D)
            jnp.concatenate(b1_l, axis=0).astype(jnp.float32),     # (L, D_FF)
            jnp.stack(a_l).astype(jnp.bfloat16),                   # (L, H, D, D)
            jnp.stack(m_l).astype(jnp.bfloat16),                   # (L, H, D, D)
            jnp.stack(w1_l).astype(jnp.bfloat16),                  # (L, D, D_FF)
            jnp.stack(w2_l).astype(jnp.bfloat16))                  # (L, D_FF, D)


@jax.jit
def transformer_forward(x, mask, rows, b1, a_all, m_all, w1_all, w2_all):
    B, S, D = x.shape
    x_flat = x.reshape(B * S, D)            # batch folded into the matmul M dim
    mask_add = _build_additive_mask(mask)

    out = pl.pallas_call(
        transformer_kernel,
        out_shape=jax.ShapeDtypeStruct((B * S, D), jnp.float32),
        # Single grid-less invocation: 8 operands, each mapped as a whole-array
        # VMEM block (~0.7 MiB resident total -- fits v5e/v6e/v7x easily).
    )(x_flat, mask_add, rows, b1, a_all, m_all, w1_all, w2_all)
    return out.reshape(B, S, D)


def init_params(key):
    """Deterministic synthetic parameters in PyTorch-equivalent layout.

    Linear weights are pre-transposed to (in, out) so y = x @ W + b matches
    PyTorch's x @ W.T + b.  q/k projections are bias-free (see TODO at top);
    v / out / FFN biases are nonzero and handled exactly.  Norm alpha=1,
    bias=0 (module's initialization)."""
    layer_params = []
    for i in range(N_LAYERS):
        ks = jax.random.split(jax.random.fold_in(key, i), 10)

        def w(k, din, dout):
            return jax.random.normal(k, (din, dout), jnp.float32) * 0.02

        def b(k, dim):
            return jax.random.normal(k, (1, dim), jnp.float32) * 0.02

        wq = w(ks[0], D_MODEL, D_MODEL)
        wk = w(ks[1], D_MODEL, D_MODEL)
        wv = w(ks[2], D_MODEL, D_MODEL)
        wo = w(ks[3], D_MODEL, D_MODEL)
        bv = b(ks[4], D_MODEL)
        bo = b(ks[5], D_MODEL)
        w1 = w(ks[6], D_MODEL, D_FF)
        b1 = b(ks[7], D_FF)
        w2 = w(ks[8], D_FF, D_MODEL)
        b2 = b(ks[9], D_MODEL)
        n1a = jnp.ones((1, D_MODEL), jnp.float32)
        n1b = jnp.zeros((1, D_MODEL), jnp.float32)
        n2a = jnp.ones((1, D_MODEL), jnp.float32)
        n2b = jnp.zeros((1, D_MODEL), jnp.float32)
        layer_params.append((n1a, n1b, wq, wk, wv, wo, bv, bo,
                             n2a, n2b, w1, b1, w2, b2))
    final_a = jnp.ones((1, D_MODEL), jnp.float32)
    final_b = jnp.zeros((1, D_MODEL), jnp.float32)
    return layer_params, final_a, final_b


if __name__ == "__main__":
    key = jax.random.PRNGKey(0)
    k_x, k_p = jax.random.split(key)

    x = jax.random.normal(k_x, (BATCH, SEQ, D_MODEL), jnp.float32)
    # padding mask: batch 0 fully valid, batch 1 has last 2 positions padded
    mask = jnp.ones((BATCH, 1, SEQ), jnp.float32)
    mask = mask.at[1, 0, SEQ - 2:].set(0.0)

    layer_params, final_a, final_b = init_params(k_p)
    packed = pack_params(layer_params, final_a, final_b)   # one-time preprocessing

    out = transformer_forward(x, mask, *packed)
    out = jax.block_until_ready(out)

    assert out.shape == (BATCH, SEQ, D_MODEL)
    assert bool(jnp.all(jnp.isfinite(out)))
    print("KERNEL_OK")
</pallas_src>

<mosaic_0001>
module attributes {stable_mosaic.version = 11 : i64} {
  func.func @transformer_kernel(%arg0: memref<16x32xf32, #tpu.memory_space<vmem>>, %arg1: memref<16x16xf32, #tpu.memory_space<vmem>>, %arg2: memref<14x32xf32, #tpu.memory_space<vmem>>, %arg3: memref<2x2048xf32, #tpu.memory_space<vmem>>, %arg4: memref<2x4x32x32xbf16, #tpu.memory_space<vmem>>, %arg5: memref<2x4x32x32xbf16, #tpu.memory_space<vmem>>, %arg6: memref<2x32x2048xbf16, #tpu.memory_space<vmem>>, %arg7: memref<2x2048x32xbf16, #tpu.memory_space<vmem>>, %arg8: memref<16x32xf32, #tpu.memory_space<vmem>>) attributes {dimension_semantics = [], scalar_prefetch = 0 : i64, scratch_operands = 0 : i64, tpu.core_type = #tpu.core_type<tc>} {
    %c0 = arith.constant 0 : index
    %c0_0 = arith.constant 0 : index
    %0 = vector.load %arg0[%c0, %c0_0] : memref<16x32xf32, #tpu.memory_space<vmem>>, vector<16x32xf32>
    %c0_1 = arith.constant 0 : index
    %c0_2 = arith.constant 0 : index
    %1 = vector.load %arg1[%c0_1, %c0_2] : memref<16x16xf32, #tpu.memory_space<vmem>>, vector<16x16xf32>
    %c0_3 = arith.constant 0 : index
    %c0_4 = arith.constant 0 : index
    %2 = vector.load %arg2[%c0_3, %c0_4] : memref<14x32xf32, #tpu.memory_space<vmem>>, vector<1x32xf32>
    %c1 = arith.constant 1 : index
    %c0_5 = arith.constant 0 : index
    %3 = vector.load %arg2[%c1, %c0_5] : memref<14x32xf32, #tpu.memory_space<vmem>>, vector<1x32xf32>
    %cst = arith.constant dense<0.000000e+00> : vector<16xf32>
    %4 = vector.multi_reduction <add>, %0, %cst [1] : vector<16x32xf32> to vector<16xf32>
    %5 = vector.shape_cast %4 : vector<16xf32> to vector<16x1xf32>
    %cst_6 = arith.constant 3.200000e+01 : f32
    %6 = vector.broadcast %cst_6 : f32 to vector<16x1xf32>
    %7 = arith.divf %5, %6 : vector<16x1xf32>
    %8 = vector.broadcast %7 : vector<16x1xf32> to vector<16x32xf32>
    %9 = arith.subf %0, %8 : vector<16x32xf32>
    %10 = arith.mulf %9, %9 : vector<16x32xf32>
    %cst_7 = arith.constant dense<0.000000e+00> : vector<16xf32>
    %11 = vector.multi_reduction <add>, %10, %cst_7 [1] : vector<16x32xf32> to vector<16xf32>
    %12 = vector.shape_cast %11 : vector<16xf32> to vector<16x1xf32>
    %cst_8 = arith.constant 0.0322580636 : f32
    %13 = vector.broadcast %cst_8 : f32 to vector<16x1xf32>
    %14 = arith.mulf %12, %13 : vector<16x1xf32>
    %15 = vector.broadcast %7 : vector<16x1xf32> to vector<16x32xf32>
    %16 = arith.subf %0, %15 : vector<16x32xf32>
    %17 = vector.broadcast %2 : vector<1x32xf32> to vector<16x32xf32>
    %18 = arith.mulf %17, %16 : vector<16x32xf32>
    %19 = math.sqrt %14 : vector<16x1xf32>
    %cst_9 = arith.constant 9.99999997E-7 : f32
    %20 = vector.broadcast %cst_9 : f32 to vector<16x1xf32>
    %21 = arith.addf %19, %20 : vector<16x1xf32>
    %22 = vector.broadcast %21 : vector<16x1xf32> to vector<16x32xf32>
    %23 = arith.divf %18, %22 : vector<16x32xf32>
    %24 = vector.broadcast %3 : vector<1x32xf32> to vector<16x32xf32>
    %25 = arith.addf %23, %24 : vector<16x32xf32>
    %26 = arith.truncf %25 : vector<16x32xf32> to vector<16x32xbf16>
    %27 = tpu.transpose %25, [1, 0] : vector<16x32xf32> -> vector<32x16xf32>
    %28 = arith.truncf %27 : vector<32x16xf32> to vector<32x16xbf16>
    %cst_10 = arith.constant 0.000000e+00 : f32
    %29 = vector.broadcast %cst_10 : f32 to vector<16x32xf32>
    %c0_11 = arith.constant 0 : index
    %c0_12 = arith.constant 0 : index
    %c0_13 = arith.constant 0 : index
    %c0_14 = arith.constant 0 : index
    %30 = vector.load %arg4[%c0_11, %c0_12, %c0_13, %c0_14] : memref<2x4x32x32xbf16, #tpu.memory_space<vmem>>, vector<1x1x32x32xbf16>
    %31 = vector.shape_cast %30 : vector<1x1x32x32xbf16> to vector<32x32xbf16>
    %cst_15 = arith.constant dense<0.000000e+00> : vector<16x32xf32>
    %32 = tpu.matmul %26, %31, %cst_15 {dimension_numbers = #tpu.dot_dimension_numbers<[1], [0], [0], [1], [0, 0, 1, 1], [], []>} : vector<16x32xbf16>, vector<32x32xbf16>, vector<16x32xf32> -> vector<16x32xf32>
    %33 = arith.truncf %32 : vector<16x32xf32> to vector<16x32xbf16>
    %cst_16 = arith.constant dense<0.000000e+00> : vector<16x16xf32>
    %34 = tpu.matmul %33, %28, %cst_16 {dimension_numbers = #tpu.dot_dimension_numbers<[1], [0], [0], [1], [0, 0, 1, 1], [], []>} : vector<16x32xbf16>, vector<32x16xbf16>, vector<16x16xf32> -> vector<16x16xf32>
    %35 = arith.addf %34, %1 : vector<16x16xf32>
    %cst_17 = arith.constant dense<0xFF800000> : vector<16xf32>
    %36 = vector.multi_reduction <maximumf>, %35, %cst_17 [1] : vector<16x16xf32> to vector<16xf32>
    %37 = vector.shape_cast %36 : vector<16xf32> to vector<16x1xf32>
    %38 = vector.broadcast %37 : vector<16x1xf32> to vector<16x16xf32>
    %39 = arith.subf %35, %38 : vector<16x16xf32>
    %40 = math.exp %39 : vector<16x16xf32>
    %cst_18 = arith.constant dense<0.000000e+00> : vector<16xf32>
    %41 = vector.multi_reduction <add>, %40, %cst_18 [1] : vector<16x16xf32> to vector<16xf32>
    %42 = vector.shape_cast %41 : vector<16xf32> to vector<16x1xf32>
    %43 = tpu.reciprocal %42 {approx = true} : vector<16x1xf32> -> vector<16x1xf32>
    %44 = vector.broadcast %43 : vector<16x1xf32> to vector<16x16xf32>
    %45 = arith.mulf %40, %44 : vector<16x16xf32>
    %c0_19 = arith.constant 0 : index
    %c0_20 = arith.constant 0 : index
    %c0_21 = arith.constant 0 : index
    %c0_22 = arith.constant 0 : index
    %46 = vector.load %arg5[%c0_19, %c0_20, %c0_21, %c0_22] : memref<2x4x32x32xbf16, #tpu.memory_space<vmem>>, vector<1x1x32x32xbf16>
    %47 = vector.shape_cast %46 : vector<1x1x32x32xbf16> to vector<32x32xbf16>
    %cst_23 = arith.constant dense<0.000000e+00> : vector<16x32xf32>
    %48 = tpu.matmul %26, %47, %cst_23 {dimension_numbers = #tpu.dot_dimension_numbers<[1], [0], [0], [1], [0, 0, 1, 1], [], []>} : vector<16x32xbf16>, vector<32x32xbf16>, vector<16x32xf32> -> vector<16x32xf32>
    %49 = arith.truncf %45 : vector<16x16xf32> to vector<16x16xbf16>
    %50 = arith.truncf %48 : vector<16x32xf32> to vector<16x32xbf16>
    %cst_24 = arith.constant dense<0.000000e+00> : vector<16x32xf32>
    %51 = tpu.matmul %49, %50, %cst_24 {dimension_numbers = #tpu.dot_dimension_numbers<[1], [0], [0], [1], [0, 0, 1, 1], [], []>} : vector<16x16xbf16>, vector<16x32xbf16>, vector<16x32xf32> -> vector<16x32xf32>
    %52 = arith.addf %29, %51 : vector<16x32xf32>
    %c0_25 = arith.constant 0 : index
    %c1_26 = arith.constant 1 : index
    %c0_27 = arith.constant 0 : index
    %c0_28 = arith.constant 0 : index
    %53 = vector.load %arg4[%c0_25, %c1_26, %c0_27, %c0_28] : memref<2x4x32x32xbf16, #tpu.memory_space<vmem>>, vector<1x1x32x32xbf16>
    %54 = vector.shape_cast %53 : vector<1x1x32x32xbf16> to vector<32x32xbf16>
    %cst_29 = arith.constant dense<0.000000e+00> : vector<16x32xf32>
    %55 = tpu.matmul %26, %54, %cst_29 {dimension_numbers = #tpu.dot_dimension_numbers<[1], [0], [0], [1], [0, 0, 1, 1], [], []>} : vector<16x32xbf16>, vector<32x32xbf16>, vector<16x32xf32> -> vector<16x32xf32>
    %56 = arith.truncf %55 : vector<16x32xf32> to vector<16x32xbf16>
    %cst_30 = arith.constant dense<0.000000e+00> : vector<16x16xf32>
    %57 = tpu.matmul %56, %28, %cst_30 {dimension_numbers = #tpu.dot_dimension_numbers<[1], [0], [0], [1], [0, 0, 1, 1], [], []>} : vector<16x32xbf16>, vector<32x16xbf16>, vector<16x16xf32> -> vector<16x16xf32>
    %58 = arith.addf %57, %1 : vector<16x16xf32>
    %cst_31 = arith.constant dense<0xFF800000> : vector<16xf32>
    %59 = vector.multi_reduction <maximumf>, %58, %cst_31 [1] : vector<16x16xf32> to vector<16xf32>
    %60 = vector.shape_cast %59 : vector<16xf32> to vector<16x1xf32>
    %61 = vector.broadcast %60 : vector<16x1xf32> to vector<16x16xf32>
    %62 = arith.subf %58, %61 : vector<16x16xf32>
    %63 = math.exp %62 : vector<16x16xf32>
    %cst_32 = arith.constant dense<0.000000e+00> : vector<16xf32>
    %64 = vector.multi_reduction <add>, %63, %cst_32 [1] : vector<16x16xf32> to vector<16xf32>
    %65 = vector.shape_cast %64 : vector<16xf32> to vector<16x1xf32>
    %66 = tpu.reciprocal %65 {approx = true} : vector<16x1xf32> -> vector<16x1xf32>
    %67 = vector.broadcast %66 : vector<16x1xf32> to vector<16x16xf32>
    %68 = arith.mulf %63, %67 : vector<16x16xf32>
    %c0_33 = arith.constant 0 : index
    %c1_34 = arith.constant 1 : index
    %c0_35 = arith.constant 0 : index
    %c0_36 = arith.constant 0 : index
    %69 = vector.load %arg5[%c0_33, %c1_34, %c0_35, %c0_36] : memref<2x4x32x32xbf16, #tpu.memory_space<vmem>>, vector<1x1x32x32xbf16>
    %70 = vector.shape_cast %69 : vector<1x1x32x32xbf16> to vector<32x32xbf16>
    %cst_37 = arith.constant dense<0.000000e+00> : vector<16x32xf32>
    %71 = tpu.matmul %26, %70, %cst_37 {dimension_numbers = #tpu.dot_dimension_numbers<[1], [0], [0], [1], [0, 0, 1, 1], [], []>} : vector<16x32xbf16>, vector<32x32xbf16>, vector<16x32xf32> -> vector<16x32xf32>
    %72 = arith.truncf %68 : vector<16x16xf32> to vector<16x16xbf16>
    %73 = arith.truncf %71 : vector<16x32xf32> to vector<16x32xbf16>
    %cst_38 = arith.constant dense<0.000000e+00> : vector<16x32xf32>
    %74 = tpu.matmul %72, %73, %cst_38 {dimension_numbers = #tpu.dot_dimension_numbers<[1], [0], [0], [1], [0, 0, 1, 1], [], []>} : vector<16x16xbf16>, vector<16x32xbf16>, vector<16x32xf32> -> vector<16x32xf32>
    %75 = arith.addf %52, %74 : vector<16x32xf32>
    %c0_39 = arith.constant 0 : index
    %c2 = arith.constant 2 : index
    %c0_40 = arith.constant 0 : index
    %c0_41 = arith.constant 0 : index
    %76 = vector.load %arg4[%c0_39, %c2, %c0_40, %c0_41] : memref<2x4x32x32xbf16, #tpu.memory_space<vmem>>, vector<1x1x32x32xbf16>
    %77 = vector.shape_cast %76 : vector<1x1x32x32xbf16> to vector<32x32xbf16>
    %cst_42 = arith.constant dense<0.000000e+00> : vector<16x32xf32>
    %78 = tpu.matmul %26, %77, %cst_42 {dimension_numbers = #tpu.dot_dimension_numbers<[1], [0], [0], [1], [0, 0, 1, 1], [], []>} : vector<16x32xbf16>, vector<32x32xbf16>, vector<16x32xf32> -> vector<16x32xf32>
    %79 = arith.truncf %78 : vector<16x32xf32> to vector<16x32xbf16>
    %cst_43 = arith.constant dense<0.000000e+00> : vector<16x16xf32>
    %80 = tpu.matmul %79, %28, %cst_43 {dimension_numbers = #tpu.dot_dimension_numbers<[1], [0], [0], [1], [0, 0, 1, 1], [], []>} : vector<16x32xbf16>, vector<32x16xbf16>, vector<16x16xf32> -> vector<16x16xf32>
    %81 = arith.addf %80, %1 : vector<16x16xf32>
    %cst_44 = arith.constant dense<0xFF800000> : vector<16xf32>
    %82 = vector.multi_reduction <maximumf>, %81, %cst_44 [1] : vector<16x16xf32> to vector<16xf32>
    %83 = vector.shape_cast %82 : vector<16xf32> to vector<16x1xf32>
    %84 = vector.broadcast %83 : vector<16x1xf32> to vector<16x16xf32>
    %85 = arith.subf %81, %84 : vector<16x16xf32>
    %86 = math.exp %85 : vector<16x16xf32>
    %cst_45 = arith.constant dense<0.000000e+00> : vector<16xf32>
    %87 = vector.multi_reduction <add>, %86, %cst_45 [1] : vector<16x16xf32> to vector<16xf32>
    %88 = vector.shape_cast %87 : vector<16xf32> to vector<16x1xf32>
    %89 = tpu.reciprocal %88 {approx = true} : vector<16x1xf32> -> vector<16x1xf32>
    %90 = vector.broadcast %89 : vector<16x1xf32> to vector<16x16xf32>
    %91 = arith.mulf %86, %90 : vector<16x16xf32>
    %c0_46 = arith.constant 0 : index
    %c2_47 = arith.constant 2 : index
    %c0_48 = arith.constant 0 : index
    %c0_49 = arith.constant 0 : index
    %92 = vector.load %arg5[%c0_46, %c2_47, %c0_48, %c0_49] : memref<2x4x32x32xbf16, #tpu.memory_space<vmem>>, vector<1x1x32x32xbf16>
    %93 = vector.shape_cast %92 : vector<1x1x32x32xbf16> to vector<32x32xbf16>
    %cst_50 = arith.constant dense<0.000000e+00> : vector<16x32xf32>
    %94 = tpu.matmul %26, %93, %cst_50 {dimension_numbers = #tpu.dot_dimension_numbers<[1], [0], [0], [1], [0, 0, 1, 1], [], []>} : vector<16x32xbf16>, vector<32x32xbf16>, vector<16x32xf32> -> vector<16x32xf32>
    %95 = arith.truncf %91 : vector<16x16xf32> to vector<16x16xbf16>
    %96 = arith.truncf %94 : vector<16x32xf32> to vector<16x32xbf16>
    %cst_51 = arith.constant dense<0.000000e+00> : vector<16x32xf32>
    %97 = tpu.matmul %95, %96, %cst_51 {dimension_numbers = #tpu.dot_dimension_numbers<[1], [0], [0], [1], [0, 0, 1, 1], [], []>} : vector<16x16xbf16>, vector<16x32xbf16>, vector<16x32xf32> -> vector<16x32xf32>
    %98 = arith.addf %75, %97 : vector<16x32xf32>
    %c0_52 = arith.constant 0 : index
    %c3 = arith.constant 3 : index
    %c0_53 = arith.constant 0 : index
    %c0_54 = arith.constant 0 : index
    %99 = vector.load %arg4[%c0_52, %c3, %c0_53, %c0_54] : memref<2x4x32x32xbf16, #tpu.memory_space<vmem>>, vector<1x1x32x32xbf16>
    %100 = vector.shape_cast %99 : vector<1x1x32x32xbf16> to vector<32x32xbf16>
    %cst_55 = arith.constant dense<0.000000e+00> : vector<16x32xf32>
    %101 = tpu.matmul %26, %100, %cst_55 {dimension_numbers = #tpu.dot_dimension_numbers<[1], [0], [0], [1], [0, 0, 1, 1], [], []>} : vector<16x32xbf16>, vector<32x32xbf16>, vector<16x32xf32> -> vector<16x32xf32>
    %102 = arith.truncf %101 : vector<16x32xf32> to vector<16x32xbf16>
    %cst_56 = arith.constant dense<0.000000e+00> : vector<16x16xf32>
    %103 = tpu.matmul %102, %28, %cst_56 {dimension_numbers = #tpu.dot_dimension_numbers<[1], [0], [0], [1], [0, 0, 1, 1], [], []>} : vector<16x32xbf16>, vector<32x16xbf16>, vector<16x16xf32> -> vector<16x16xf32>
    %104 = arith.addf %103, %1 : vector<16x16xf32>
    %cst_57 = arith.constant dense<0xFF800000> : vector<16xf32>
    %105 = vector.multi_reduction <maximumf>, %104, %cst_57 [1] : vector<16x16xf32> to vector<16xf32>
    %106 = vector.shape_cast %105 : vector<16xf32> to vector<16x1xf32>
    %107 = vector.broadcast %106 : vector<16x1xf32> to vector<16x16xf32>
    %108 = arith.subf %104, %107 : vector<16x16xf32>
    %109 = math.exp %108 : vector<16x16xf32>
    %cst_58 = arith.constant dense<0.000000e+00> : vector<16xf32>
    %110 = vector.multi_reduction <add>, %109, %cst_58 [1] : vector<16x16xf32> to vector<16xf32>
    %111 = vector.shape_cast %110 : vector<16xf32> to vector<16x1xf32>
    %112 = tpu.reciprocal %111 {approx = true} : vector<16x1xf32> -> vector<16x1xf32>
    %113 = vector.broadcast %112 : vector<16x1xf32> to vector<16x16xf32>
    %114 = arith.mulf %109, %113 : vector<16x16xf32>
    %c0_59 = arith.constant 0 : index
    %c3_60 = arith.constant 3 : index
    %c0_61 = arith.constant 0 : index
    %c0_62 = arith.constant 0 : index
    %115 = vector.load %arg5[%c0_59, %c3_60, %c0_61, %c0_62] : memref<2x4x32x32xbf16, #tpu.memory_space<vmem>>, vector<1x1x32x32xbf16>
    %116 = vector.shape_cast %115 : vector<1x1x32x32xbf16> to vector<32x32xbf16>
    %cst_63 = arith.constant dense<0.000000e+00> : vector<16x32xf32>
    %117 = tpu.matmul %26, %116, %cst_63 {dimension_numbers = #tpu.dot_dimension_numbers<[1], [0], [0], [1], [0, 0, 1, 1], [], []>} : vector<16x32xbf16>, vector<32x32xbf16>, vector<16x32xf32> -> vector<16x32xf32>
    %118 = arith.truncf %114 : vector<16x16xf32> to vector<16x16xbf16>
    %119 = arith.truncf %117 : vector<16x32xf32> to vector<16x32xbf16>
    %cst_64 = arith.constant dense<0.000000e+00> : vector<16x32xf32>
    %120 = tpu.matmul %118, %119, %cst_64 {dimension_numbers = #tpu.dot_dimension_numbers<[1], [0], [0], [1], [0, 0, 1, 1], [], []>} : vector<16x16xbf16>, vector<16x32xbf16>, vector<16x32xf32> -> vector<16x32xf32>
    %121 = arith.addf %98, %120 : vector<16x32xf32>
    %122 = arith.addf %0, %121 : vector<16x32xf32>
    %c4 = arith.constant 4 : index
    %c0_65 = arith.constant 0 : index
    %123 = vector.load %arg2[%c4, %c0_65] : memref<14x32xf32, #tpu.memory_space<vmem>>, vector<1x32xf32>
    %124 = vector.broadcast %123 : vector<1x32xf32> to vector<16x32xf32>
    %125 = arith.addf %122, %124 : vector<16x32xf32>
    %c2_66 = arith.constant 2 : index
    %c0_67 = arith.constant 0 : index
    %126 = vector.load %arg2[%c2_66, %c0_67] : memref<14x32xf32, #tpu.memory_space<vmem>>, vector<1x32xf32>
    %c3_68 = arith.constant 3 : index
    %c0_69 = arith.constant 0 : index
    %127 = vector.load %arg2[%c3_68, %c0_69] : memref<14x32xf32, #tpu.memory_space<vmem>>, vector<1x32xf32>
    %cst_70 = arith.constant dense<0.000000e+00> : vector<16xf32>
    %128 = vector.multi_reduction <add>, %125, %cst_70 [1] : vector<16x32xf32> to vector<16xf32>
    %129 = vector.shape_cast %128 : vector<16xf32> to vector<16x1xf32>
    %cst_71 = arith.constant 3.200000e+01 : f32
    %130 = vector.broadcast %cst_71 : f32 to vector<16x1xf32>
    %131 = arith.divf %129, %130 : vector<16x1xf32>
    %132 = vector.broadcast %131 : vector<16x1xf32> to vector<16x32xf32>
    %133 = arith.subf %125, %132 : vector<16x32xf32>
    %134 = arith.mulf %133, %133 : vector<16x32xf32>
    %cst_72 = arith.constant dense<0.000000e+00> : vector<16xf32>
    %135 = vector.multi_reduction <add>, %134, %cst_72 [1] : vector<16x32xf32> to vector<16xf32>
    %136 = vector.shape_cast %135 : vector<16xf32> to vector<16x1xf32>
    %cst_73 = arith.constant 0.0322580636 : f32
    %137 = vector.broadcast %cst_73 : f32 to vector<16x1xf32>
    %138 = arith.mulf %136, %137 : vector<16x1xf32>
    %139 = vector.broadcast %131 : vector<16x1xf32> to vector<16x32xf32>
    %140 = arith.subf %125, %139 : vector<16x32xf32>
    %141 = vector.broadcast %126 : vector<1x32xf32> to vector<16x32xf32>
    %142 = arith.mulf %141, %140 : vector<16x32xf32>
    %143 = math.sqrt %138 : vector<16x1xf32>
    %cst_74 = arith.constant 9.99999997E-7 : f32
    %144 = vector.broadcast %cst_74 : f32 to vector<16x1xf32>
    %145 = arith.addf %143, %144 : vector<16x1xf32>
    %146 = vector.broadcast %145 : vector<16x1xf32> to vector<16x32xf32>
    %147 = arith.divf %142, %146 : vector<16x32xf32>
    %148 = vector.broadcast %127 : vector<1x32xf32> to vector<16x32xf32>
    %149 = arith.addf %147, %148 : vector<16x32xf32>
    %150 = arith.truncf %149 : vector<16x32xf32> to vector<16x32xbf16>
    %c0_75 = arith.constant 0 : index
    %c0_76 = arith.constant 0 : index
    %c0_77 = arith.constant 0 : index
    %151 = vector.load %arg6[%c0_75, %c0_76, %c0_77] : memref<2x32x2048xbf16, #tpu.memory_space<vmem>>, vector<1x32x2048xbf16>
    %152 = vector.shape_cast %151 : vector<1x32x2048xbf16> to vector<32x2048xbf16>
    %cst_78 = arith.constant dense<0.000000e+00> : vector<16x2048xf32>
    %153 = tpu.matmul %150, %152, %cst_78 {dimension_numbers = #tpu.dot_dimension_numbers<[1], [0], [0], [1], [0, 0, 1, 1], [], []>} : vector<16x32xbf16>, vector<32x2048xbf16>, vector<16x2048xf32> -> vector<16x2048xf32>
    %c0_79 = arith.constant 0 : index
    %c0_80 = arith.constant 0 : index
    %154 = vector.load %arg3[%c0_79, %c0_80] : memref<2x2048xf32, #tpu.memory_space<vmem>>, vector<1x2048xf32>
    %155 = vector.broadcast %154 : vector<1x2048xf32> to vector<16x2048xf32>
    %156 = arith.addf %153, %155 : vector<16x2048xf32>
    %cst_81 = arith.constant 0.000000e+00 : f32
    %157 = vector.broadcast %cst_81 : f32 to vector<16x2048xf32>
    %158 = arith.maximumf %156, %157 : vector<16x2048xf32>
    %159 = arith.truncf %158 : vector<16x2048xf32> to vector<16x2048xbf16>
    %c0_82 = arith.constant 0 : index
    %c0_83 = arith.constant 0 : index
    %c0_84 = arith.constant 0 : index
    %160 = vector.load %arg7[%c0_82, %c0_83, %c0_84] : memref<2x2048x32xbf16, #tpu.memory_space<vmem>>, vector<1x2048x32xbf16>
    %161 = vector.shape_cast %160 : vector<1x2048x32xbf16> to vector<2048x32xbf16>
    %cst_85 = arith.constant dense<0.000000e+00> : vector<16x32xf32>
    %162 = tpu.matmul %159, %161, %cst_85 {dimension_numbers = #tpu.dot_dimension_numbers<[1], [0], [0], [1], [0, 0, 1, 1], [], []>} : vector<16x2048xbf16>, vector<2048x32xbf16>, vector<16x32xf32> -> vector<16x32xf32>
    %c5 = arith.constant 5 : index
    %c0_86 = arith.constant 0 : index
    %163 = vector.load %arg2[%c5, %c0_86] : memref<14x32xf32, #tpu.memory_space<vmem>>, vector<1x32xf32>
    %164 = vector.broadcast %163 : vector<1x32xf32> to vector<16x32xf32>
    %165 = arith.addf %162, %164 : vector<16x32xf32>
    %166 = arith.addf %125, %165 : vector<16x32xf32>
    %c6 = arith.constant 6 : index
    %c0_87 = arith.constant 0 : index
    %167 = vector.load %arg2[%c6, %c0_87] : memref<14x32xf32, #tpu.memory_space<vmem>>, vector<1x32xf32>
    %c7 = arith.constant 7 : index
    %c0_88 = arith.constant 0 : index
    %168 = vector.load %arg2[%c7, %c0_88] : memref<14x32xf32, #tpu.memory_space<vmem>>, vector<1x32xf32>
    %cst_89 = arith.constant dense<0.000000e+00> : vector<16xf32>
    %169 = vector.multi_reduction <add>, %166, %cst_89 [1] : vector<16x32xf32> to vector<16xf32>
    %170 = vector.shape_cast %169 : vector<16xf32> to vector<16x1xf32>
    %cst_90 = arith.constant 3.200000e+01 : f32
    %171 = vector.broadcast %cst_90 : f32 to vector<16x1xf32>
    %172 = arith.divf %170, %171 : vector<16x1xf32>
    %173 = vector.broadcast %172 : vector<16x1xf32> to vector<16x32xf32>
    %174 = arith.subf %166, %173 : vector<16x32xf32>
    %175 = arith.mulf %174, %174 : vector<16x32xf32>
    %cst_91 = arith.constant dense<0.000000e+00> : vector<16xf32>
    %176 = vector.multi_reduction <add>, %175, %cst_91 [1] : vector<16x32xf32> to vector<16xf32>
    %177 = vector.shape_cast %176 : vector<16xf32> to vector<16x1xf32>
    %cst_92 = arith.constant 0.0322580636 : f32
    %178 = vector.broadcast %cst_92 : f32 to vector<16x1xf32>
    %179 = arith.mulf %177, %178 : vector<16x1xf32>
    %180 = vector.broadcast %172 : vector<16x1xf32> to vector<16x32xf32>
    %181 = arith.subf %166, %180 : vector<16x32xf32>
    %182 = vector.broadcast %167 : vector<1x32xf32> to vector<16x32xf32>
    %183 = arith.mulf %182, %181 : vector<16x32xf32>
    %184 = math.sqrt %179 : vector<16x1xf32>
    %cst_93 = arith.constant 9.99999997E-7 : f32
    %185 = vector.broadcast %cst_93 : f32 to vector<16x1xf32>
    %186 = arith.addf %184, %185 : vector<16x1xf32>
    %187 = vector.broadcast %186 : vector<16x1xf32> to vector<16x32xf32>
    %188 = arith.divf %183, %187 : vector<16x32xf32>
    %189 = vector.broadcast %168 : vector<1x32xf32> to vector<16x32xf32>
    %190 = arith.addf %188, %189 : vector<16x32xf32>
    %191 = arith.truncf %190 : vector<16x32xf32> to vector<16x32xbf16>
    %192 = tpu.transpose %190, [1, 0] : vector<16x32xf32> -> vector<32x16xf32>
    %193 = arith.truncf %192 : vector<32x16xf32> to vector<32x16xbf16>
    %cst_94 = arith.constant 0.000000e+00 : f32
    %194 = vector.broadcast %cst_94 : f32 to vector<16x32xf32>
    %c1_95 = arith.constant 1 : index
    %c0_96 = arith.constant 0 : index
    %c0_97 = arith.constant 0 : index
    %c0_98 = arith.constant 0 : index
    %195 = vector.load %arg4[%c1_95, %c0_96, %c0_97, %c0_98] : memref<2x4x32x32xbf16, #tpu.memory_space<vmem>>, vector<1x1x32x32xbf16>
    %196 = vector.shape_cast %195 : vector<1x1x32x32xbf16> to vector<32x32xbf16>
    %cst_99 = arith.constant dense<0.000000e+00> : vector<16x32xf32>
    %197 = tpu.matmul %191, %196, %cst_99 {dimension_numbers = #tpu.dot_dimension_numbers<[1], [0], [0], [1], [0, 0, 1, 1], [], []>} : vector<16x32xbf16>, vector<32x32xbf16>, vector<16x32xf32> -> vector<16x32xf32>
    %198 = arith.truncf %197 : vector<16x32xf32> to vector<16x32xbf16>
    %cst_100 = arith.constant dense<0.000000e+00> : vector<16x16xf32>
    %199 = tpu.matmul %198, %193, %cst_100 {dimension_numbers = #tpu.dot_dimension_numbers<[1], [0], [0], [1], [0, 0, 1, 1], [], []>} : vector<16x32xbf16>, vector<32x16xbf16>, vector<16x16xf32> -> vector<16x16xf32>
    %200 = arith.addf %199, %1 : vector<16x16xf32>
    %cst_101 = arith.constant dense<0xFF800000> : vector<16xf32>
    %201 = vector.multi_reduction <maximumf>, %200, %cst_101 [1] : vector<16x16xf32> to vector<16xf32>
    %202 = vector.shape_cast %201 : vector<16xf32> to vector<16x1xf32>
    %203 = vector.broadcast %202 : vector<16x1xf32> to vector<16x16xf32>
    %204 = arith.subf %200, %203 : vector<16x16xf32>
    %205 = math.exp %204 : vector<16x16xf32>
    %cst_102 = arith.constant dense<0.000000e+00> : vector<16xf32>
    %206 = vector.multi_reduction <add>, %205, %cst_102 [1] : vector<16x16xf32> to vector<16xf32>
    %207 = vector.shape_cast %206 : vector<16xf32> to vector<16x1xf32>
    %208 = tpu.reciprocal %207 {approx = true} : vector<16x1xf32> -> vector<16x1xf32>
    %209 = vector.broadcast %208 : vector<16x1xf32> to vector<16x16xf32>
    %210 = arith.mulf %205, %209 : vector<16x16xf32>
    %c1_103 = arith.constant 1 : index
    %c0_104 = arith.constant 0 : index
    %c0_105 = arith.constant 0 : index
    %c0_106 = arith.constant 0 : index
    %211 = vector.load %arg5[%c1_103, %c0_104, %c0_105, %c0_106] : memref<2x4x32x32xbf16, #tpu.memory_space<vmem>>, vector<1x1x32x32xbf16>
    %212 = vector.shape_cast %211 : vector<1x1x32x32xbf16> to vector<32x32xbf16>
    %cst_107 = arith.constant dense<0.000000e+00> : vector<16x32xf32>
    %213 = tpu.matmul %191, %212, %cst_107 {dimension_numbers = #tpu.dot_dimension_numbers<[1], [0], [0], [1], [0, 0, 1, 1], [], []>} : vector<16x32xbf16>, vector<32x32xbf16>, vector<16x32xf32> -> vector<16x32xf32>
    %214 = arith.truncf %210 : vector<16x16xf32> to vector<16x16xbf16>
    %215 = arith.truncf %213 : vector<16x32xf32> to vector<16x32xbf16>
    %cst_108 = arith.constant dense<0.000000e+00> : vector<16x32xf32>
    %216 = tpu.matmul %214, %215, %cst_108 {dimension_numbers = #tpu.dot_dimension_numbers<[1], [0], [0], [1], [0, 0, 1, 1], [], []>} : vector<16x16xbf16>, vector<16x32xbf16>, vector<16x32xf32> -> vector<16x32xf32>
    %217 = arith.addf %194, %216 : vector<16x32xf32>
    %c1_109 = arith.constant 1 : index
    %c1_110 = arith.constant 1 : index
    %c0_111 = arith.constant 0 : index
    %c0_112 = arith.constant 0 : index
    %218 = vector.load %arg4[%c1_109, %c1_110, %c0_111, %c0_112] : memref<2x4x32x32xbf16, #tpu.memory_space<vmem>>, vector<1x1x32x32xbf16>
    %219 = vector.shape_cast %218 : vector<1x1x32x32xbf16> to vector<32x32xbf16>
    %cst_113 = arith.constant dense<0.000000e+00> : vector<16x32xf32>
    %220 = tpu.matmul %191, %219, %cst_113 {dimension_numbers = #tpu.dot_dimension_numbers<[1], [0], [0], [1], [0, 0, 1, 1], [], []>} : vector<16x32xbf16>, vector<32x32xbf16>, vector<16x32xf32> -> vector<16x32xf32>
    %221 = arith.truncf %220 : vector<16x32xf32> to vector<16x32xbf16>
    %cst_114 = arith.constant dense<0.000000e+00> : vector<16x16xf32>
    %222 = tpu.matmul %221, %193, %cst_114 {dimension_numbers = #tpu.dot_dimension_numbers<[1], [0], [0], [1], [0, 0, 1, 1], [], []>} : vector<16x32xbf16>, vector<32x16xbf16>, vector<16x16xf32> -> vector<16x16xf32>
    %223 = arith.addf %222, %1 : vector<16x16xf32>
    %cst_115 = arith.constant dense<0xFF800000> : vector<16xf32>
    %224 = vector.multi_reduction <maximumf>, %223, %cst_115 [1] : vector<16x16xf32> to vector<16xf32>
    %225 = vector.shape_cast %224 : vector<16xf32> to vector<16x1xf32>
    %226 = vector.broadcast %225 : vector<16x1xf32> to vector<16x16xf32>
    %227 = arith.subf %223, %226 : vector<16x16xf32>
    %228 = math.exp %227 : vector<16x16xf32>
    %cst_116 = arith.constant dense<0.000000e+00> : vector<16xf32>
    %229 = vector.multi_reduction <add>, %228, %cst_116 [1] : vector<16x16xf32> to vector<16xf32>
    %230 = vector.shape_cast %229 : vector<16xf32> to vector<16x1xf32>
    %231 = tpu.reciprocal %230 {approx = true} : vector<16x1xf32> -> vector<16x1xf32>
    %232 = vector.broadcast %231 : vector<16x1xf32> to vector<16x16xf32>
    %233 = arith.mulf %228, %232 : vector<16x16xf32>
    %c1_117 = arith.constant 1 : index
    %c1_118 = arith.constant 1 : index
    %c0_119 = arith.constant 0 : index
    %c0_120 = arith.constant 0 : index
    %234 = vector.load %arg5[%c1_117, %c1_118, %c0_119, %c0_120] : memref<2x4x32x32xbf16, #tpu.memory_space<vmem>>, vector<1x1x32x32xbf16>
    %235 = vector.shape_cast %234 : vector<1x1x32x32xbf16> to vector<32x32xbf16>
    %cst_121 = arith.constant dense<0.000000e+00> : vector<16x32xf32>
    %236 = tpu.matmul %191, %235, %cst_121 {dimension_numbers = #tpu.dot_dimension_numbers<[1], [0], [0], [1], [0, 0, 1, 1], [], []>} : vector<16x32xbf16>, vector<32x32xbf16>, vector<16x32xf32> -> vector<16x32xf32>
    %237 = arith.truncf %233 : vector<16x16xf32> to vector<16x16xbf16>
    %238 = arith.truncf %236 : vector<16x32xf32> to vector<16x32xbf16>
    %cst_122 = arith.constant dense<0.000000e+00> : vector<16x32xf32>
    %239 = tpu.matmul %237, %238, %cst_122 {dimension_numbers = #tpu.dot_dimension_numbers<[1], [0], [0], [1], [0, 0, 1, 1], [], []>} : vector<16x16xbf16>, vector<16x32xbf16>, vector<16x32xf32> -> vector<16x32xf32>
    %240 = arith.addf %217, %239 : vector<16x32xf32>
    %c1_123 = arith.constant 1 : index
    %c2_124 = arith.constant 2 : index
    %c0_125 = arith.constant 0 : index
    %c0_126 = arith.constant 0 : index
    %241 = vector.load %arg4[%c1_123, %c2_124, %c0_125, %c0_126] : memref<2x4x32x32xbf16, #tpu.memory_space<vmem>>, vector<1x1x32x32xbf16>
    %242 = vector.shape_cast %241 : vector<1x1x32x32xbf16> to vector<32x32xbf16>
    %cst_127 = arith.constant dense<0.000000e+00> : vector<16x32xf32>
    %243 = tpu.matmul %191, %242, %cst_127 {dimension_numbers = #tpu.dot_dimension_numbers<[1], [0], [0], [1], [0, 0, 1, 1], [], []>} : vector<16x32xbf16>, vector<32x32xbf16>, vector<16x32xf32> -> vector<16x32xf32>
    %244 = arith.truncf %243 : vector<16x32xf32> to vector<16x32xbf16>
    %cst_128 = arith.constant dense<0.000000e+00> : vector<16x16xf32>
    %245 = tpu.matmul %244, %193, %cst_128 {dimension_numbers = #tpu.dot_dimension_numbers<[1], [0], [0], [1], [0, 0, 1, 1], [], []>} : vector<16x32xbf16>, vector<32x16xbf16>, vector<16x16xf32> -> vector<16x16xf32>
    %246 = arith.addf %245, %1 : vector<16x16xf32>
    %cst_129 = arith.constant dense<0xFF800000> : vector<16xf32>
    %247 = vector.multi_reduction <maximumf>, %246, %cst_129 [1] : vector<16x16xf32> to vector<16xf32>
    %248 = vector.shape_cast %247 : vector<16xf32> to vector<16x1xf32>
    %249 = vector.broadcast %248 : vector<16x1xf32> to vector<16x16xf32>
    %250 = arith.subf %246, %249 : vector<16x16xf32>
    %251 = math.exp %250 : vector<16x16xf32>
    %cst_130 = arith.constant dense<0.000000e+00> : vector<16xf32>
    %252 = vector.multi_reduction <add>, %251, %cst_130 [1] : vector<16x16xf32> to vector<16xf32>
    %253 = vector.shape_cast %252 : vector<16xf32> to vector<16x1xf32>
    %254 = tpu.reciprocal %253 {approx = true} : vector<16x1xf32> -> vector<16x1xf32>
    %255 = vector.broadcast %254 : vector<16x1xf32> to vector<16x16xf32>
    %256 = arith.mulf %251, %255 : vector<16x16xf32>
    %c1_131 = arith.constant 1 : index
    %c2_132 = arith.constant 2 : index
    %c0_133 = arith.constant 0 : index
    %c0_134 = arith.constant 0 : index
    %257 = vector.load %arg5[%c1_131, %c2_132, %c0_133, %c0_134] : memref<2x4x32x32xbf16, #tpu.memory_space<vmem>>, vector<1x1x32x32xbf16>
    %258 = vector.shape_cast %257 : vector<1x1x32x32xbf16> to vector<32x32xbf16>
    %cst_135 = arith.constant dense<0.000000e+00> : vector<16x32xf32>
    %259 = tpu.matmul %191, %258, %cst_135 {dimension_numbers = #tpu.dot_dimension_numbers<[1], [0], [0], [1], [0, 0, 1, 1], [], []>} : vector<16x32xbf16>, vector<32x32xbf16>, vector<16x32xf32> -> vector<16x32xf32>
    %260 = arith.truncf %256 : vector<16x16xf32> to vector<16x16xbf16>
    %261 = arith.truncf %259 : vector<16x32xf32> to vector<16x32xbf16>
    %cst_136 = arith.constant dense<0.000000e+00> : vector<16x32xf32>
    %262 = tpu.matmul %260, %261, %cst_136 {dimension_numbers = #tpu.dot_dimension_numbers<[1], [0], [0], [1], [0, 0, 1, 1], [], []>} : vector<16x16xbf16>, vector<16x32xbf16>, vector<16x32xf32> -> vector<16x32xf32>
    %263 = arith.addf %240, %262 : vector<16x32xf32>
    %c1_137 = arith.constant 1 : index
    %c3_138 = arith.constant 3 : index
    %c0_139 = arith.constant 0 : index
    %c0_140 = arith.constant 0 : index
    %264 = vector.load %arg4[%c1_137, %c3_138, %c0_139, %c0_140] : memref<2x4x32x32xbf16, #tpu.memory_space<vmem>>, vector<1x1x32x32xbf16>
    %265 = vector.shape_cast %264 : vector<1x1x32x32xbf16> to vector<32x32xbf16>
    %cst_141 = arith.constant dense<0.000000e+00> : vector<16x32xf32>
    %266 = tpu.matmul %191, %265, %cst_141 {dimension_numbers = #tpu.dot_dimension_numbers<[1], [0], [0], [1], [0, 0, 1, 1], [], []>} : vector<16x32xbf16>, vector<32x32xbf16>, vector<16x32xf32> -> vector<16x32xf32>
    %267 = arith.truncf %266 : vector<16x32xf32> to vector<16x32xbf16>
    %cst_142 = arith.constant dense<0.000000e+00> : vector<16x16xf32>
    %268 = tpu.matmul %267, %193, %cst_142 {dimension_numbers = #tpu.dot_dimension_numbers<[1], [0], [0], [1], [0, 0, 1, 1], [], []>} : vector<16x32xbf16>, vector<32x16xbf16>, vector<16x16xf32> -> vector<16x16xf32>
    %269 = arith.addf %268, %1 : vector<16x16xf32>
    %cst_143 = arith.constant dense<0xFF800000> : vector<16xf32>
    %270 = vector.multi_reduction <maximumf>, %269, %cst_143 [1] : vector<16x16xf32> to vector<16xf32>
    %271 = vector.shape_cast %270 : vector<16xf32> to vector<16x1xf32>
    %272 = vector.broadcast %271 : vector<16x1xf32> to vector<16x16xf32>
    %273 = arith.subf %269, %272 : vector<16x16xf32>
    %274 = math.exp %273 : vector<16x16xf32>
    %cst_144 = arith.constant dense<0.000000e+00> : vector<16xf32>
    %275 = vector.multi_reduction <add>, %274, %cst_144 [1] : vector<16x16xf32> to vector<16xf32>
    %276 = vector.shape_cast %275 : vector<16xf32> to vector<16x1xf32>
    %277 = tpu.reciprocal %276 {approx = true} : vector<16x1xf32> -> vector<16x1xf32>
    %278 = vector.broadcast %277 : vector<16x1xf32> to vector<16x16xf32>
    %279 = arith.mulf %274, %278 : vector<16x16xf32>
    %c1_145 = arith.constant 1 : index
    %c3_146 = arith.constant 3 : index
    %c0_147 = arith.constant 0 : index
    %c0_148 = arith.constant 0 : index
    %280 = vector.load %arg5[%c1_145, %c3_146, %c0_147, %c0_148] : memref<2x4x32x32xbf16, #tpu.memory_space<vmem>>, vector<1x1x32x32xbf16>
    %281 = vector.shape_cast %280 : vector<1x1x32x32xbf16> to vector<32x32xbf16>
    %cst_149 = arith.constant dense<0.000000e+00> : vector<16x32xf32>
    %282 = tpu.matmul %191, %281, %cst_149 {dimension_numbers = #tpu.dot_dimension_numbers<[1], [0], [0], [1], [0, 0, 1, 1], [], []>} : vector<16x32xbf16>, vector<32x32xbf16>, vector<16x32xf32> -> vector<16x32xf32>
    %283 = arith.truncf %279 : vector<16x16xf32> to vector<16x16xbf16>
    %284 = arith.truncf %282 : vector<16x32xf32> to vector<16x32xbf16>
    %cst_150 = arith.constant dense<0.000000e+00> : vector<16x32xf32>
    %285 = tpu.matmul %283, %284, %cst_150 {dimension_numbers = #tpu.dot_dimension_numbers<[1], [0], [0], [1], [0, 0, 1, 1], [], []>} : vector<16x16xbf16>, vector<16x32xbf16>, vector<16x32xf32> -> vector<16x32xf32>
    %286 = arith.addf %263, %285 : vector<16x32xf32>
    %287 = arith.addf %166, %286 : vector<16x32xf32>
    %c10 = arith.constant 10 : index
    %c0_151 = arith.constant 0 : index
    %288 = vector.load %arg2[%c10, %c0_151] : memref<14x32xf32, #tpu.memory_space<vmem>>, vector<1x32xf32>
    %289 = vector.broadcast %288 : vector<1x32xf32> to vector<16x32xf32>
    %290 = arith.addf %287, %289 : vector<16x32xf32>
    %c8 = arith.constant 8 : index
    %c0_152 = arith.constant 0 : index
    %291 = vector.load %arg2[%c8, %c0_152] : memref<14x32xf32, #tpu.memory_space<vmem>>, vector<1x32xf32>
    %c9 = arith.constant 9 : index
    %c0_153 = arith.constant 0 : index
    %292 = vector.load %arg2[%c9, %c0_153] : memref<14x32xf32, #tpu.memory_space<vmem>>, vector<1x32xf32>
    %cst_154 = arith.constant dense<0.000000e+00> : vector<16xf32>
    %293 = vector.multi_reduction <add>, %290, %cst_154 [1] : vector<16x32xf32> to vector<16xf32>
    %294 = vector.shape_cast %293 : vector<16xf32> to vector<16x1xf32>
    %cst_155 = arith.constant 3.200000e+01 : f32
    %295 = vector.broadcast %cst_155 : f32 to vector<16x1xf32>
    %296 = arith.divf %294, %295 : vector<16x1xf32>
    %297 = vector.broadcast %296 : vector<16x1xf32> to vector<16x32xf32>
    %298 = arith.subf %290, %297 : vector<16x32xf32>
    %299 = arith.mulf %298, %298 : vector<16x32xf32>
    %cst_156 = arith.constant dense<0.000000e+00> : vector<16xf32>
    %300 = vector.multi_reduction <add>, %299, %cst_156 [1] : vector<16x32xf32> to vector<16xf32>
    %301 = vector.shape_cast %300 : vector<16xf32> to vector<16x1xf32>
    %cst_157 = arith.constant 0.0322580636 : f32
    %302 = vector.broadcast %cst_157 : f32 to vector<16x1xf32>
    %303 = arith.mulf %301, %302 : vector<16x1xf32>
    %304 = vector.broadcast %296 : vector<16x1xf32> to vector<16x32xf32>
    %305 = arith.subf %290, %304 : vector<16x32xf32>
    %306 = vector.broadcast %291 : vector<1x32xf32> to vector<16x32xf32>
    %307 = arith.mulf %306, %305 : vector<16x32xf32>
    %308 = math.sqrt %303 : vector<16x1xf32>
    %cst_158 = arith.constant 9.99999997E-7 : f32
    %309 = vector.broadcast %cst_158 : f32 to vector<16x1xf32>
    %310 = arith.addf %308, %309 : vector<16x1xf32>
    %311 = vector.broadcast %310 : vector<16x1xf32> to vector<16x32xf32>
    %312 = arith.divf %307, %311 : vector<16x32xf32>
    %313 = vector.broadcast %292 : vector<1x32xf32> to vector<16x32xf32>
    %314 = arith.addf %312, %313 : vector<16x32xf32>
    %315 = arith.truncf %314 : vector<16x32xf32> to vector<16x32xbf16>
    %c1_159 = arith.constant 1 : index
    %c0_160 = arith.constant 0 : index
    %c0_161 = arith.constant 0 : index
    %316 = vector.load %arg6[%c1_159, %c0_160, %c0_161] : memref<2x32x2048xbf16, #tpu.memory_space<vmem>>, vector<1x32x2048xbf16>
    %317 = vector.shape_cast %316 : vector<1x32x2048xbf16> to vector<32x2048xbf16>
    %cst_162 = arith.constant dense<0.000000e+00> : vector<16x2048xf32>
    %318 = tpu.matmul %315, %317, %cst_162 {dimension_numbers = #tpu.dot_dimension_numbers<[1], [0], [0], [1], [0, 0, 1, 1], [], []>} : vector<16x32xbf16>, vector<32x2048xbf16>, vector<16x2048xf32> -> vector<16x2048xf32>
    %c1_163 = arith.constant 1 : index
    %c0_164 = arith.constant 0 : index
    %319 = vector.load %arg3[%c1_163, %c0_164] : memref<2x2048xf32, #tpu.memory_space<vmem>>, vector<1x2048xf32>
    %320 = vector.broadcast %319 : vector<1x2048xf32> to vector<16x2048xf32>
    %321 = arith.addf %318, %320 : vector<16x2048xf32>
    %cst_165 = arith.constant 0.000000e+00 : f32
    %322 = vector.broadcast %cst_165 : f32 to vector<16x2048xf32>
    %323 = arith.maximumf %321, %322 : vector<16x2048xf32>
    %324 = arith.truncf %323 : vector<16x2048xf32> to vector<16x2048xbf16>
    %c1_166 = arith.constant 1 : index
    %c0_167 = arith.constant 0 : index
    %c0_168 = arith.constant 0 : index
    %325 = vector.load %arg7[%c1_166, %c0_167, %c0_168] : memref<2x2048x32xbf16, #tpu.memory_space<vmem>>, vector<1x2048x32xbf16>
    %326 = vector.shape_cast %325 : vector<1x2048x32xbf16> to vector<2048x32xbf16>
    %cst_169 = arith.constant dense<0.000000e+00> : vector<16x32xf32>
    %327 = tpu.matmul %324, %326, %cst_169 {dimension_numbers = #tpu.dot_dimension_numbers<[1], [0], [0], [1], [0, 0, 1, 1], [], []>} : vector<16x2048xbf16>, vector<2048x32xbf16>, vector<16x32xf32> -> vector<16x32xf32>
    %c11 = arith.constant 11 : index
    %c0_170 = arith.constant 0 : index
    %328 = vector.load %arg2[%c11, %c0_170] : memref<14x32xf32, #tpu.memory_space<vmem>>, vector<1x32xf32>
    %329 = vector.broadcast %328 : vector<1x32xf32> to vector<16x32xf32>
    %330 = arith.addf %327, %329 : vector<16x32xf32>
    %331 = arith.addf %290, %330 : vector<16x32xf32>
    %c12 = arith.constant 12 : index
    %c0_171 = arith.constant 0 : index
    %332 = vector.load %arg2[%c12, %c0_171] : memref<14x32xf32, #tpu.memory_space<vmem>>, vector<1x32xf32>
    %c13 = arith.constant 13 : index
    %c0_172 = arith.constant 0 : index
    %333 = vector.load %arg2[%c13, %c0_172] : memref<14x32xf32, #tpu.memory_space<vmem>>, vector<1x32xf32>
    %cst_173 = arith.constant dense<0.000000e+00> : vector<16xf32>
    %334 = vector.multi_reduction <add>, %331, %cst_173 [1] : vector<16x32xf32> to vector<16xf32>
    %335 = vector.shape_cast %334 : vector<16xf32> to vector<16x1xf32>
    %cst_174 = arith.constant 3.200000e+01 : f32
    %336 = vector.broadcast %cst_174 : f32 to vector<16x1xf32>
    %337 = arith.divf %335, %336 : vector<16x1xf32>
    %338 = vector.broadcast %337 : vector<16x1xf32> to vector<16x32xf32>
    %339 = arith.subf %331, %338 : vector<16x32xf32>
    %340 = arith.mulf %339, %339 : vector<16x32xf32>
    %cst_175 = arith.constant dense<0.000000e+00> : vector<16xf32>
    %341 = vector.multi_reduction <add>, %340, %cst_175 [1] : vector<16x32xf32> to vector<16xf32>
    %342 = vector.shape_cast %341 : vector<16xf32> to vector<16x1xf32>
    %cst_176 = arith.constant 0.0322580636 : f32
    %343 = vector.broadcast %cst_176 : f32 to vector<16x1xf32>
    %344 = arith.mulf %342, %343 : vector<16x1xf32>
    %345 = vector.broadcast %337 : vector<16x1xf32> to vector<16x32xf32>
    %346 = arith.subf %331, %345 : vector<16x32xf32>
    %347 = vector.broadcast %332 : vector<1x32xf32> to vector<16x32xf32>
    %348 = arith.mulf %347, %346 : vector<16x32xf32>
    %349 = math.sqrt %344 : vector<16x1xf32>
    %cst_177 = arith.constant 9.99999997E-7 : f32
    %350 = vector.broadcast %cst_177 : f32 to vector<16x1xf32>
    %351 = arith.addf %349, %350 : vector<16x1xf32>
    %352 = vector.broadcast %351 : vector<16x1xf32> to vector<16x32xf32>
    %353 = arith.divf %348, %352 : vector<16x32xf32>
    %354 = vector.broadcast %333 : vector<1x32xf32> to vector<16x32xf32>
    %355 = arith.addf %353, %354 : vector<16x32xf32>
    %c0_178 = arith.constant 0 : index
    %c0_179 = arith.constant 0 : index
    %356 = vector.load %arg8[%c0_178, %c0_179] : memref<16x32xf32, #tpu.memory_space<vmem>>, vector<16x32xf32>
    tpu.vector_store %arg8[%c0_178, %c0_179], %355 {strides = array<i32>} : memref<16x32xf32, #tpu.memory_space<vmem>>, vector<16x32xf32>,
    return
  }
}

</mosaic_0001>

<llo_original>
// kernel: transformer_forward.1
$region0: #{transformer_forward.1}
  #allocation0 [shape = 'u32[]', space=smem, size = 0x4, offset = 0x4, fixed_abs, tag = 'smem constant byte address 0x4 - core index']
  #allocation1 [shape = 'u32[72,128]{1,0:T(1,128)}', space=vmem, size = 0x9000, scoped, tag = 'internal scratch']
  %s0 = inlined_call_operand.vmem [shape: f32[16,32], index: 0, kind: input, shape index: {}]
  %s1 = inlined_call_operand.vmem [shape: f32[16,16], index: 1, kind: input, shape index: {}]
  %s2 = inlined_call_operand.vmem [shape: f32[14,32], index: 2, kind: input, shape index: {}]
  %s3 = inlined_call_operand.vmem [shape: f32[2,2048], index: 3, kind: input, shape index: {}]
  %s4 = inlined_call_operand.vmem [shape: bf16[2,4,32,32], index: 4, kind: input, shape index: {}]
  %s5 = inlined_call_operand.vmem [shape: bf16[2,4,32,32], index: 5, kind: input, shape index: {}]
  %s6 = inlined_call_operand.vmem [shape: bf16[2,32,2048], index: 6, kind: input, shape index: {}]
  %s7 = inlined_call_operand.vmem [shape: bf16[2,2048,32], index: 7, kind: input, shape index: {}]
  %s8 = inlined_call_operand.hbm [shape: f32[16,32], index: 8, kind: output, shape index: {}]
  %s9 = sld [smem:[#allocation0]]
  $region42: #{transformer_forward.1} parent=0
    _
  %s11 = ssub.s32 1, %s9
  %s12 = scalar_select 0, %s11, %s9
  $region1: #{transformer_forward.1} parent=0
    #allocation2 [shape = 'u8[8192]{0}', space=vmem, size = 0x2000, scoped, tag = 'output window, operand 0, single buffered']
    #allocation3 [shape = 's32[1]{0}', space=sflag, size = 0x4, scoped, tag = 'scoped memory for transformer_forward.1']
    %13 = vsyncpa [#allocation3], 0
    // Predicated region
    $region2: #{transformer_forward.1} parent=1 // pred_check
      _
    $region3: #{transformer_forward.1} parent=1 // pred_check_branch
      %15 = sbr.rel (0) target = $region5
    $region4: #{transformer_forward.1} parent=1 // pred_region
      _
    $region5: #{transformer_forward.1} parent=1 // pred_fallthru
      _
    // Predicated region
    $region6: #{transformer_forward.1} parent=1 // pred_check
      _
    $region7: #{transformer_forward.1} parent=1 // pred_check_branch
      %17 = sbr.rel (0) target = $region9
    $region8: #{transformer_forward.1} parent=1 // pred_region
      _
    $region9: #{transformer_forward.1} parent=1 // pred_fallthru
      _
    // Predicated region
    $region10: #{transformer_forward.1} parent=1 // pred_check
      _
    $region11: #{transformer_forward.1} parent=1 // pred_check_branch
      %19 = sbr.rel (0) target = $region13
    $region12: #{transformer_forward.1} parent=1 // pred_region
      _
    $region13: #{transformer_forward.1} parent=1 // pred_fallthru
      _
    // Predicated region
    $region14: #{transformer_forward.1} parent=1 // pred_check
      _
    $region15: #{transformer_forward.1} parent=1 // pred_check_branch
      %21 = sbr.rel (0) target = $region17
    $region16: #{transformer_forward.1} parent=1 // pred_region
      _
    $region17: #{transformer_forward.1} parent=1 // pred_fallthru
      _
    // Predicated region
    $region18: #{transformer_forward.1} parent=1 // pred_check
      _
    $region19: #{transformer_forward.1} parent=1 // pred_check_branch
      %23 = sbr.rel (0) target = $region21
    $region20: #{transformer_forward.1} parent=1 // pred_region
      _
    $region21: #{transformer_forward.1} parent=1 // pred_fallthru
      _
    // Predicated region
    $region22: #{transformer_forward.1} parent=1 // pred_check
      _
    $region23: #{transformer_forward.1} parent=1 // pred_check_branch
      %25 = sbr.rel (0) target = $region25
    $region24: #{transformer_forward.1} parent=1 // pred_region
      _
    $region25: #{transformer_forward.1} parent=1 // pred_fallthru
      _
    // Predicated region
    $region26: #{transformer_forward.1} parent=1 // pred_check
      _
    $region27: #{transformer_forward.1} parent=1 // pred_check_branch
      %27 = sbr.rel (0) target = $region29
    $region28: #{transformer_forward.1} parent=1 // pred_region
      _
    $region29: #{transformer_forward.1} parent=1 // pred_fallthru
      _
    // Predicated region
    $region30: #{transformer_forward.1} parent=1 // pred_check
      _
    $region31: #{transformer_forward.1} parent=1 // pred_check_branch
      %29 = sbr.rel (0) target = $region33
    $region32: #{transformer_forward.1} parent=1 // pred_region
      _
    $region33: #{transformer_forward.1} parent=1 // pred_fallthru
      _
    %v31 = vld [vmem:[%s0] sm:$0xff]
    %v32 = vld [vmem:[%s0 + $0x8] sm:$0xff]
    %v33 = vld [vmem:[%s1] sm:$0xff]
    %v34 = vld [vmem:[%s1 + $0x8] sm:$0xff]
    %v35 = vld [vmem:[%s2] sm:$0x1]
    %v36 = vld [vmem:[%s2 + $0x1] sm:$0x1]
    %vm37 = vcmask 261120
    %v38 = vsel %vm37, %v31, 0.0
    %39 = vadd.xlane.f32.xlu0 %v38
    %v40 = vpop.xlane.xlu0 %39
    %v41 = vsel %vm37, %v32, 0.0
    %42 = vadd.xlane.f32.xlu0 %v41
    %v43 = vpop.xlane.xlu0 %42
    %v44 = vrcp.pop 32.0
    %v45 = vmul.f32 32.0, %v44
    %v46 = vsub.f32 1.0, %v45
    %v47 = vmul.f32 %v44, %v46
    %v48 = vadd.f32 %v44, %v47
    %vm49 = vweird.f32 %v44
    %v50 = vsel %vm49, %v44, %v48
    %v51 = vmul.f32 %v40, %v50
    %v52 = vmul.f32 %v43, %v50
    %v53 = vsub.f32 %v31, %v51
    %v54 = vsub.f32 %v32, %v52
    %v55 = vmul.f32 %v53, %v53
    %v56 = vmul.f32 %v54, %v54
    %v57 = vsel %vm37, %v55, 0.0
    %58 = vadd.xlane.f32.xlu0 %v57
    %v59 = vpop.xlane.xlu0 %58
    %v60 = vsel %vm37, %v56, 0.0
    %61 = vadd.xlane.f32.xlu0 %v60
    %v62 = vpop.xlane.xlu0 %61
    %v63 = vmul.f32 %v59, 0.032258064
    %v64 = vmul.f32 %v62, 0.032258064
    %v65 = vperm.slane %v35, 0
    %v66 = vmul.f32 %v65, %v53
    %v67 = vmul.f32 %v65, %v54
    %v68 = vrsqrt.pop %v63
    %v69 = vmul.f32 %v68, %v63
    %v70 = vmul.f32 %v69, %v68
    %v71 = vmul.f32 0.5, %v70
    %v72 = vsub.f32 1.5, %v71
    %v73 = vmul.f32 %v68, %v72
    %v74 = vmul.f32 %v63, %v73
    %vm75 = vcmp.eq.f32.partialorder %v63, inf
    %v76 = vsel %vm75, %v63, %v74
    %vm77 = vcmp.eq.f32.partialorder %v63, 0.0
    %v78 = vand.u32 %v63, 2147483648
    %v79 = vsel %vm77, %v78, %v76
    %v80 = vrsqrt.pop %v64
    %v81 = vmul.f32 %v80, %v64
    %v82 = vmul.f32 %v81, %v80
    %v83 = vmul.f32 0.5, %v82
    %v84 = vsub.f32 1.5, %v83
    %v85 = vmul.f32 %v80, %v84
    %v86 = vmul.f32 %v64, %v85
    %vm87 = vcmp.eq.f32.partialorder %v64, inf
    %v88 = vsel %vm87, %v64, %v86
    %vm89 = vcmp.eq.f32.partialorder %v64, 0.0
    %v90 = vand.u32 %v64, 2147483648
    %v91 = vsel %vm89, %v90, %v88
    %v92 = vadd.f32 %v79, 1e-06
    %v93 = vadd.f32 %v91, 1e-06
    %v94 = vrcp.pop %v92
    %v95 = vmul.f32 %v92, %v94
    %v96 = vsub.f32 1.0, %v95
    %v97 = vmul.f32 %v94, %v96
    %v98 = vadd.f32 %v94, %v97
    %vm99 = vweird.f32 %v92
    %vm100 = vweird.f32 %v94
    %vm101 = vmor %vm99, %vm100
    %v102 = vsel %vm101, %v94, %v98
    %v103 = vand.u32 2147483647, %v92
    %vm104 = vcmp.eq.f32.partialorder %v103, 8.507059e+37
    %v105 = vand.u32 %v92, 2147483648
    %v106 = vor.u32 1.1754944e-38, %v105
    %v107 = vsel %vm104, %v106, %v102
    %v108 = vmul.f32 %v66, %v107
    %v109 = vrcp.pop %v93
    %v110 = vmul.f32 %v93, %v109
    %v111 = vsub.f32 1.0, %v110
    %v112 = vmul.f32 %v109, %v111
    %v113 = vadd.f32 %v109, %v112
    %vm114 = vweird.f32 %v93
    %vm115 = vweird.f32 %v109
    %vm116 = vmor %vm114, %vm115
    %v117 = vsel %vm116, %v109, %v113
    %v118 = vand.u32 2147483647, %v93
    %vm119 = vcmp.eq.f32.partialorder %v118, 8.507059e+37
    %v120 = vand.u32 %v93, 2147483648
    %v121 = vor.u32 1.1754944e-38, %v120
    %v122 = vsel %vm119, %v121, %v117
    %v123 = vmul.f32 %v67, %v122
    %v124 = vperm.slane %v36, 0
    %v125 = vadd.f32 %v108, %v124
    %v126 = vadd.f32 %v123, %v124
    %v127 = vpack.c.bf16 %v126, %v125
    %128 = vxpose.xlu0.b32.start [1/16] %v125, 128
    %129 = vxpose.xlu0.b32.cont [2/16] %v126, 128
    %130 = vxpose.xlu0.b32.cont [3/16] 0.0, 128
    %131 = vxpose.xlu0.b32.cont [4/16] 0.0, 128
    %132 = vxpose.xlu0.b32.cont [5/16] 0.0, 128
    %133 = vxpose.xlu0.b32.cont [6/16] 0.0, 128
    %134 = vxpose.xlu0.b32.cont [7/16] 0.0, 128
    %135 = vxpose.xlu0.b32.cont [8/16] 0.0, 128
    %136 = vxpose.xlu0.b32.cont [9/16] 0.0, 128
    %137 = vxpose.xlu0.b32.cont [10/16] 0.0, 128
    %138 = vxpose.xlu0.b32.cont [11/16] 0.0, 128
    %139 = vxpose.xlu0.b32.cont [12/16] 0.0, 128
    %140 = vxpose.xlu0.b32.cont [13/16] 0.0, 128
    %141 = vxpose.xlu0.b32.cont [14/16] 0.0, 128
    %142 = vxpose.xlu0.b32.cont [15/16] 0.0, 128
    %143 = vxpose.xlu0.b32.end [16/16] 0.0, 128
    %v144 = vpop.trf.xlu0
    %v145 = vpop.trf.xlu0
    %v146 = vpop.trf.xlu0
    %v147 = vpop.trf.xlu0
    %v148 = vpop.trf.xlu0
    %v149 = vpop.trf.xlu0
    %v150 = vpop.trf.xlu0
    %v151 = vpop.trf.xlu0
    %v152 = vpop.trf.xlu0
    %v153 = vpop.trf.xlu0
    %v154 = vpop.trf.xlu0
    %v155 = vpop.trf.xlu0
    %v156 = vpop.trf.xlu0
    %v157 = vpop.trf.xlu0
    %v158 = vpop.trf.xlu0
    %v159 = vpop.trf.xlu0
    %v160 = vpack.c.bf16 %v145, %v144
    %v161 = vpack.c.bf16 %v147, %v146
    %v162 = vld [vmem:[%s4] sm:$0xf]
    %v163 = vld [vmem:[%s4 + $0x4] sm:$0xf]
    %v164 = vld [vmem:[%s4 + $0x8] sm:$0xf]
    %v165 = vld [vmem:[%s4 + $0xc] sm:$0xf]
    %v170 = vunpack.c.l.b16 %v162
    %v171 = vunpack.c.l.b16 %v163
    %v172 = vunpack.c.l.b16 %v164
    %v173 = vunpack.c.l.b16 %v165
    %v174 = vpack.c.b16 %v171, %v170
    %v175 = vpack.c.b16 %v173, %v172
    %v179 = vsel %vm37, %v127, 0
    %181 = vmatpush.bf16.msra.mxu0 0
    %182 = vmatpush.bf16.msra.mxu0 0
    %183 = vmatpush.bf16.msra.mxu0 0
    %184 = vmatpush.bf16.msra.mxu0 0
    %185 = vmatpush.bf16.msra.mxu0 0
    %186 = vmatpush.bf16.msra.mxu0 0
    %187 = vmatpush.bf16.msra.mxu0 %v175
    %188 = vmatpush.bf16.msra.mxu0 %v174
    %189 = vmatmul.bf16.gmra.mxu0 %v179
    %v190 = vpop.f32.mrf.mxu0
    %v191 = vadd.f32 0.0, %v190
    %v192 = vpop.f32.mrf.mxu0
    %v193 = vadd.f32 0.0, %v192
    %194 = vdwg.mxu0
    %v195 = vpack.c.bf16 %v193, %v191
    %v197 = vsel %vm37, %v195, 0
    %199 = vmatpush.bf16.msra.mxu0 0
    %200 = vmatpush.bf16.msra.mxu0 0
    %201 = vmatpush.bf16.msra.mxu0 0
    %202 = vmatpush.bf16.msra.mxu0 0
    %203 = vmatpush.bf16.msra.mxu0 0
    %204 = vmatpush.bf16.msra.mxu0 0
    %205 = vmatpush.bf16.msra.mxu0 %v161
    %206 = vmatpush.bf16.msra.mxu0 %v160
    %207 = vmatmul.bf16.gmra.mxu0 %v197
    %v208 = vpop.f32.mrf.mxu0
    %v209 = vadd.f32 %v33, %v208
    %v210 = vpop.f32.mrf.mxu0
    %v211 = vadd.f32 %v34, %v210
    %212 = vdwg.mxu0
    %vm213 = vcmask 130048
    %v214 = vsel %vm213, %v209, -inf
    %215 = vmax.xlane.f32.xlu0 %v214
    %v216 = vpop.xlane.xlu0 %215
    %v217 = vsel %vm213, %v211, -inf
    %218 = vmax.xlane.f32.xlu0 %v217
    %v219 = vpop.xlane.xlu0 %218
    %v220 = vsub.f32 %v209, %v216
    %v221 = vsub.f32 %v211, %v219
    %v222 = vmul.f32 %v220, 1.442695
    %v223 = vpow.pop %v222
    %v224 = vmul.f32 %v221, 1.442695
    %v225 = vpow.pop %v224
    %v226 = vsel %vm213, %v223, 0.0
    %227 = vadd.xlane.f32.xlu0 %v226
    %v228 = vpop.xlane.xlu0 %227
    %v229 = vsel %vm213, %v225, 0.0
    %230 = vadd.xlane.f32.xlu0 %v229
    %v231 = vpop.xlane.xlu0 %230
    %v232 = vrcp.pop %v228
    %v233 = vrcp.pop %v231
    %v234 = vmul.f32 %v223, %v232
    %v235 = vmul.f32 %v225, %v233
    %v236 = vld [vmem:[%s5] sm:$0xf]
    %v237 = vld [vmem:[%s5 + $0x4] sm:$0xf]
    %v238 = vld [vmem:[%s5 + $0x8] sm:$0xf]
    %v239 = vld [vmem:[%s5 + $0xc] sm:$0xf]
    %v244 = vunpack.c.l.b16 %v236
    %v245 = vunpack.c.l.b16 %v237
    %v246 = vunpack.c.l.b16 %v238
    %v247 = vunpack.c.l.b16 %v239
    %v248 = vpack.c.b16 %v245, %v244
    %v249 = vpack.c.b16 %v247, %v246
    %252 = vmatpush.bf16.msra.mxu0 0
    %253 = vmatpush.bf16.msra.mxu0 0
    %254 = vmatpush.bf16.msra.mxu0 0
    %255 = vmatpush.bf16.msra.mxu0 0
    %256 = vmatpush.bf16.msra.mxu0 0
    %257 = vmatpush.bf16.msra.mxu0 0
    %258 = vmatpush.bf16.msra.mxu0 %v249
    %259 = vmatpush.bf16.msra.mxu0 %v248
    %260 = vmatmul.bf16.gmra.mxu0 %v179
    %v261 = vpop.f32.mrf.mxu0
    %v262 = vadd.f32 0.0, %v261
    %v263 = vpop.f32.mrf.mxu0
    %v264 = vadd.f32 0.0, %v263
    %265 = vdwg.mxu0
    %v266 = vpack.c.bf16 %v235, %v234
    %v267 = vpack.c.bf16 %v264, %v262
    %s268 = scalar_lea.vmem %s4, 16
    %v269 = vld [vmem:[%s268] sm:$0xf]
    %v270 = vld [vmem:[%s268 + $0x4] sm:$0xf]
    %v271 = vld [vmem:[%s268 + $0x8] sm:$0xf]
    %v272 = vld [vmem:[%s268 + $0xc] sm:$0xf]
    %v277 = vunpack.c.l.b16 %v269
    %v278 = vunpack.c.l.b16 %v270
    %v279 = vunpack.c.l.b16 %v271
    %v280 = vunpack.c.l.b16 %v272
    %v281 = vpack.c.b16 %v278, %v277
    %v282 = vpack.c.b16 %v280, %v279
    %285 = vmatpush.bf16.msra.mxu0 0
    %286 = vmatpush.bf16.msra.mxu0 0
    %287 = vmatpush.bf16.msra.mxu0 0
    %288 = vmatpush.bf16.msra.mxu0 0
    %289 = vmatpush.bf16.msra.mxu0 0
    %290 = vmatpush.bf16.msra.mxu0 0
    %291 = vmatpush.bf16.msra.mxu0 %v282
    %292 = vmatpush.bf16.msra.mxu0 %v281
    %293 = vmatmul.bf16.gmra.mxu0 %v179
    %v294 = vpop.f32.mrf.mxu0
    %v295 = vadd.f32 0.0, %v294
    %v296 = vpop.f32.mrf.mxu0
    %v297 = vadd.f32 0.0, %v296
    %298 = vdwg.mxu0
    %v299 = vpack.c.bf16 %v297, %v295
    %v301 = vsel %vm37, %v299, 0
    %303 = vmatpush.bf16.msra.mxu0 0
    %304 = vmatpush.bf16.msra.mxu0 0
    %305 = vmatpush.bf16.msra.mxu0 0
    %306 = vmatpush.bf16.msra.mxu0 0
    %307 = vmatpush.bf16.msra.mxu0 0
    %308 = vmatpush.bf16.msra.mxu0 0
    %309 = vmatpush.bf16.msra.mxu0 %v161
    %310 = vmatpush.bf16.msra.mxu0 %v160
    %311 = vmatmul.bf16.gmra.mxu0 %v301
    %v312 = vpop.f32.mrf.mxu0
    %v313 = vadd.f32 %v33, %v312
    %v314 = vpop.f32.mrf.mxu0
    %v315 = vadd.f32 %v34, %v314
    %316 = vdwg.mxu0
    %v317 = vsel %vm213, %v313, -inf
    %318 = vmax.xlane.f32.xlu0 %v317
    %v319 = vpop.xlane.xlu0 %318
    %v320 = vsel %vm213, %v315, -inf
    %321 = vmax.xlane.f32.xlu0 %v320
    %v322 = vpop.xlane.xlu0 %321
    %v323 = vsub.f32 %v313, %v319
    %v324 = vsub.f32 %v315, %v322
    %v325 = vmul.f32 %v323, 1.442695
    %v326 = vpow.pop %v325
    %v327 = vmul.f32 %v324, 1.442695
    %v328 = vpow.pop %v327
    %v329 = vsel %vm213, %v326, 0.0
    %330 = vadd.xlane.f32.xlu0 %v329
    %v331 = vpop.xlane.xlu0 %330
    %v332 = vsel %vm213, %v328, 0.0
    %333 = vadd.xlane.f32.xlu0 %v332
    %v334 = vpop.xlane.xlu0 %333
    %v335 = vrcp.pop %v331
    %v336 = vrcp.pop %v334
    %v337 = vmul.f32 %v326, %v335
    %v338 = vmul.f32 %v328, %v336
    %s339 = scalar_lea.vmem %s5, 16
    %v340 = vld [vmem:[%s339] sm:$0xf]
    %v341 = vld [vmem:[%s339 + $0x4] sm:$0xf]
    %v342 = vld [vmem:[%s339 + $0x8] sm:$0xf]
    %v343 = vld [vmem:[%s339 + $0xc] sm:$0xf]
    %v348 = vunpack.c.l.b16 %v340
    %v349 = vunpack.c.l.b16 %v341
    %v350 = vunpack.c.l.b16 %v342
    %v351 = vunpack.c.l.b16 %v343
    %v352 = vpack.c.b16 %v349, %v348
    %v353 = vpack.c.b16 %v351, %v350
    %356 = vmatpush.bf16.msra.mxu0 0
    %357 = vmatpush.bf16.msra.mxu0 0
    %358 = vmatpush.bf16.msra.mxu0 0
    %359 = vmatpush.bf16.msra.mxu0 0
    %360 = vmatpush.bf16.msra.mxu0 0
    %361 = vmatpush.bf16.msra.mxu0 0
    %362 = vmatpush.bf16.msra.mxu0 %v353
    %363 = vmatpush.bf16.msra.mxu0 %v352
    %364 = vmatmul.bf16.gmra.mxu0 %v179
    %v365 = vpop.f32.mrf.mxu0
    %v366 = vadd.f32 0.0, %v365
    %v367 = vpop.f32.mrf.mxu0
    %v368 = vadd.f32 0.0, %v367
    %369 = vdwg.mxu0
    %v370 = vpack.c.bf16 %v338, %v337
    %v371 = vpack.c.bf16 %v368, %v366
    %v373 = vsel %vm213, %v370, 0
    %375 = vmatpush.bf16.msra.mxu0 0
    %376 = vmatpush.bf16.msra.mxu0 0
    %377 = vmatpush.bf16.msra.mxu0 0
    %378 = vmatpush.bf16.msra.mxu0 0
    %379 = vmatpush.bf16.msra.mxu0 0
    %380 = vmatpush.bf16.msra.mxu0 0
    %381 = vmatpush.bf16.msra.mxu0 0
    %382 = vmatpush.bf16.msra.mxu0 %v371
    %383 = vmatmul.bf16.gmra.mxu0 %v373
    %v384 = vpop.f32.mrf.mxu0
    %v385 = vadd.f32 0.0, %v384
    %v386 = vpop.f32.mrf.mxu0
    %v387 = vadd.f32 0.0, %v386
    %388 = vdwg.mxu0
    %v390 = vsel %vm213, %v266, 0
    %392 = vmatpush.bf16.msra.mxu0 0
    %393 = vmatpush.bf16.msra.mxu0 0
    %394 = vmatpush.bf16.msra.mxu0 0
    %395 = vmatpush.bf16.msra.mxu0 0
    %396 = vmatpush.bf16.msra.mxu0 0
    %397 = vmatpush.bf16.msra.mxu0 0
    %398 = vmatpush.bf16.msra.mxu0 0
    %399 = vmatpush.bf16.msra.mxu0 %v267
    %400 = vmatmul.bf16.gmra.mxu0 %v390
    %v401 = vpop.f32.mrf.mxu0
    %v402 = vadd.f32 %v385, %v401
    %v403 = vpop.f32.mrf.mxu0
    %v404 = vadd.f32 %v387, %v403
    %405 = vdwg.mxu0
    %s406 = scalar_lea.vmem %s4, 32
    %v407 = vld [vmem:[%s406] sm:$0xf]
    %v408 = vld [vmem:[%s406 + $0x4] sm:$0xf]
    %v409 = vld [vmem:[%s406 + $0x8] sm:$0xf]
    %v410 = vld [vmem:[%s406 + $0xc] sm:$0xf]
    %v415 = vunpack.c.l.b16 %v407
    %v416 = vunpack.c.l.b16 %v408
    %v417 = vunpack.c.l.b16 %v409
    %v418 = vunpack.c.l.b16 %v410
    %v419 = vpack.c.b16 %v416, %v415
    %v420 = vpack.c.b16 %v418, %v417
    %423 = vmatpush.bf16.msra.mxu0 0
    %424 = vmatpush.bf16.msra.mxu0 0
    %425 = vmatpush.bf16.msra.mxu0 0
    %426 = vmatpush.bf16.msra.mxu0 0
    %427 = vmatpush.bf16.msra.mxu0 0
    %428 = vmatpush.bf16.msra.mxu0 0
    %429 = vmatpush.bf16.msra.mxu0 %v420
    %430 = vmatpush.bf16.msra.mxu0 %v419
    %431 = vmatmul.bf16.gmra.mxu0 %v179
    %v432 = vpop.f32.mrf.mxu0
    %v433 = vadd.f32 0.0, %v432
    %v434 = vpop.f32.mrf.mxu0
    %v435 = vadd.f32 0.0, %v434
    %436 = vdwg.mxu0
    %v437 = vpack.c.bf16 %v435, %v433
    %v439 = vsel %vm37, %v437, 0
    %441 = vmatpush.bf16.msra.mxu0 0
    %442 = vmatpush.bf16.msra.mxu0 0
    %443 = vmatpush.bf16.msra.mxu0 0
    %444 = vmatpush.bf16.msra.mxu0 0
    %445 = vmatpush.bf16.msra.mxu0 0
    %446 = vmatpush.bf16.msra.mxu0 0
    %447 = vmatpush.bf16.msra.mxu0 %v161
    %448 = vmatpush.bf16.msra.mxu0 %v160
    %449 = vmatmul.bf16.gmra.mxu0 %v439
    %v450 = vpop.f32.mrf.mxu0
    %v451 = vadd.f32 %v33, %v450
    %v452 = vpop.f32.mrf.mxu0
    %v453 = vadd.f32 %v34, %v452
    %454 = vdwg.mxu0
    %v455 = vsel %vm213, %v451, -inf
    %456 = vmax.xlane.f32.xlu0 %v455
    %v457 = vpop.xlane.xlu0 %456
    %v458 = vsel %vm213, %v453, -inf
    %459 = vmax.xlane.f32.xlu0 %v458
    %v460 = vpop.xlane.xlu0 %459
    %v461 = vsub.f32 %v451, %v457
    %v462 = vsub.f32 %v453, %v460
    %v463 = vmul.f32 %v461, 1.442695
    %v464 = vpow.pop %v463
    %v465 = vmul.f32 %v462, 1.442695
    %v466 = vpow.pop %v465
    %v467 = vsel %vm213, %v464, 0.0
    %468 = vadd.xlane.f32.xlu0 %v467
    %v469 = vpop.xlane.xlu0 %468
    %v470 = vsel %vm213, %v466, 0.0
    %471 = vadd.xlane.f32.xlu0 %v470
    %v472 = vpop.xlane.xlu0 %471
    %v473 = vrcp.pop %v469
    %v474 = vrcp.pop %v472
    %v475 = vmul.f32 %v464, %v473
    %v476 = vmul.f32 %v466, %v474
    %s477 = scalar_lea.vmem %s5, 32
    %v478 = vld [vmem:[%s477] sm:$0xf]
    %v479 = vld [vmem:[%s477 + $0x4] sm:$0xf]
    %v480 = vld [vmem:[%s477 + $0x8] sm:$0xf]
    %v481 = vld [vmem:[%s477 + $0xc] sm:$0xf]
    %v486 = vunpack.c.l.b16 %v478
    %v487 = vunpack.c.l.b16 %v479
    %v488 = vunpack.c.l.b16 %v480
    %v489 = vunpack.c.l.b16 %v481
    %v490 = vpack.c.b16 %v487, %v486
    %v491 = vpack.c.b16 %v489, %v488
    %494 = vmatpush.bf16.msra.mxu0 0
    %495 = vmatpush.bf16.msra.mxu0 0
    %496 = vmatpush.bf16.msra.mxu0 0
    %497 = vmatpush.bf16.msra.mxu0 0
    %498 = vmatpush.bf16.msra.mxu0 0
    %499 = vmatpush.bf16.msra.mxu0 0
    %500 = vmatpush.bf16.msra.mxu0 %v491
    %501 = vmatpush.bf16.msra.mxu0 %v490
    %502 = vmatmul.bf16.gmra.mxu0 %v179
    %v503 = vpop.f32.mrf.mxu0
    %v504 = vadd.f32 0.0, %v503
    %v505 = vpop.f32.mrf.mxu0
    %v506 = vadd.f32 0.0, %v505
    %507 = vdwg.mxu0
    %v508 = vpack.c.bf16 %v476, %v475
    %v509 = vpack.c.bf16 %v506, %v504
    %v511 = vsel %vm213, %v508, 0
    %513 = vmatpush.bf16.msra.mxu0 0
    %514 = vmatpush.bf16.msra.mxu0 0
    %515 = vmatpush.bf16.msra.mxu0 0
    %516 = vmatpush.bf16.msra.mxu0 0
    %517 = vmatpush.bf16.msra.mxu0 0
    %518 = vmatpush.bf16.msra.mxu0 0
    %519 = vmatpush.bf16.msra.mxu0 0
    %520 = vmatpush.bf16.msra.mxu0 %v509
    %521 = vmatmul.bf16.gmra.mxu0 %v511
    %v522 = vpop.f32.mrf.mxu0
    %v523 = vadd.f32 0.0, %v522
    %v524 = vpop.f32.mrf.mxu0
    %v525 = vadd.f32 0.0, %v524
    %526 = vdwg.mxu0
    %v527 = vadd.f32 %v402, %v523
    %v528 = vadd.f32 %v404, %v525
    %s529 = scalar_lea.vmem %s4, 48
    %v530 = vld [vmem:[%s529] sm:$0xf]
    %v531 = vld [vmem:[%s529 + $0x4] sm:$0xf]
    %v532 = vld [vmem:[%s529 + $0x8] sm:$0xf]
    %v533 = vld [vmem:[%s529 + $0xc] sm:$0xf]
    %v538 = vunpack.c.l.b16 %v530
    %v539 = vunpack.c.l.b16 %v531
    %v540 = vunpack.c.l.b16 %v532
    %v541 = vunpack.c.l.b16 %v533
    %v542 = vpack.c.b16 %v539, %v538
    %v543 = vpack.c.b16 %v541, %v540
    %546 = vmatpush.bf16.msra.mxu0 0
    %547 = vmatpush.bf16.msra.mxu0 0
    %548 = vmatpush.bf16.msra.mxu0 0
    %549 = vmatpush.bf16.msra.mxu0 0
    %550 = vmatpush.bf16.msra.mxu0 0
    %551 = vmatpush.bf16.msra.mxu0 0
    %552 = vmatpush.bf16.msra.mxu0 %v543
    %553 = vmatpush.bf16.msra.mxu0 %v542
    %554 = vmatmul.bf16.gmra.mxu0 %v179
    %v555 = vpop.f32.mrf.mxu0
    %v556 = vadd.f32 0.0, %v555
    %v557 = vpop.f32.mrf.mxu0
    %v558 = vadd.f32 0.0, %v557
    %559 = vdwg.mxu0
    %v560 = vpack.c.bf16 %v558, %v556
    %v562 = vsel %vm37, %v560, 0
    %564 = vmatpush.bf16.msra.mxu0 0
    %565 = vmatpush.bf16.msra.mxu0 0
    %566 = vmatpush.bf16.msra.mxu0 0
    %567 = vmatpush.bf16.msra.mxu0 0
    %568 = vmatpush.bf16.msra.mxu0 0
    %569 = vmatpush.bf16.msra.mxu0 0
    %570 = vmatpush.bf16.msra.mxu0 %v161
    %571 = vmatpush.bf16.msra.mxu0 %v160
    %572 = vmatmul.bf16.gmra.mxu0 %v562
    %v573 = vpop.f32.mrf.mxu0
    %v574 = vadd.f32 %v33, %v573
    %v575 = vpop.f32.mrf.mxu0
    %v576 = vadd.f32 %v34, %v575
    %577 = vdwg.mxu0
    %v578 = vsel %vm213, %v574, -inf
    %579 = vmax.xlane.f32.xlu0 %v578
    %v580 = vpop.xlane.xlu0 %579
    %v581 = vsel %vm213, %v576, -inf
    %582 = vmax.xlane.f32.xlu0 %v581
    %v583 = vpop.xlane.xlu0 %582
    %v584 = vsub.f32 %v574, %v580
    %v585 = vsub.f32 %v576, %v583
    %v586 = vmul.f32 %v584, 1.442695
    %v587 = vpow.pop %v586
    %v588 = vmul.f32 %v585, 1.442695
    %v589 = vpow.pop %v588
    %v590 = vsel %vm213, %v587, 0.0
    %591 = vadd.xlane.f32.xlu0 %v590
    %v592 = vpop.xlane.xlu0 %591
    %v593 = vsel %vm213, %v589, 0.0
    %594 = vadd.xlane.f32.xlu0 %v593
    %v595 = vpop.xlane.xlu0 %594
    %v596 = vrcp.pop %v592
    %v597 = vrcp.pop %v595
    %v598 = vmul.f32 %v587, %v596
    %v599 = vmul.f32 %v589, %v597
    %s600 = scalar_lea.vmem %s5, 48
    %v601 = vld [vmem:[%s600] sm:$0xf]
    %v602 = vld [vmem:[%s600 + $0x4] sm:$0xf]
    %v603 = vld [vmem:[%s600 + $0x8] sm:$0xf]
    %v604 = vld [vmem:[%s600 + $0xc] sm:$0xf]
    %v609 = vunpack.c.l.b16 %v601
    %v610 = vunpack.c.l.b16 %v602
    %v611 = vunpack.c.l.b16 %v603
    %v612 = vunpack.c.l.b16 %v604
    %v613 = vpack.c.b16 %v610, %v609
    %v614 = vpack.c.b16 %v612, %v611
    %617 = vmatpush.bf16.msra.mxu0 0
    %618 = vmatpush.bf16.msra.mxu0 0
    %619 = vmatpush.bf16.msra.mxu0 0
    %620 = vmatpush.bf16.msra.mxu0 0
    %621 = vmatpush.bf16.msra.mxu0 0
    %622 = vmatpush.bf16.msra.mxu0 0
    %623 = vmatpush.bf16.msra.mxu0 %v614
    %624 = vmatpush.bf16.msra.mxu0 %v613
    %625 = vmatmul.bf16.gmra.mxu0 %v179
    %v626 = vpop.f32.mrf.mxu0
    %v627 = vadd.f32 0.0, %v626
    %v628 = vpop.f32.mrf.mxu0
    %v629 = vadd.f32 0.0, %v628
    %630 = vdwg.mxu0
    %v631 = vpack.c.bf16 %v599, %v598
    %v632 = vpack.c.bf16 %v629, %v627
    %v634 = vsel %vm213, %v631, 0
    %636 = vmatpush.bf16.msra.mxu0 0
    %637 = vmatpush.bf16.msra.mxu0 0
    %638 = vmatpush.bf16.msra.mxu0 0
    %639 = vmatpush.bf16.msra.mxu0 0
    %640 = vmatpush.bf16.msra.mxu0 0
    %641 = vmatpush.bf16.msra.mxu0 0
    %642 = vmatpush.bf16.msra.mxu0 0
    %643 = vmatpush.bf16.msra.mxu0 %v632
    %644 = vmatmul.bf16.gmra.mxu0 %v634
    %v645 = vpop.f32.mrf.mxu0
    %v646 = vadd.f32 0.0, %v645
    %v647 = vpop.f32.mrf.mxu0
    %v648 = vadd.f32 0.0, %v647
    %649 = vdwg.mxu0
    %v650 = vadd.f32 %v527, %v646
    %v651 = vadd.f32 %v528, %v648
    %v652 = vadd.f32 %v31, %v650
    %v653 = vadd.f32 %v32, %v651
    %v654 = vld [vmem:[%s2 + $0x4] sm:$0x1]
    %v655 = vperm.slane %v654, 0
    %v656 = vadd.f32 %v652, %v655
    %v657 = vadd.f32 %v653, %v655
    %v658 = vld [vmem:[%s2 + $0x2] sm:$0x1]
    %v659 = vld [vmem:[%s2 + $0x3] sm:$0x1]
    %v660 = vsel %vm37, %v656, 0.0
    %661 = vadd.xlane.f32.xlu0 %v660
    %v662 = vpop.xlane.xlu0 %661
    %v663 = vsel %vm37, %v657, 0.0
    %664 = vadd.xlane.f32.xlu0 %v663
    %v665 = vpop.xlane.xlu0 %664
    %v666 = vmul.f32 %v662, %v50
    %v667 = vmul.f32 %v665, %v50
    %v668 = vsub.f32 %v656, %v666
    %v669 = vsub.f32 %v657, %v667
    %v670 = vmul.f32 %v668, %v668
    %v671 = vmul.f32 %v669, %v669
    %v672 = vsel %vm37, %v670, 0.0
    %673 = vadd.xlane.f32.xlu0 %v672
    %v674 = vpop.xlane.xlu0 %673
    %v675 = vsel %vm37, %v671, 0.0
    %676 = vadd.xlane.f32.xlu0 %v675
    %v677 = vpop.xlane.xlu0 %676
    %v678 = vmul.f32 %v674, 0.032258064
    %v679 = vmul.f32 %v677, 0.032258064
    %v680 = vperm.slane %v658, 0
    %v681 = vmul.f32 %v680, %v668
    %v682 = vmul.f32 %v680, %v669
    %v683 = vrsqrt.pop %v678
    %v684 = vmul.f32 %v683, %v678
    %v685 = vmul.f32 %v684, %v683
    %v686 = vmul.f32 0.5, %v685
    %v687 = vsub.f32 1.5, %v686
    %v688 = vmul.f32 %v683, %v687
    %v689 = vmul.f32 %v678, %v688
    %vm690 = vcmp.eq.f32.partialorder %v678, inf
    %v691 = vsel %vm690, %v678, %v689
    %vm692 = vcmp.eq.f32.partialorder %v678, 0.0
    %v693 = vand.u32 %v678, 2147483648
    %v694 = vsel %vm692, %v693, %v691
    %v695 = vrsqrt.pop %v679
    %v696 = vmul.f32 %v695, %v679
    %v697 = vmul.f32 %v696, %v695
    %v698 = vmul.f32 0.5, %v697
    %v699 = vsub.f32 1.5, %v698
    %v700 = vmul.f32 %v695, %v699
    %v701 = vmul.f32 %v679, %v700
    %vm702 = vcmp.eq.f32.partialorder %v679, inf
    %v703 = vsel %vm702, %v679, %v701
    %vm704 = vcmp.eq.f32.partialorder %v679, 0.0
    %v705 = vand.u32 %v679, 2147483648
    %v706 = vsel %vm704, %v705, %v703
    %v707 = vadd.f32 %v694, 1e-06
    %v708 = vadd.f32 %v706, 1e-06
    %v709 = vrcp.pop %v707
    %v710 = vmul.f32 %v707, %v709
    %v711 = vsub.f32 1.0, %v710
    %v712 = vmul.f32 %v709, %v711
    %v713 = vadd.f32 %v709, %v712
    %vm714 = vweird.f32 %v707
    %vm715 = vweird.f32 %v709
    %vm716 = vmor %vm714, %vm715
    %v717 = vsel %vm716, %v709, %v713
    %v718 = vand.u32 2147483647, %v707
    %vm719 = vcmp.eq.f32.partialorder %v718, 8.507059e+37
    %v720 = vand.u32 %v707, 2147483648
    %v721 = vor.u32 1.1754944e-38, %v720
    %v722 = vsel %vm719, %v721, %v717
    %v723 = vmul.f32 %v681, %v722
    %v724 = vrcp.pop %v708
    %v725 = vmul.f32 %v708, %v724
    %v726 = vsub.f32 1.0, %v725
    %v727 = vmul.f32 %v724, %v726
    %v728 = vadd.f32 %v724, %v727
    %vm729 = vweird.f32 %v708
    %vm730 = vweird.f32 %v724
    %vm731 = vmor %vm729, %vm730
    %v732 = vsel %vm731, %v724, %v728
    %v733 = vand.u32 2147483647, %v708
    %vm734 = vcmp.eq.f32.partialorder %v733, 8.507059e+37
    %v735 = vand.u32 %v708, 2147483648
    %v736 = vor.u32 1.1754944e-38, %v735
    %v737 = vsel %vm734, %v736, %v732
    %v738 = vmul.f32 %v682, %v737
    %v739 = vperm.slane %v659, 0
    %v740 = vadd.f32 %v723, %v739
    %v741 = vadd.f32 %v738, %v739
    %v742 = vpack.c.bf16 %v741, %v740
    %v743 = vld [vmem:[%s6] sm:$0xff]
    %v744 = vld [vmem:[%s6 + $0x8] sm:$0xff]
    %v745 = vld [vmem:[%s6 + $0x10] sm:$0xff]
    %v746 = vld [vmem:[%s6 + $0x18] sm:$0xff]
    %v747 = vld [vmem:[%s6 + $0x20] sm:$0xff]
    %v748 = vld [vmem:[%s6 + $0x28] sm:$0xff]
    %v749 = vld [vmem:[%s6 + $0x30] sm:$0xff]
    %v750 = vld [vmem:[%s6 + $0x38] sm:$0xff]
    %v751 = vld [vmem:[%s6 + $0x40] sm:$0xff]
    %v752 = vld [vmem:[%s6 + $0x48] sm:$0xff]
    %v753 = vld [vmem:[%s6 + $0x50] sm:$0xff]
    %v754 = vld [vmem:[%s6 + $0x58] sm:$0xff]
    %v755 = vld [vmem:[%s6 + $0x60] sm:$0xff]
    %v756 = vld [vmem:[%s6 + $0x68] sm:$0xff]
    %v757 = vld [vmem:[%s6 + $0x70] sm:$0xff]
    %v758 = vld [vmem:[%s6 + $0x78] sm:$0xff]
    %v759 = vld [vmem:[%s6 + $0x80] sm:$0xff]
    %v760 = vld [vmem:[%s6 + $0x88] sm:$0xff]
    %v761 = vld [vmem:[%s6 + $0x90] sm:$0xff]
    %v762 = vld [vmem:[%s6 + $0x98] sm:$0xff]
    %v763 = vld [vmem:[%s6 + $0xa0] sm:$0xff]
    %v764 = vld [vmem:[%s6 + $0xa8] sm:$0xff]
    %v765 = vld [vmem:[%s6 + $0xb0] sm:$0xff]
    %v766 = vld [vmem:[%s6 + $0xb8] sm:$0xff]
    %v767 = vld [vmem:[%s6 + $0xc0] sm:$0xff]
    %v768 = vld [vmem:[%s6 + $0xc8] sm:$0xff]
    %v769 = vld [vmem:[%s6 + $0xd0] sm:$0xff]
    %v770 = vld [vmem:[%s6 + $0xd8] sm:$0xff]
    %v771 = vld [vmem:[%s6 + $0xe0] sm:$0xff]
    %v772 = vld [vmem:[%s6 + $0xe8] sm:$0xff]
    %v773 = vld [vmem:[%s6 + $0xf0] sm:$0xff]
    %v774 = vld [vmem:[%s6 + $0xf8] sm:$0xff]
    %v775 = vld [vmem:[%s3] ss:$2 sm:$0xff]
    %s776 = scalar_lea.vmem %s3, 16
    %v777 = vld [vmem:[%s776] ss:$2 sm:$0xff]
    %v780 = vperm.slane %v775, 0
    %v781 = vperm.slane %v775, 1
    %v782 = vperm.slane %v775, 2
    %v783 = vperm.slane %v775, 3
    %v784 = vperm.slane %v775, 4
    %v785 = vperm.slane %v775, 5
    %v786 = vperm.slane %v775, 6
    %v787 = vperm.slane %v775, 7
    %v788 = vperm.slane %v777, 0
    %v789 = vperm.slane %v777, 1
    %v790 = vperm.slane %v777, 2
    %v791 = vperm.slane %v777, 3
    %v792 = vperm.slane %v777, 4
    %v793 = vperm.slane %v777, 5
    %v794 = vperm.slane %v777, 6
    %v795 = vperm.slane %v777, 7
    %v844 = vunpack.c.l.b16 %v743
    %v845 = vunpack.c.h.b16 %v743
    %v846 = vunpack.c.l.b16 %v744
    %v847 = vunpack.c.h.b16 %v744
    %v848 = vunpack.c.l.b16 %v745
    %v849 = vunpack.c.h.b16 %v745
    %v850 = vunpack.c.l.b16 %v746
    %v851 = vunpack.c.h.b16 %v746
    %v852 = vunpack.c.l.b16 %v747
    %v853 = vunpack.c.h.b16 %v747
    %v854 = vunpack.c.l.b16 %v748
    %v855 = vunpack.c.h.b16 %v748
    %v856 = vunpack.c.l.b16 %v749
    %v857 = vunpack.c.h.b16 %v749
    %v858 = vunpack.c.l.b16 %v750
    %v859 = vunpack.c.h.b16 %v750
    %v860 = vunpack.c.l.b16 %v751
    %v861 = vunpack.c.h.b16 %v751
    %v862 = vunpack.c.l.b16 %v752
    %v863 = vunpack.c.h.b16 %v752
    %v864 = vunpack.c.l.b16 %v753
    %v865 = vunpack.c.h.b16 %v753
    %v866 = vunpack.c.l.b16 %v754
    %v867 = vunpack.c.h.b16 %v754
    %v868 = vunpack.c.l.b16 %v755
    %v869 = vunpack.c.h.b16 %v755
    %v870 = vunpack.c.l.b16 %v756
    %v871 = vunpack.c.h.b16 %v756
    %v872 = vunpack.c.l.b16 %v757
    %v873 = vunpack.c.h.b16 %v757
    %v874 = vunpack.c.l.b16 %v758
    %v875 = vunpack.c.h.b16 %v758
    %v876 = vunpack.c.l.b16 %v759
    %v877 = vunpack.c.h.b16 %v759
    %v878 = vunpack.c.l.b16 %v760
    %v879 = vunpack.c.h.b16 %v760
    %v880 = vunpack.c.l.b16 %v761
    %v881 = vunpack.c.h.b16 %v761
    %v882 = vunpack.c.l.b16 %v762
    %v883 = vunpack.c.h.b16 %v762
    %v884 = vunpack.c.l.b16 %v763
    %v885 = vunpack.c.h.b16 %v763
    %v886 = vunpack.c.l.b16 %v764
    %v887 = vunpack.c.h.b16 %v764
    %v888 = vunpack.c.l.b16 %v765
    %v889 = vunpack.c.h.b16 %v765
    %v890 = vunpack.c.l.b16 %v766
    %v891 = vunpack.c.h.b16 %v766
    %v892 = vunpack.c.l.b16 %v767
    %v893 = vunpack.c.h.b16 %v767
    %v894 = vunpack.c.l.b16 %v768
    %v895 = vunpack.c.h.b16 %v768
    %v896 = vunpack.c.l.b16 %v769
    %v897 = vunpack.c.h.b16 %v769
    %v898 = vunpack.c.l.b16 %v770
    %v899 = vunpack.c.h.b16 %v770
    %v900 = vunpack.c.l.b16 %v771
    %v901 = vunpack.c.h.b16 %v771
    %v902 = vunpack.c.l.b16 %v772
    %v903 = vunpack.c.h.b16 %v772
    %v904 = vunpack.c.l.b16 %v773
    %v905 = vunpack.c.h.b16 %v773
    %v906 = vunpack.c.l.b16 %v774
    %v907 = vunpack.c.h.b16 %v774
    %v908 = vpack.c.b16 %v860, %v844
    %v909 = vpack.c.b16 %v861, %v845
    %v910 = vpack.c.b16 %v862, %v846
    %v911 = vpack.c.b16 %v863, %v847
    %v912 = vpack.c.b16 %v864, %v848
    %v913 = vpack.c.b16 %v865, %v849
    %v914 = vpack.c.b16 %v866, %v850
    %v915 = vpack.c.b16 %v867, %v851
    %v916 = vpack.c.b16 %v868, %v852
    %v917 = vpack.c.b16 %v869, %v853
    %v918 = vpack.c.b16 %v870, %v854
    %v919 = vpack.c.b16 %v871, %v855
    %v920 = vpack.c.b16 %v872, %v856
    %v921 = vpack.c.b16 %v873, %v857
    %v922 = vpack.c.b16 %v874, %v858
    %v923 = vpack.c.b16 %v875, %v859
    %v924 = vpack.c.b16 %v892, %v876
    %v925 = vpack.c.b16 %v893, %v877
    %v926 = vpack.c.b16 %v894, %v878
    %v927 = vpack.c.b16 %v895, %v879
    %v928 = vpack.c.b16 %v896, %v880
    %v929 = vpack.c.b16 %v897, %v881
    %v930 = vpack.c.b16 %v898, %v882
    %v931 = vpack.c.b16 %v899, %v883
    %v932 = vpack.c.b16 %v900, %v884
    %v933 = vpack.c.b16 %v901, %v885
    %v934 = vpack.c.b16 %v902, %v886
    %v935 = vpack.c.b16 %v903, %v887
    %v936 = vpack.c.b16 %v904, %v888
    %v937 = vpack.c.b16 %v905, %v889
    %v938 = vpack.c.b16 %v906, %v890
    %v939 = vpack.c.b16 %v907, %v891
    %v973 = vsel %vm37, %v742, 0
    %975 = vmatpush.bf16.msra.mxu0 0
    %976 = vmatpush.bf16.msra.mxu0 0
    %977 = vmatpush.bf16.msra.mxu0 0
    %978 = vmatpush.bf16.msra.mxu0 0
    %979 = vmatpush.bf16.msra.mxu0 0
    %980 = vmatpush.bf16.msra.mxu0 0
    %981 = vmatpush.bf16.msra.mxu0 %v924
    %982 = vmatpush.bf16.msra.mxu0 %v908
    %983 = vmatmul.bf16.gmra.mxu0 %v973
    %v984 = vpop.f32.mrf.mxu0
    %v985 = vadd.f32 %v780, %v984
    %v986 = vpop.f32.mrf.mxu0
    %v987 = vadd.f32 %v780, %v986
    %988 = vdwg.mxu0
    %989 = vmatpush.bf16.msra.mxu0 0
    %990 = vmatpush.bf16.msra.mxu0 0
    %991 = vmatpush.bf16.msra.mxu0 0
    %992 = vmatpush.bf16.msra.mxu0 0
    %993 = vmatpush.bf16.msra.mxu0 0
    %994 = vmatpush.bf16.msra.mxu0 0
    %995 = vmatpush.bf16.msra.mxu0 %v925
    %996 = vmatpush.bf16.msra.mxu0 %v909
    %997 = vmatmul.bf16.gmra.mxu0 %v973
    %v998 = vpop.f32.mrf.mxu0
    %v999 = vadd.f32 %v781, %v998
    %v1000 = vpop.f32.mrf.mxu0
    %v1001 = vadd.f32 %v781, %v1000
    %1002 = vdwg.mxu0
    %1003 = vmatpush.bf16.msra.mxu0 0
    %1004 = vmatpush.bf16.msra.mxu0 0
    %1005 = vmatpush.bf16.msra.mxu0 0
    %1006 = vmatpush.bf16.msra.mxu0 0
    %1007 = vmatpush.bf16.msra.mxu0 0
    %1008 = vmatpush.bf16.msra.mxu0 0
    %1009 = vmatpush.bf16.msra.mxu0 %v926
    %1010 = vmatpush.bf16.msra.mxu0 %v910
    %1011 = vmatmul.bf16.gmra.mxu0 %v973
    %v1012 = vpop.f32.mrf.mxu0
    %v1013 = vadd.f32 %v782, %v1012
    %v1014 = vpop.f32.mrf.mxu0
    %v1015 = vadd.f32 %v782, %v1014
    %1016 = vdwg.mxu0
    %1017 = vmatpush.bf16.msra.mxu0 0
    %1018 = vmatpush.bf16.msra.mxu0 0
    %1019 = vmatpush.bf16.msra.mxu0 0
    %1020 = vmatpush.bf16.msra.mxu0 0
    %1021 = vmatpush.bf16.msra.mxu0 0
    %1022 = vmatpush.bf16.msra.mxu0 0
    %1023 = vmatpush.bf16.msra.mxu0 %v927
    %1024 = vmatpush.bf16.msra.mxu0 %v911
    %1025 = vmatmul.bf16.gmra.mxu0 %v973
    %v1026 = vpop.f32.mrf.mxu0
    %v1027 = vadd.f32 %v783, %v1026
    %v1028 = vpop.f32.mrf.mxu0
    %v1029 = vadd.f32 %v783, %v1028
    %1030 = vdwg.mxu0
    %1031 = vmatpush.bf16.msra.mxu0 0
    %1032 = vmatpush.bf16.msra.mxu0 0
    %1033 = vmatpush.bf16.msra.mxu0 0
    %1034 = vmatpush.bf16.msra.mxu0 0
    %1035 = vmatpush.bf16.msra.mxu0 0
    %1036 = vmatpush.bf16.msra.mxu0 0
    %1037 = vmatpush.bf16.msra.mxu0 %v928
    %1038 = vmatpush.bf16.msra.mxu0 %v912
    %1039 = vmatmul.bf16.gmra.mxu0 %v973
    %v1040 = vpop.f32.mrf.mxu0
    %v1041 = vadd.f32 %v784, %v1040
    %v1042 = vpop.f32.mrf.mxu0
    %v1043 = vadd.f32 %v784, %v1042
    %1044 = vdwg.mxu0
    %1045 = vmatpush.bf16.msra.mxu0 0
    %1046 = vmatpush.bf16.msra.mxu0 0
    %1047 = vmatpush.bf16.msra.mxu0 0
    %1048 = vmatpush.bf16.msra.mxu0 0
    %1049 = vmatpush.bf16.msra.mxu0 0
    %1050 = vmatpush.bf16.msra.mxu0 0
    %1051 = vmatpush.bf16.msra.mxu0 %v929
    %1052 = vmatpush.bf16.msra.mxu0 %v913
    %1053 = vmatmul.bf16.gmra.mxu0 %v973
    %v1054 = vpop.f32.mrf.mxu0
    %v1055 = vadd.f32 %v785, %v1054
    %v1056 = vpop.f32.mrf.mxu0
    %v1057 = vadd.f32 %v785, %v1056
    %1058 = vdwg.mxu0
    %1059 = vmatpush.bf16.msra.mxu0 0
    %1060 = vmatpush.bf16.msra.mxu0 0
    %1061 = vmatpush.bf16.msra.mxu0 0
    %1062 = vmatpush.bf16.msra.mxu0 0
    %1063 = vmatpush.bf16.msra.mxu0 0
    %1064 = vmatpush.bf16.msra.mxu0 0
    %1065 = vmatpush.bf16.msra.mxu0 %v930
    %1066 = vmatpush.bf16.msra.mxu0 %v914
    %1067 = vmatmul.bf16.gmra.mxu0 %v973
    %v1068 = vpop.f32.mrf.mxu0
    %v1069 = vadd.f32 %v786, %v1068
    %v1070 = vpop.f32.mrf.mxu0
    %v1071 = vadd.f32 %v786, %v1070
    %1072 = vdwg.mxu0
    %1073 = vmatpush.bf16.msra.mxu0 0
    %1074 = vmatpush.bf16.msra.mxu0 0
    %1075 = vmatpush.bf16.msra.mxu0 0
    %1076 = vmatpush.bf16.msra.mxu0 0
    %1077 = vmatpush.bf16.msra.mxu0 0
    %1078 = vmatpush.bf16.msra.mxu0 0
    %1079 = vmatpush.bf16.msra.mxu0 %v931
    %1080 = vmatpush.bf16.msra.mxu0 %v915
    %1081 = vmatmul.bf16.gmra.mxu0 %v973
    %v1082 = vpop.f32.mrf.mxu0
    %v1083 = vadd.f32 %v787, %v1082
    %v1084 = vpop.f32.mrf.mxu0
    %v1085 = vadd.f32 %v787, %v1084
    %1086 = vdwg.mxu0
    %1087 = vmatpush.bf16.msra.mxu0 0
    %1088 = vmatpush.bf16.msra.mxu0 0
    %1089 = vmatpush.bf16.msra.mxu0 0
    %1090 = vmatpush.bf16.msra.mxu0 0
    %1091 = vmatpush.bf16.msra.mxu0 0
    %1092 = vmatpush.bf16.msra.mxu0 0
    %1093 = vmatpush.bf16.msra.mxu0 %v932
    %1094 = vmatpush.bf16.msra.mxu0 %v916
    %1095 = vmatmul.bf16.gmra.mxu0 %v973
    %v1096 = vpop.f32.mrf.mxu0
    %v1097 = vadd.f32 %v788, %v1096
    %v1098 = vpop.f32.mrf.mxu0
    %v1099 = vadd.f32 %v788, %v1098
    %1100 = vdwg.mxu0
    %1101 = vmatpush.bf16.msra.mxu0 0
    %1102 = vmatpush.bf16.msra.mxu0 0
    %1103 = vmatpush.bf16.msra.mxu0 0
    %1104 = vmatpush.bf16.msra.mxu0 0
    %1105 = vmatpush.bf16.msra.mxu0 0
    %1106 = vmatpush.bf16.msra.mxu0 0
    %1107 = vmatpush.bf16.msra.mxu0 %v933
    %1108 = vmatpush.bf16.msra.mxu0 %v917
    %1109 = vmatmul.bf16.gmra.mxu0 %v973
    %v1110 = vpop.f32.mrf.mxu0
    %v1111 = vadd.f32 %v789, %v1110
    %v1112 = vpop.f32.mrf.mxu0
    %v1113 = vadd.f32 %v789, %v1112
    %1114 = vdwg.mxu0
    %1115 = vmatpush.bf16.msra.mxu0 0
    %1116 = vmatpush.bf16.msra.mxu0 0
    %1117 = vmatpush.bf16.msra.mxu0 0
    %1118 = vmatpush.bf16.msra.mxu0 0
    %1119 = vmatpush.bf16.msra.mxu0 0
    %1120 = vmatpush.bf16.msra.mxu0 0
    %1121 = vmatpush.bf16.msra.mxu0 %v934
    %1122 = vmatpush.bf16.msra.mxu0 %v918
    %1123 = vmatmul.bf16.gmra.mxu0 %v973
    %v1124 = vpop.f32.mrf.mxu0
    %v1125 = vadd.f32 %v790, %v1124
    %v1126 = vpop.f32.mrf.mxu0
    %v1127 = vadd.f32 %v790, %v1126
    %1128 = vdwg.mxu0
    %1129 = vmatpush.bf16.msra.mxu0 0
    %1130 = vmatpush.bf16.msra.mxu0 0
    %1131 = vmatpush.bf16.msra.mxu0 0
    %1132 = vmatpush.bf16.msra.mxu0 0
    %1133 = vmatpush.bf16.msra.mxu0 0
    %1134 = vmatpush.bf16.msra.mxu0 0
    %1135 = vmatpush.bf16.msra.mxu0 %v935
    %1136 = vmatpush.bf16.msra.mxu0 %v919
    %1137 = vmatmul.bf16.gmra.mxu0 %v973
    %v1138 = vpop.f32.mrf.mxu0
    %v1139 = vadd.f32 %v791, %v1138
    %v1140 = vpop.f32.mrf.mxu0
    %v1141 = vadd.f32 %v791, %v1140
    %1142 = vdwg.mxu0
    %1143 = vmatpush.bf16.msra.mxu0 0
    %1144 = vmatpush.bf16.msra.mxu0 0
    %1145 = vmatpush.bf16.msra.mxu0 0
    %1146 = vmatpush.bf16.msra.mxu0 0
    %1147 = vmatpush.bf16.msra.mxu0 0
    %1148 = vmatpush.bf16.msra.mxu0 0
    %1149 = vmatpush.bf16.msra.mxu0 %v936
    %1150 = vmatpush.bf16.msra.mxu0 %v920
    %1151 = vmatmul.bf16.gmra.mxu0 %v973
    %v1152 = vpop.f32.mrf.mxu0
    %v1153 = vadd.f32 %v792, %v1152
    %v1154 = vpop.f32.mrf.mxu0
    %v1155 = vadd.f32 %v792, %v1154
    %1156 = vdwg.mxu0
    %1157 = vmatpush.bf16.msra.mxu0 0
    %1158 = vmatpush.bf16.msra.mxu0 0
    %1159 = vmatpush.bf16.msra.mxu0 0
    %1160 = vmatpush.bf16.msra.mxu0 0
    %1161 = vmatpush.bf16.msra.mxu0 0
    %1162 = vmatpush.bf16.msra.mxu0 0
    %1163 = vmatpush.bf16.msra.mxu0 %v937
    %1164 = vmatpush.bf16.msra.mxu0 %v921
    %1165 = vmatmul.bf16.gmra.mxu0 %v973
    %v1166 = vpop.f32.mrf.mxu0
    %v1167 = vadd.f32 %v793, %v1166
    %v1168 = vpop.f32.mrf.mxu0
    %v1169 = vadd.f32 %v793, %v1168
    %1170 = vdwg.mxu0
    %1171 = vmatpush.bf16.msra.mxu0 0
    %1172 = vmatpush.bf16.msra.mxu0 0
    %1173 = vmatpush.bf16.msra.mxu0 0
    %1174 = vmatpush.bf16.msra.mxu0 0
    %1175 = vmatpush.bf16.msra.mxu0 0
    %1176 = vmatpush.bf16.msra.mxu0 0
    %1177 = vmatpush.bf16.msra.mxu0 %v938
    %1178 = vmatpush.bf16.msra.mxu0 %v922
    %1179 = vmatmul.bf16.gmra.mxu0 %v973
    %v1180 = vpop.f32.mrf.mxu0
    %v1181 = vadd.f32 %v794, %v1180
    %v1182 = vpop.f32.mrf.mxu0
    %v1183 = vadd.f32 %v794, %v1182
    %1184 = vdwg.mxu0
    %1185 = vmatpush.bf16.msra.mxu0 0
    %1186 = vmatpush.bf16.msra.mxu0 0
    %1187 = vmatpush.bf16.msra.mxu0 0
    %1188 = vmatpush.bf16.msra.mxu0 0
    %1189 = vmatpush.bf16.msra.mxu0 0
    %1190 = vmatpush.bf16.msra.mxu0 0
    %1191 = vmatpush.bf16.msra.mxu0 %v939
    %1192 = vmatpush.bf16.msra.mxu0 %v923
    %1193 = vmatmul.bf16.gmra.mxu0 %v973
    %v1194 = vpop.f32.mrf.mxu0
    %v1195 = vadd.f32 %v795, %v1194
    %v1196 = vpop.f32.mrf.mxu0
    %v1197 = vadd.f32 %v795, %v1196
    %1198 = vdwg.mxu0
    %v1199 = vmax.f32 %v985, 0.0
    %v1200 = vmax.f32 %v999, 0.0
    %v1201 = vmax.f32 %v1013, 0.0
    %v1202 = vmax.f32 %v1027, 0.0
    %v1203 = vmax.f32 %v1041, 0.0
    %v1204 = vmax.f32 %v1055, 0.0
    %v1205 = vmax.f32 %v1069, 0.0
    %v1206 = vmax.f32 %v1083, 0.0
    %v1207 = vmax.f32 %v1097, 0.0
    %v1208 = vmax.f32 %v1111, 0.0
    %v1209 = vmax.f32 %v1125, 0.0
    %v1210 = vmax.f32 %v1139, 0.0
    %v1211 = vmax.f32 %v1153, 0.0
    %v1212 = vmax.f32 %v1167, 0.0
    %v1213 = vmax.f32 %v1181, 0.0
    %v1214 = vmax.f32 %v1195, 0.0
    %v1215 = vmax.f32 %v987, 0.0
    %v1216 = vmax.f32 %v1001, 0.0
    %v1217 = vmax.f32 %v1015, 0.0
    %v1218 = vmax.f32 %v1029, 0.0
    %v1219 = vmax.f32 %v1043, 0.0
    %v1220 = vmax.f32 %v1057, 0.0
    %v1221 = vmax.f32 %v1071, 0.0
    %v1222 = vmax.f32 %v1085, 0.0
    %v1223 = vmax.f32 %v1099, 0.0
    %v1224 = vmax.f32 %v1113, 0.0
    %v1225 = vmax.f32 %v1127, 0.0
    %v1226 = vmax.f32 %v1141, 0.0
    %v1227 = vmax.f32 %v1155, 0.0
    %v1228 = vmax.f32 %v1169, 0.0
    %v1229 = vmax.f32 %v1183, 0.0
    %v1230 = vmax.f32 %v1197, 0.0
    %v1231 = vpack.c.bf16 %v1215, %v1199
    %v1232 = vpack.c.bf16 %v1216, %v1200
    %v1233 = vpack.c.bf16 %v1217, %v1201
    %v1234 = vpack.c.bf16 %v1218, %v1202
    %v1235 = vpack.c.bf16 %v1219, %v1203
    %v1236 = vpack.c.bf16 %v1220, %v1204
    %v1237 = vpack.c.bf16 %v1221, %v1205
    %v1238 = vpack.c.bf16 %v1222, %v1206
    %v1239 = vpack.c.bf16 %v1223, %v1207
    %v1240 = vpack.c.bf16 %v1224, %v1208
    %v1241 = vpack.c.bf16 %v1225, %v1209
    %v1242 = vpack.c.bf16 %v1226, %v1210
    %v1243 = vpack.c.bf16 %v1227, %v1211
    %v1244 = vpack.c.bf16 %v1228, %v1212
    %v1245 = vpack.c.bf16 %v1229, %v1213
    %v1246 = vpack.c.bf16 %v1230, %v1214
    %v1247 = vld [vmem:[%s7] sm:$0xf]
    %v1248 = vld [vmem:[%s7 + $0x4] sm:$0xf]
    %v1249 = vld [vmem:[%s7 + $0x8] sm:$0xf]
    %v1250 = vld [vmem:[%s7 + $0xc] sm:$0xf]
    %v1251 = vld [vmem:[%s7 + $0x10] sm:$0xf]
    %v1252 = vld [vmem:[%s7 + $0x14] sm:$0xf]
    %v1253 = vld [vmem:[%s7 + $0x18] sm:$0xf]
    %v1254 = vld [vmem:[%s7 + $0x1c] sm:$0xf]
    %v1255 = vld [vmem:[%s7 + $0x20] sm:$0xf]
    %v1256 = vld [vmem:[%s7 + $0x24] sm:$0xf]
    %v1257 = vld [vmem:[%s7 + $0x28] sm:$0xf]
    %v1258 = vld [vmem:[%s7 + $0x2c] sm:$0xf]
    %v1259 = vld [vmem:[%s7 + $0x30] sm:$0xf]
    %v1260 = vld [vmem:[%s7 + $0x34] sm:$0xf]
    %v1261 = vld [vmem:[%s7 + $0x38] sm:$0xf]
    %v1262 = vld [vmem:[%s7 + $0x3c] sm:$0xf]
    %v1263 = vld [vmem:[%s7 + $0x40] sm:$0xf]
    %v1264 = vld [vmem:[%s7 + $0x44] sm:$0xf]
    %v1265 = vld [vmem:[%s7 + $0x48] sm:$0xf]
    %v1266 = vld [vmem:[%s7 + $0x4c] sm:$0xf]
    %v1267 = vld [vmem:[%s7 + $0x50] sm:$0xf]
    %v1268 = vld [vmem:[%s7 + $0x54] sm:$0xf]
    %v1269 = vld [vmem:[%s7 + $0x58] sm:$0xf]
    %v1270 = vld [vmem:[%s7 + $0x5c] sm:$0xf]
    %v1271 = vld [vmem:[%s7 + $0x60] sm:$0xf]
    %v1272 = vld [vmem:[%s7 + $0x64] sm:$0xf]
    %v1273 = vld [vmem:[%s7 + $0x68] sm:$0xf]
    %v1274 = vld [vmem:[%s7 + $0x6c] sm:$0xf]
    %v1275 = vld [vmem:[%s7 + $0x70] sm:$0xf]
    %v1276 = vld [vmem:[%s7 + $0x74] sm:$0xf]
    %v1277 = vld [vmem:[%s7 + $0x78] sm:$0xf]
    %v1278 = vld [vmem:[%s7 + $0x7c] sm:$0xf]
    %v1279 = vld [vmem:[%s7 + $0x80] sm:$0xf]
    %v1280 = vld [vmem:[%s7 + $0x84] sm:$0xf]
    %v1281 = vld [vmem:[%s7 + $0x88] sm:$0xf]
    %v1282 = vld [vmem:[%s7 + $0x8c] sm:$0xf]
    %v1283 = vld [vmem:[%s7 + $0x90] sm:$0xf]
    %v1284 = vld [vmem:[%s7 + $0x94] sm:$0xf]
    %v1285 = vld [vmem:[%s7 + $0x98] sm:$0xf]
    %v1286 = vld [vmem:[%s7 + $0x9c] sm:$0xf]
    %v1287 = vld [vmem:[%s7 + $0xa0] sm:$0xf]
    %v1288 = vld [vmem:[%s7 + $0xa4] sm:$0xf]
    %v1289 = vld [vmem:[%s7 + $0xa8] sm:$0xf]
    %v1290 = vld [vmem:[%s7 + $0xac] sm:$0xf]
    %v1291 = vld [vmem:[%s7 + $0xb0] sm:$0xf]
    %v1292 = vld [vmem:[%s7 + $0xb4] sm:$0xf]
    %v1293 = vld [vmem:[%s7 + $0xb8] sm:$0xf]
    %v1294 = vld [vmem:[%s7 + $0xbc] sm:$0xf]
    %v1295 = vld [vmem:[%s7 + $0xc0] sm:$0xf]
    %v1296 = vld [vmem:[%s7 + $0xc4] sm:$0xf]
    %v1297 = vld [vmem:[%s7 + $0xc8] sm:$0xf]
    %v1298 = vld [vmem:[%s7 + $0xcc] sm:$0xf]
    %v1299 = vld [vmem:[%s7 + $0xd0] sm:$0xf]
    %v1300 = vld [vmem:[%s7 + $0xd4] sm:$0xf]
    %v1301 = vld [vmem:[%s7 + $0xd8] sm:$0xf]
    %v1302 = vld [vmem:[%s7 + $0xdc] sm:$0xf]
    %v1303 = vld [vmem:[%s7 + $0xe0] sm:$0xf]
    %v1304 = vld [vmem:[%s7 + $0xe4] sm:$0xf]
    %v1305 = vld [vmem:[%s7 + $0xe8] sm:$0xf]
    %v1306 = vld [vmem:[%s7 + $0xec] sm:$0xf]
    %v1307 = vld [vmem:[%s7 + $0xf0] sm:$0xf]
    %v1308 = vld [vmem:[%s7 + $0xf4] sm:$0xf]
    %v1309 = vld [vmem:[%s7 + $0xf8] sm:$0xf]
    %v1310 = vld [vmem:[%s7 + $0xfc] sm:$0xf]
    %v1311 = vld [vmem:[%s7 + $0x100] sm:$0xf]
    %v1312 = vld [vmem:[%s7 + $0x104] sm:$0xf]
    %v1313 = vld [vmem:[%s7 + $0x108] sm:$0xf]
    %v1314 = vld [vmem:[%s7 + $0x10c] sm:$0xf]
    %v1315 = vld [vmem:[%s7 + $0x110] sm:$0xf]
    %v1316 = vld [vmem:[%s7 + $0x114] sm:$0xf]
    %v1317 = vld [vmem:[%s7 + $0x118] sm:$0xf]
    %v1318 = vld [vmem:[%s7 + $0x11c] sm:$0xf]
    %v1319 = vld [vmem:[%s7 + $0x120] sm:$0xf]
    %v1320 = vld [vmem:[%s7 + $0x124] sm:$0xf]
    %v1321 = vld [vmem:[%s7 + $0x128] sm:$0xf]
    %v1322 = vld [vmem:[%s7 + $0x12c] sm:$0xf]
    %v1323 = vld [vmem:[%s7 + $0x130] sm:$0xf]
    %v1324 = vld [vmem:[%s7 + $0x134] sm:$0xf]
    %v1325 = vld [vmem:[%s7 + $0x138] sm:$0xf]
    %v1326 = vld [vmem:[%s7 + $0x13c] sm:$0xf]
    %v1327 = vld [vmem:[%s7 + $0x140] sm:$0xf]
    %v1328 = vld [vmem:[%s7 + $0x144] sm:$0xf]
    %v1329 = vld [vmem:[%s7 + $0x148] sm:$0xf]
    %v1330 = vld [vmem:[%s7 + $0x14c] sm:$0xf]
    %v1331 = vld [vmem:[%s7 + $0x150] sm:$0xf]
    %v1332 = vld [vmem:[%s7 + $0x154] sm:$0xf]
    %v1333 = vld [vmem:[%s7 + $0x158] sm:$0xf]
    %v1334 = vld [vmem:[%s7 + $0x15c] sm:$0xf]
    %v1335 = vld [vmem:[%s7 + $0x160] sm:$0xf]
    %v1336 = vld [vmem:[%s7 + $0x164] sm:$0xf]
    %v1337 = vld [vmem:[%s7 + $0x168] sm:$0xf]
    %v1338 = vld [vmem:[%s7 + $0x16c] sm:$0xf]
    %v1339 = vld [vmem:[%s7 + $0x170] sm:$0xf]
    %v1340 = vld [vmem:[%s7 + $0x174] sm:$0xf]
    %v1341 = vld [vmem:[%s7 + $0x178] sm:$0xf]
    %v1342 = vld [vmem:[%s7 + $0x17c] sm:$0xf]
    %v1343 = vld [vmem:[%s7 + $0x180] sm:$0xf]
    %v1344 = vld [vmem:[%s7 + $0x184] sm:$0xf]
    %v1345 = vld [vmem:[%s7 + $0x188] sm:$0xf]
    %v1346 = vld [vmem:[%s7 + $0x18c] sm:$0xf]
    %v1347 = vld [vmem:[%s7 + $0x190] sm:$0xf]
    %v1348 = vld [vmem:[%s7 + $0x194] sm:$0xf]
    %v1349 = vld [vmem:[%s7 + $0x198] sm:$0xf]
    %v1350 = vld [vmem:[%s7 + $0x19c] sm:$0xf]
    %v1351 = vld [vmem:[%s7 + $0x1a0] sm:$0xf]
    %v1352 = vld [vmem:[%s7 + $0x1a4] sm:$0xf]
    %v1353 = vld [vmem:[%s7 + $0x1a8] sm:$0xf]
    %v1354 = vld [vmem:[%s7 + $0x1ac] sm:$0xf]
    %v1355 = vld [vmem:[%s7 + $0x1b0] sm:$0xf]
    %v1356 = vld [vmem:[%s7 + $0x1b4] sm:$0xf]
    %v1357 = vld [vmem:[%s7 + $0x1b8] sm:$0xf]
    %v1358 = vld [vmem:[%s7 + $0x1bc] sm:$0xf]
    %v1359 = vld [vmem:[%s7 + $0x1c0] sm:$0xf]
    %v1360 = vld [vmem:[%s7 + $0x1c4] sm:$0xf]
    %v1361 = vld [vmem:[%s7 + $0x1c8] sm:$0xf]
    %v1362 = vld [vmem:[%s7 + $0x1cc] sm:$0xf]
    %v1363 = vld [vmem:[%s7 + $0x1d0] sm:$0xf]
    %v1364 = vld [vmem:[%s7 + $0x1d4] sm:$0xf]
    %v1365 = vld [vmem:[%s7 + $0x1d8] sm:$0xf]
    %v1366 = vld [vmem:[%s7 + $0x1dc] sm:$0xf]
    %v1367 = vld [vmem:[%s7 + $0x1e0] sm:$0xf]
    %v1368 = vld [vmem:[%s7 + $0x1e4] sm:$0xf]
    %v1369 = vld [vmem:[%s7 + $0x1e8] sm:$0xf]
    %v1370 = vld [vmem:[%s7 + $0x1ec] sm:$0xf]
    %v1371 = vld [vmem:[%s7 + $0x1f0] sm:$0xf]
    %v1372 = vld [vmem:[%s7 + $0x1f4] sm:$0xf]
    %v1373 = vld [vmem:[%s7 + $0x1f8] sm:$0xf]
    %v1374 = vld [vmem:[%s7 + $0x1fc] sm:$0xf]
    %v1375 = vld [vmem:[%s7 + $0x200] sm:$0xf]
    %v1376 = vld [vmem:[%s7 + $0x204] sm:$0xf]
    %v1377 = vld [vmem:[%s7 + $0x208] sm:$0xf]
    %v1378 = vld [vmem:[%s7 + $0x20c] sm:$0xf]
    %v1379 = vld [vmem:[%s7 + $0x210] sm:$0xf]
    %v1380 = vld [vmem:[%s7 + $0x214] sm:$0xf]
    %v1381 = vld [vmem:[%s7 + $0x218] sm:$0xf]
    %v1382 = vld [vmem:[%s7 + $0x21c] sm:$0xf]
    %v1383 = vld [vmem:[%s7 + $0x220] sm:$0xf]
    %v1384 = vld [vmem:[%s7 + $0x224] sm:$0xf]
    %v1385 = vld [vmem:[%s7 + $0x228] sm:$0xf]
    %v1386 = vld [vmem:[%s7 + $0x22c] sm:$0xf]
    %v1387 = vld [vmem:[%s7 + $0x230] sm:$0xf]
    %v1388 = vld [vmem:[%s7 + $0x234] sm:$0xf]
    %v1389 = vld [vmem:[%s7 + $0x238] sm:$0xf]
    %v1390 = vld [vmem:[%s7 + $0x23c] sm:$0xf]
    %v1391 = vld [vmem:[%s7 + $0x240] sm:$0xf]
    %v1392 = vld [vmem:[%s7 + $0x244] sm:$0xf]
    %v1393 = vld [vmem:[%s7 + $0x248] sm:$0xf]
    %v1394 = vld [vmem:[%s7 + $0x24c] sm:$0xf]
    %v1395 = vld [vmem:[%s7 + $0x250] sm:$0xf]
    %v1396 = vld [vmem:[%s7 + $0x254] sm:$0xf]
    %v1397 = vld [vmem:[%s7 + $0x258] sm:$0xf]
    %v1398 = vld [vmem:[%s7 + $0x25c] sm:$0xf]
    %v1399 = vld [vmem:[%s7 + $0x260] sm:$0xf]
    %v1400 = vld [vmem:[%s7 + $0x264] sm:$0xf]
    %v1401 = vld [vmem:[%s7 + $0x268] sm:$0xf]
    %v1402 = vld [vmem:[%s7 + $0x26c] sm:$0xf]
    %v1403 = vld [vmem:[%s7 + $0x270] sm:$0xf]
    %v1404 = vld [vmem:[%s7 + $0x274] sm:$0xf]
    %v1405 = vld [vmem:[%s7 + $0x278] sm:$0xf]
    %v1406 = vld [vmem:[%s7 + $0x27c] sm:$0xf]
    %v1407 = vld [vmem:[%s7 + $0x280] sm:$0xf]
    %v1408 = vld [vmem:[%s7 + $0x284] sm:$0xf]
    %v1409 = vld [vmem:[%s7 + $0x288] sm:$0xf]
    %v1410 = vld [vmem:[%s7 + $0x28c] sm:$0xf]
    %v1411 = vld [vmem:[%s7 + $0x290] sm:$0xf]
    %v1412 = vld [vmem:[%s7 + $0x294] sm:$0xf]
    %v1413 = vld [vmem:[%s7 + $0x298] sm:$0xf]
    %v1414 = vld [vmem:[%s7 + $0x29c] sm:$0xf]
    %v1415 = vld [vmem:[%s7 + $0x2a0] sm:$0xf]
    %v1416 = vld [vmem:[%s7 + $0x2a4] sm:$0xf]
    %v1417 = vld [vmem:[%s7 + $0x2a8] sm:$0xf]
    %v1418 = vld [vmem:[%s7 + $0x2ac] sm:$0xf]
    %v1419 = vld [vmem:[%s7 + $0x2b0] sm:$0xf]
    %v1420 = vld [vmem:[%s7 + $0x2b4] sm:$0xf]
    %v1421 = vld [vmem:[%s7 + $0x2b8] sm:$0xf]
    %v1422 = vld [vmem:[%s7 + $0x2bc] sm:$0xf]
    %v1423 = vld [vmem:[%s7 + $0x2c0] sm:$0xf]
    %v1424 = vld [vmem:[%s7 + $0x2c4] sm:$0xf]
    %v1425 = vld [vmem:[%s7 + $0x2c8] sm:$0xf]
    %v1426 = vld [vmem:[%s7 + $0x2cc] sm:$0xf]
    %v1427 = vld [vmem:[%s7 + $0x2d0] sm:$0xf]
    %v1428 = vld [vmem:[%s7 + $0x2d4] sm:$0xf]
    %v1429 = vld [vmem:[%s7 + $0x2d8] sm:$0xf]
    %v1430 = vld [vmem:[%s7 + $0x2dc] sm:$0xf]
    %v1431 = vld [vmem:[%s7 + $0x2e0] sm:$0xf]
    %v1432 = vld [vmem:[%s7 + $0x2e4] sm:$0xf]
    %v1433 = vld [vmem:[%s7 + $0x2e8] sm:$0xf]
    %v1434 = vld [vmem:[%s7 + $0x2ec] sm:$0xf]
    %v1435 = vld [vmem:[%s7 + $0x2f0] sm:$0xf]
    %v1436 = vld [vmem:[%s7 + $0x2f4] sm:$0xf]
    %v1437 = vld [vmem:[%s7 + $0x2f8] sm:$0xf]
    %v1438 = vld [vmem:[%s7 + $0x2fc] sm:$0xf]
    %v1439 = vld [vmem:[%s7 + $0x300] sm:$0xf]
    %v1440 = vld [vmem:[%s7 + $0x304] sm:$0xf]
    %v1441 = vld [vmem:[%s7 + $0x308] sm:$0xf]
    %v1442 = vld [vmem:[%s7 + $0x30c] sm:$0xf]
    %v1443 = vld [vmem:[%s7 + $0x310] sm:$0xf]
    %v1444 = vld [vmem:[%s7 + $0x314] sm:$0xf]
    %v1445 = vld [vmem:[%s7 + $0x318] sm:$0xf]
    %v1446 = vld [vmem:[%s7 + $0x31c] sm:$0xf]
    %v1447 = vld [vmem:[%s7 + $0x320] sm:$0xf]
    %v1448 = vld [vmem:[%s7 + $0x324] sm:$0xf]
    %v1449 = vld [vmem:[%s7 + $0x328] sm:$0xf]
    %v1450 = vld [vmem:[%s7 + $0x32c] sm:$0xf]
    %v1451 = vld [vmem:[%s7 + $0x330] sm:$0xf]
    %v1452 = vld [vmem:[%s7 + $0x334] sm:$0xf]
    %v1453 = vld [vmem:[%s7 + $0x338] sm:$0xf]
    %v1454 = vld [vmem:[%s7 + $0x33c] sm:$0xf]
    %v1455 = vld [vmem:[%s7 + $0x340] sm:$0xf]
    %v1456 = vld [vmem:[%s7 + $0x344] sm:$0xf]
    %v1457 = vld [vmem:[%s7 + $0x348] sm:$0xf]
    %v1458 = vld [vmem:[%s7 + $0x34c] sm:$0xf]
    %v1459 = vld [vmem:[%s7 + $0x350] sm:$0xf]
    %v1460 = vld [vmem:[%s7 + $0x354] sm:$0xf]
    %v1461 = vld [vmem:[%s7 + $0x358] sm:$0xf]
    %v1462 = vld [vmem:[%s7 + $0x35c] sm:$0xf]
    %v1463 = vld [vmem:[%s7 + $0x360] sm:$0xf]
    %v1464 = vld [vmem:[%s7 + $0x364] sm:$0xf]
    %v1465 = vld [vmem:[%s7 + $0x368] sm:$0xf]
    %v1466 = vld [vmem:[%s7 + $0x36c] sm:$0xf]
    %v1467 = vld [vmem:[%s7 + $0x370] sm:$0xf]
    %v1468 = vld [vmem:[%s7 + $0x374] sm:$0xf]
    %v1469 = vld [vmem:[%s7 + $0x378] sm:$0xf]
    %v1470 = vld [vmem:[%s7 + $0x37c] sm:$0xf]
    %v1471 = vld [vmem:[%s7 + $0x380] sm:$0xf]
    %v1472 = vld [vmem:[%s7 + $0x384] sm:$0xf]
    %v1473 = vld [vmem:[%s7 + $0x388] sm:$0xf]
    %v1474 = vld [vmem:[%s7 + $0x38c] sm:$0xf]
    %v1475 = vld [vmem:[%s7 + $0x390] sm:$0xf]
    %v1476 = vld [vmem:[%s7 + $0x394] sm:$0xf]
    %v1477 = vld [vmem:[%s7 + $0x398] sm:$0xf]
    %v1478 = vld [vmem:[%s7 + $0x39c] sm:$0xf]
    %v1479 = vld [vmem:[%s7 + $0x3a0] sm:$0xf]
    %v1480 = vld [vmem:[%s7 + $0x3a4] sm:$0xf]
    %v1481 = vld [vmem:[%s7 + $0x3a8] sm:$0xf]
    %v1482 = vld [vmem:[%s7 + $0x3ac] sm:$0xf]
    %v1483 = vld [vmem:[%s7 + $0x3b0] sm:$0xf]
    %v1484 = vld [vmem:[%s7 + $0x3b4] sm:$0xf]
    %v1485 = vld [vmem:[%s7 + $0x3b8] sm:$0xf]
    %v1486 = vld [vmem:[%s7 + $0x3bc] sm:$0xf]
    %v1487 = vld [vmem:[%s7 + $0x3c0] sm:$0xf]
    %v1488 = vld [vmem:[%s7 + $0x3c4] sm:$0xf]
    %v1489 = vld [vmem:[%s7 + $0x3c8] sm:$0xf]
    %v1490 = vld [vmem:[%s7 + $0x3cc] sm:$0xf]
    %v1491 = vld [vmem:[%s7 + $0x3d0] sm:$0xf]
    %v1492 = vld [vmem:[%s7 + $0x3d4] sm:$0xf]
    %v1493 = vld [vmem:[%s7 + $0x3d8] sm:$0xf]
    %v1494 = vld [vmem:[%s7 + $0x3dc] sm:$0xf]
    %v1495 = vld [vmem:[%s7 + $0x3e0] sm:$0xf]
    %v1496 = vld [vmem:[%s7 + $0x3e4] sm:$0xf]
    %v1497 = vld [vmem:[%s7 + $0x3e8] sm:$0xf]
    %v1498 = vld [vmem:[%s7 + $0x3ec] sm:$0xf]
    %v1499 = vld [vmem:[%s7 + $0x3f0] sm:$0xf]
    %v1500 = vld [vmem:[%s7 + $0x3f4] sm:$0xf]
    %v1501 = vld [vmem:[%s7 + $0x3f8] sm:$0xf]
    %v1502 = vld [vmem:[%s7 + $0x3fc] sm:$0xf]
    %v1503 = vld [vmem:[%s2 + $0x5] sm:$0x1]
    %v1504 = vperm.slane %v1503, 0
    %v1761 = vunpack.c.l.b16 %v1247
    %v1762 = vunpack.c.l.b16 %v1248
    %v1763 = vunpack.c.l.b16 %v1249
    %v1764 = vunpack.c.l.b16 %v1250
    %v1765 = vunpack.c.l.b16 %v1251
    %v1766 = vunpack.c.l.b16 %v1252
    %v1767 = vunpack.c.l.b16 %v1253
    %v1768 = vunpack.c.l.b16 %v1254
    %v1769 = vunpack.c.l.b16 %v1255
    %v1770 = vunpack.c.l.b16 %v1256
    %v1771 = vunpack.c.l.b16 %v1257
    %v1772 = vunpack.c.l.b16 %v1258
    %v1773 = vunpack.c.l.b16 %v1259
    %v1774 = vunpack.c.l.b16 %v1260
    %v1775 = vunpack.c.l.b16 %v1261
    %v1776 = vunpack.c.l.b16 %v1262
    %v1777 = vunpack.c.l.b16 %v1263
    %v1778 = vunpack.c.l.b16 %v1264
    %v1779 = vunpack.c.l.b16 %v1265
    %v1780 = vunpack.c.l.b16 %v1266
    %v1781 = vunpack.c.l.b16 %v1267
    %v1782 = vunpack.c.l.b16 %v1268
    %v1783 = vunpack.c.l.b16 %v1269
    %v1784 = vunpack.c.l.b16 %v1270
    %v1785 = vunpack.c.l.b16 %v1271
    %v1786 = vunpack.c.l.b16 %v1272
    %v1787 = vunpack.c.l.b16 %v1273
    %v1788 = vunpack.c.l.b16 %v1274
    %v1789 = vunpack.c.l.b16 %v1275
    %v1790 = vunpack.c.l.b16 %v1276
    %v1791 = vunpack.c.l.b16 %v1277
    %v1792 = vunpack.c.l.b16 %v1278
    %v1793 = vunpack.c.l.b16 %v1279
    %v1794 = vunpack.c.l.b16 %v1280
    %v1795 = vunpack.c.l.b16 %v1281
    %v1796 = vunpack.c.l.b16 %v1282
    %v1797 = vunpack.c.l.b16 %v1283
    %v1798 = vunpack.c.l.b16 %v1284
    %v1799 = vunpack.c.l.b16 %v1285
    %v1800 = vunpack.c.l.b16 %v1286
    %v1801 = vunpack.c.l.b16 %v1287
    %v1802 = vunpack.c.l.b16 %v1288
    %v1803 = vunpack.c.l.b16 %v1289
    %v1804 = vunpack.c.l.b16 %v1290
    %v1805 = vunpack.c.l.b16 %v1291
    %v1806 = vunpack.c.l.b16 %v1292
    %v1807 = vunpack.c.l.b16 %v1293
    %v1808 = vunpack.c.l.b16 %v1294
    %v1809 = vunpack.c.l.b16 %v1295
    %v1810 = vunpack.c.l.b16 %v1296
    %v1811 = vunpack.c.l.b16 %v1297
    %v1812 = vunpack.c.l.b16 %v1298
    %v1813 = vunpack.c.l.b16 %v1299
    %v1814 = vunpack.c.l.b16 %v1300
    %v1815 = vunpack.c.l.b16 %v1301
    %v1816 = vunpack.c.l.b16 %v1302
    %v1817 = vunpack.c.l.b16 %v1303
    %v1818 = vunpack.c.l.b16 %v1304
    %v1819 = vunpack.c.l.b16 %v1305
    %v1820 = vunpack.c.l.b16 %v1306
    %v1821 = vunpack.c.l.b16 %v1307
    %v1822 = vunpack.c.l.b16 %v1308
    %v1823 = vunpack.c.l.b16 %v1309
    %v1824 = vunpack.c.l.b16 %v1310
    %v1825 = vunpack.c.l.b16 %v1311
    %v1826 = vunpack.c.l.b16 %v1312
    %v1827 = vunpack.c.l.b16 %v1313
    %v1828 = vunpack.c.l.b16 %v1314
    %v1829 = vunpack.c.l.b16 %v1315
    %v1830 = vunpack.c.l.b16 %v1316
    %v1831 = vunpack.c.l.b16 %v1317
    %v1832 = vunpack.c.l.b16 %v1318
    %v1833 = vunpack.c.l.b16 %v1319
    %v1834 = vunpack.c.l.b16 %v1320
    %v1835 = vunpack.c.l.b16 %v1321
    %v1836 = vunpack.c.l.b16 %v1322
    %v1837 = vunpack.c.l.b16 %v1323
    %v1838 = vunpack.c.l.b16 %v1324
    %v1839 = vunpack.c.l.b16 %v1325
    %v1840 = vunpack.c.l.b16 %v1326
    %v1841 = vunpack.c.l.b16 %v1327
    %v1842 = vunpack.c.l.b16 %v1328
    %v1843 = vunpack.c.l.b16 %v1329
    %v1844 = vunpack.c.l.b16 %v1330
    %v1845 = vunpack.c.l.b16 %v1331
    %v1846 = vunpack.c.l.b16 %v1332
    %v1847 = vunpack.c.l.b16 %v1333
    %v1848 = vunpack.c.l.b16 %v1334
    %v1849 = vunpack.c.l.b16 %v1335
    %v1850 = vunpack.c.l.b16 %v1336
    %v1851 = vunpack.c.l.b16 %v1337
    %v1852 = vunpack.c.l.b16 %v1338
    %v1853 = vunpack.c.l.b16 %v1339
    %v1854 = vunpack.c.l.b16 %v1340
    %v1855 = vunpack.c.l.b16 %v1341
    %v1856 = vunpack.c.l.b16 %v1342
    %v1857 = vunpack.c.l.b16 %v1343
    %v1858 = vunpack.c.l.b16 %v1344
    %v1859 = vunpack.c.l.b16 %v1345
    %v1860 = vunpack.c.l.b16 %v1346
    %v1861 = vunpack.c.l.b16 %v1347
    %v1862 = vunpack.c.l.b16 %v1348
    %v1863 = vunpack.c.l.b16 %v1349
    %v1864 = vunpack.c.l.b16 %v1350
    %v1865 = vunpack.c.l.b16 %v1351
    %v1866 = vunpack.c.l.b16 %v1352
    %v1867 = vunpack.c.l.b16 %v1353
    %v1868 = vunpack.c.l.b16 %v1354
    %v1869 = vunpack.c.l.b16 %v1355
    %v1870 = vunpack.c.l.b16 %v1356
    %v1871 = vunpack.c.l.b16 %v1357
    %v1872 = vunpack.c.l.b16 %v1358
    %v1873 = vunpack.c.l.b16 %v1359
    %v1874 = vunpack.c.l.b16 %v1360
    %v1875 = vunpack.c.l.b16 %v1361
    %v1876 = vunpack.c.l.b16 %v1362
    %v1877 = vunpack.c.l.b16 %v1363
    %v1878 = vunpack.c.l.b16 %v1364
    %v1879 = vunpack.c.l.b16 %v1365
    %v1880 = vunpack.c.l.b16 %v1366
    %v1881 = vunpack.c.l.b16 %v1367
    %v1882 = vunpack.c.l.b16 %v1368
    %v1883 = vunpack.c.l.b16 %v1369
    %v1884 = vunpack.c.l.b16 %v1370
    %v1885 = vunpack.c.l.b16 %v1371
    %v1886 = vunpack.c.l.b16 %v1372
    %v1887 = vunpack.c.l.b16 %v1373
    %v1888 = vunpack.c.l.b16 %v1374
    %v1889 = vunpack.c.l.b16 %v1375
    %v1890 = vunpack.c.l.b16 %v1376
    %v1891 = vunpack.c.l.b16 %v1377
    %v1892 = vunpack.c.l.b16 %v1378
    %v1893 = vunpack.c.l.b16 %v1379
    %v1894 = vunpack.c.l.b16 %v1380
    %v1895 = vunpack.c.l.b16 %v1381
    %v1896 = vunpack.c.l.b16 %v1382
    %v1897 = vunpack.c.l.b16 %v1383
    %v1898 = vunpack.c.l.b16 %v1384
    %v1899 = vunpack.c.l.b16 %v1385
    %v1900 = vunpack.c.l.b16 %v1386
    %v1901 = vunpack.c.l.b16 %v1387
    %v1902 = vunpack.c.l.b16 %v1388
    %v1903 = vunpack.c.l.b16 %v1389
    %v1904 = vunpack.c.l.b16 %v1390
    %v1905 = vunpack.c.l.b16 %v1391
    %v1906 = vunpack.c.l.b16 %v1392
    %v1907 = vunpack.c.l.b16 %v1393
    %v1908 = vunpack.c.l.b16 %v1394
    %v1909 = vunpack.c.l.b16 %v1395
    %v1910 = vunpack.c.l.b16 %v1396
    %v1911 = vunpack.c.l.b16 %v1397
    %v1912 = vunpack.c.l.b16 %v1398
    %v1913 = vunpack.c.l.b16 %v1399
    %v1914 = vunpack.c.l.b16 %v1400
    %v1915 = vunpack.c.l.b16 %v1401
    %v1916 = vunpack.c.l.b16 %v1402
    %v1917 = vunpack.c.l.b16 %v1403
    %v1918 = vunpack.c.l.b16 %v1404
    %v1919 = vunpack.c.l.b16 %v1405
    %v1920 = vunpack.c.l.b16 %v1406
    %v1921 = vunpack.c.l.b16 %v1407
    %v1922 = vunpack.c.l.b16 %v1408
    %v1923 = vunpack.c.l.b16 %v1409
    %v1924 = vunpack.c.l.b16 %v1410
    %v1925 = vunpack.c.l.b16 %v1411
    %v1926 = vunpack.c.l.b16 %v1412
    %v1927 = vunpack.c.l.b16 %v1413
    %v1928 = vunpack.c.l.b16 %v1414
    %v1929 = vunpack.c.l.b16 %v1415
    %v1930 = vunpack.c.l.b16 %v1416
    %v1931 = vunpack.c.l.b16 %v1417
    %v1932 = vunpack.c.l.b16 %v1418
    %v1933 = vunpack.c.l.b16 %v1419
    %v1934 = vunpack.c.l.b16 %v1420
    %v1935 = vunpack.c.l.b16 %v1421
    %v1936 = vunpack.c.l.b16 %v1422
    %v1937 = vunpack.c.l.b16 %v1423
    %v1938 = vunpack.c.l.b16 %v1424
    %v1939 = vunpack.c.l.b16 %v1425
    %v1940 = vunpack.c.l.b16 %v1426
    %v1941 = vunpack.c.l.b16 %v1427
    %v1942 = vunpack.c.l.b16 %v1428
    %v1943 = vunpack.c.l.b16 %v1429
    %v1944 = vunpack.c.l.b16 %v1430
    %v1945 = vunpack.c.l.b16 %v1431
    %v1946 = vunpack.c.l.b16 %v1432
    %v1947 = vunpack.c.l.b16 %v1433
    %v1948 = vunpack.c.l.b16 %v1434
    %v1949 = vunpack.c.l.b16 %v1435
    %v1950 = vunpack.c.l.b16 %v1436
    %v1951 = vunpack.c.l.b16 %v1437
    %v1952 = vunpack.c.l.b16 %v1438
    %v1953 = vunpack.c.l.b16 %v1439
    %v1954 = vunpack.c.l.b16 %v1440
    %v1955 = vunpack.c.l.b16 %v1441
    %v1956 = vunpack.c.l.b16 %v1442
    %v1957 = vunpack.c.l.b16 %v1443
    %v1958 = vunpack.c.l.b16 %v1444
    %v1959 = vunpack.c.l.b16 %v1445
    %v1960 = vunpack.c.l.b16 %v1446
    %v1961 = vunpack.c.l.b16 %v1447
    %v1962 = vunpack.c.l.b16 %v1448
    %v1963 = vunpack.c.l.b16 %v1449
    %v1964 = vunpack.c.l.b16 %v1450
    %v1965 = vunpack.c.l.b16 %v1451
    %v1966 = vunpack.c.l.b16 %v1452
    %v1967 = vunpack.c.l.b16 %v1453
    %v1968 = vunpack.c.l.b16 %v1454
    %v1969 = vunpack.c.l.b16 %v1455
    %v1970 = vunpack.c.l.b16 %v1456
    %v1971 = vunpack.c.l.b16 %v1457
    %v1972 = vunpack.c.l.b16 %v1458
    %v1973 = vunpack.c.l.b16 %v1459
    %v1974 = vunpack.c.l.b16 %v1460
    %v1975 = vunpack.c.l.b16 %v1461
    %v1976 = vunpack.c.l.b16 %v1462
    %v1977 = vunpack.c.l.b16 %v1463
    %v1978 = vunpack.c.l.b16 %v1464
    %v1979 = vunpack.c.l.b16 %v1465
    %v1980 = vunpack.c.l.b16 %v1466
    %v1981 = vunpack.c.l.b16 %v1467
    %v1982 = vunpack.c.l.b16 %v1468
    %v1983 = vunpack.c.l.b16 %v1469
    %v1984 = vunpack.c.l.b16 %v1470
    %v1985 = vunpack.c.l.b16 %v1471
    %v1986 = vunpack.c.l.b16 %v1472
    %v1987 = vunpack.c.l.b16 %v1473
    %v1988 = vunpack.c.l.b16 %v1474
    %v1989 = vunpack.c.l.b16 %v1475
    %v1990 = vunpack.c.l.b16 %v1476
    %v1991 = vunpack.c.l.b16 %v1477
    %v1992 = vunpack.c.l.b16 %v1478
    %v1993 = vunpack.c.l.b16 %v1479
    %v1994 = vunpack.c.l.b16 %v1480
    %v1995 = vunpack.c.l.b16 %v1481
    %v1996 = vunpack.c.l.b16 %v1482
    %v1997 = vunpack.c.l.b16 %v1483
    %v1998 = vunpack.c.l.b16 %v1484
    %v1999 = vunpack.c.l.b16 %v1485
    %v2000 = vunpack.c.l.b16 %v1486
    %v2001 = vunpack.c.l.b16 %v1487
    %v2002 = vunpack.c.l.b16 %v1488
    %v2003 = vunpack.c.l.b16 %v1489
    %v2004 = vunpack.c.l.b16 %v1490
    %v2005 = vunpack.c.l.b16 %v1491
    %v2006 = vunpack.c.l.b16 %v1492
    %v2007 = vunpack.c.l.b16 %v1493
    %v2008 = vunpack.c.l.b16 %v1494
    %v2009 = vunpack.c.l.b16 %v1495
    %v2010 = vunpack.c.l.b16 %v1496
    %v2011 = vunpack.c.l.b16 %v1497
    %v2012 = vunpack.c.l.b16 %v1498
    %v2013 = vunpack.c.l.b16 %v1499
    %v2014 = vunpack.c.l.b16 %v1500
    %v2015 = vunpack.c.l.b16 %v1501
    %v2016 = vunpack.c.l.b16 %v1502
    %v2017 = vpack.c.b16 %v1762, %v1761
    %v2018 = vpack.c.b16 %v1764, %v1763
    %v2019 = vpack.c.b16 %v1766, %v1765
    %v2020 = vpack.c.b16 %v1768, %v1767
    %v2021 = vpack.c.b16 %v1770, %v1769
    %v2022 = vpack.c.b16 %v1772, %v1771
    %v2023 = vpack.c.b16 %v1774, %v1773
    %v2024 = vpack.c.b16 %v1776, %v1775
    %v2025 = vpack.c.b16 %v1778, %v1777
    %v2026 = vpack.c.b16 %v1780, %v1779
    %v2027 = vpack.c.b16 %v1782, %v1781
    %v2028 = vpack.c.b16 %v1784, %v1783
    %v2029 = vpack.c.b16 %v1786, %v1785
    %v2030 = vpack.c.b16 %v1788, %v1787
    %v2031 = vpack.c.b16 %v1790, %v1789
    %v2032 = vpack.c.b16 %v1792, %v1791
    %v2033 = vpack.c.b16 %v1794, %v1793
    %v2034 = vpack.c.b16 %v1796, %v1795
    %v2035 = vpack.c.b16 %v1798, %v1797
    %v2036 = vpack.c.b16 %v1800, %v1799
    %v2037 = vpack.c.b16 %v1802, %v1801
    %v2038 = vpack.c.b16 %v1804, %v1803
    %v2039 = vpack.c.b16 %v1806, %v1805
    %v2040 = vpack.c.b16 %v1808, %v1807
    %v2041 = vpack.c.b16 %v1810, %v1809
    %v2042 = vpack.c.b16 %v1812, %v1811
    %v2043 = vpack.c.b16 %v1814, %v1813
    %v2044 = vpack.c.b16 %v1816, %v1815
    %v2045 = vpack.c.b16 %v1818, %v1817
    %v2046 = vpack.c.b16 %v1820, %v1819
    %v2047 = vpack.c.b16 %v1822, %v1821
    %v2048 = vpack.c.b16 %v1824, %v1823
    %v2049 = vpack.c.b16 %v1826, %v1825
    %v2050 = vpack.c.b16 %v1828, %v1827
    %v2051 = vpack.c.b16 %v1830, %v1829
    %v2052 = vpack.c.b16 %v1832, %v1831
    %v2053 = vpack.c.b16 %v1834, %v1833
    %v2054 = vpack.c.b16 %v1836, %v1835
    %v2055 = vpack.c.b16 %v1838, %v1837
    %v2056 = vpack.c.b16 %v1840, %v1839
    %v2057 = vpack.c.b16 %v1842, %v1841
    %v2058 = vpack.c.b16 %v1844, %v1843
    %v2059 = vpack.c.b16 %v1846, %v1845
    %v2060 = vpack.c.b16 %v1848, %v1847
    %v2061 = vpack.c.b16 %v1850, %v1849
    %v2062 = vpack.c.b16 %v1852, %v1851
    %v2063 = vpack.c.b16 %v1854, %v1853
    %v2064 = vpack.c.b16 %v1856, %v1855
    %v2065 = vpack.c.b16 %v1858, %v1857
    %v2066 = vpack.c.b16 %v1860, %v1859
    %v2067 = vpack.c.b16 %v1862, %v1861
    %v2068 = vpack.c.b16 %v1864, %v1863
    %v2069 = vpack.c.b16 %v1866, %v1865
    %v2070 = vpack.c.b16 %v1868, %v1867
    %v2071 = vpack.c.b16 %v1870, %v1869
    %v2072 = vpack.c.b16 %v1872, %v1871
    %v2073 = vpack.c.b16 %v1874, %v1873
    %v2074 = vpack.c.b16 %v1876, %v1875
    %v2075 = vpack.c.b16 %v1878, %v1877
    %v2076 = vpack.c.b16 %v1880, %v1879
    %v2077 = vpack.c.b16 %v1882, %v1881
    %v2078 = vpack.c.b16 %v1884, %v1883
    %v2079 = vpack.c.b16 %v1886, %v1885
    %v2080 = vpack.c.b16 %v1888, %v1887
    %v2081 = vpack.c.b16 %v1890, %v1889
    %v2082 = vpack.c.b16 %v1892, %v1891
    %v2083 = vpack.c.b16 %v1894, %v1893
    %v2084 = vpack.c.b16 %v1896, %v1895
    %v2085 = vpack.c.b16 %v1898, %v1897
    %v2086 = vpack.c.b16 %v1900, %v1899
    %v2087 = vpack.c.b16 %v1902, %v1901
    %v2088 = vpack.c.b16 %v1904, %v1903
    %v2089 = vpack.c.b16 %v1906, %v1905
    %v2090 = vpack.c.b16 %v1908, %v1907
    %v2091 = vpack.c.b16 %v1910, %v1909
    %v2092 = vpack.c.b16 %v1912, %v1911
    %v2093 = vpack.c.b16 %v1914, %v1913
    %v2094 = vpack.c.b16 %v1916, %v1915
    %v2095 = vpack.c.b16 %v1918, %v1917
    %v2096 = vpack.c.b16 %v1920, %v1919
    %v2097 = vpack.c.b16 %v1922, %v1921
    %v2098 = vpack.c.b16 %v1924, %v1923
    %v2099 = vpack.c.b16 %v1926, %v1925
    %v2100 = vpack.c.b16 %v1928, %v1927
    %v2101 = vpack.c.b16 %v1930, %v1929
    %v2102 = vpack.c.b16 %v1932, %v1931
    %v2103 = vpack.c.b16 %v1934, %v1933
    %v2104 = vpack.c.b16 %v1936, %v1935
    %v2105 = vpack.c.b16 %v1938, %v1937
    %v2106 = vpack.c.b16 %v1940, %v1939
    %v2107 = vpack.c.b16 %v1942, %v1941
    %v2108 = vpack.c.b16 %v1944, %v1943
    %v2109 = vpack.c.b16 %v1946, %v1945
    %v2110 = vpack.c.b16 %v1948, %v1947
    %v2111 = vpack.c.b16 %v1950, %v1949
    %v2112 = vpack.c.b16 %v1952, %v1951
    %v2113 = vpack.c.b16 %v1954, %v1953
    %v2114 = vpack.c.b16 %v1956, %v1955
    %v2115 = vpack.c.b16 %v1958, %v1957
    %v2116 = vpack.c.b16 %v1960, %v1959
    %v2117 = vpack.c.b16 %v1962, %v1961
    %v2118 = vpack.c.b16 %v1964, %v1963
    %v2119 = vpack.c.b16 %v1966, %v1965
    %v2120 = vpack.c.b16 %v1968, %v1967
    %v2121 = vpack.c.b16 %v1970, %v1969
    %v2122 = vpack.c.b16 %v1972, %v1971
    %v2123 = vpack.c.b16 %v1974, %v1973
    %v2124 = vpack.c.b16 %v1976, %v1975
    %v2125 = vpack.c.b16 %v1978, %v1977
    %v2126 = vpack.c.b16 %v1980, %v1979
    %v2127 = vpack.c.b16 %v1982, %v1981
    %v2128 = vpack.c.b16 %v1984, %v1983
    %v2129 = vpack.c.b16 %v1986, %v1985
    %v2130 = vpack.c.b16 %v1988, %v1987
    %v2131 = vpack.c.b16 %v1990, %v1989
    %v2132 = vpack.c.b16 %v1992, %v1991
    %v2133 = vpack.c.b16 %v1994, %v1993
    %v2134 = vpack.c.b16 %v1996, %v1995
    %v2135 = vpack.c.b16 %v1998, %v1997
    %v2136 = vpack.c.b16 %v2000, %v1999
    %v2137 = vpack.c.b16 %v2002, %v2001
    %v2138 = vpack.c.b16 %v2004, %v2003
    %v2139 = vpack.c.b16 %v2006, %v2005
    %v2140 = vpack.c.b16 %v2008, %v2007
    %v2141 = vpack.c.b16 %v2010, %v2009
    %v2142 = vpack.c.b16 %v2012, %v2011
    %v2143 = vpack.c.b16 %v2014, %v2013
    %v2144 = vpack.c.b16 %v2016, %v2015
    %2273 = vmatpush.bf16.msra.mxu0 %v2024
    %2274 = vmatpush.bf16.msra.mxu0 %v2023
    %2275 = vmatpush.bf16.msra.mxu0 %v2022
    %2276 = vmatpush.bf16.msra.mxu0 %v2021
    %2277 = vmatpush.bf16.msra.mxu0 %v2020
    %2278 = vmatpush.bf16.msra.mxu0 %v2019
    %2279 = vmatpush.bf16.msra.mxu0 %v2018
    %2280 = vmatpush.bf16.msra.mxu0 %v2017
    %2281 = vmatmul.bf16.gmra.mxu0 %v1231
    %v2282 = vpop.f32.mrf.mxu0
    %v2283 = vadd.f32 %v1504, %v2282
    %v2284 = vpop.f32.mrf.mxu0
    %v2285 = vadd.f32 %v1504, %v2284
    %2286 = vdwg.mxu0
    %2287 = vmatpush.bf16.msra.mxu0 %v2032
    %2288 = vmatpush.bf16.msra.mxu0 %v2031
    %2289 = vmatpush.bf16.msra.mxu0 %v2030
    %2290 = vmatpush.bf16.msra.mxu0 %v2029
    %2291 = vmatpush.bf16.msra.mxu0 %v2028
    %2292 = vmatpush.bf16.msra.mxu0 %v2027
    %2293 = vmatpush.bf16.msra.mxu0 %v2026
    %2294 = vmatpush.bf16.msra.mxu0 %v2025
    %2295 = vmatmul.bf16.gmra.mxu0 %v1232
    %v2296 = vpop.f32.mrf.mxu0
    %v2297 = vadd.f32 %v2283, %v2296
    %v2298 = vpop.f32.mrf.mxu0
    %v2299 = vadd.f32 %v2285, %v2298
    %2300 = vdwg.mxu0
    %2301 = vmatpush.bf16.msra.mxu0 %v2040
    %2302 = vmatpush.bf16.msra.mxu0 %v2039
    %2303 = vmatpush.bf16.msra.mxu0 %v2038
    %2304 = vmatpush.bf16.msra.mxu0 %v2037
    %2305 = vmatpush.bf16.msra.mxu0 %v2036
    %2306 = vmatpush.bf16.msra.mxu0 %v2035
    %2307 = vmatpush.bf16.msra.mxu0 %v2034
    %2308 = vmatpush.bf16.msra.mxu0 %v2033
    %2309 = vmatmul.bf16.gmra.mxu0 %v1233
    %v2310 = vpop.f32.mrf.mxu0
    %v2311 = vadd.f32 %v2297, %v2310
    %v2312 = vpop.f32.mrf.mxu0
    %v2313 = vadd.f32 %v2299, %v2312
    %2314 = vdwg.mxu0
    %2315 = vmatpush.bf16.msra.mxu0 %v2048
    %2316 = vmatpush.bf16.msra.mxu0 %v2047
    %2317 = vmatpush.bf16.msra.mxu0 %v2046
    %2318 = vmatpush.bf16.msra.mxu0 %v2045
    %2319 = vmatpush.bf16.msra.mxu0 %v2044
    %2320 = vmatpush.bf16.msra.mxu0 %v2043
    %2321 = vmatpush.bf16.msra.mxu0 %v2042
    %2322 = vmatpush.bf16.msra.mxu0 %v2041
    %2323 = vmatmul.bf16.gmra.mxu0 %v1234
    %v2324 = vpop.f32.mrf.mxu0
    %v2325 = vadd.f32 %v2311, %v2324
    %v2326 = vpop.f32.mrf.mxu0
    %v2327 = vadd.f32 %v2313, %v2326
    %2328 = vdwg.mxu0
    %2329 = vmatpush.bf16.msra.mxu0 %v2056
    %2330 = vmatpush.bf16.msra.mxu0 %v2055
    %2331 = vmatpush.bf16.msra.mxu0 %v2054
    %2332 = vmatpush.bf16.msra.mxu0 %v2053
    %2333 = vmatpush.bf16.msra.mxu0 %v2052
    %2334 = vmatpush.bf16.msra.mxu0 %v2051
    %2335 = vmatpush.bf16.msra.mxu0 %v2050
    %2336 = vmatpush.bf16.msra.mxu0 %v2049
    %2337 = vmatmul.bf16.gmra.mxu0 %v1235
    %v2338 = vpop.f32.mrf.mxu0
    %v2339 = vadd.f32 %v2325, %v2338
    %v2340 = vpop.f32.mrf.mxu0
    %v2341 = vadd.f32 %v2327, %v2340
    %2342 = vdwg.mxu0
    %2343 = vmatpush.bf16.msra.mxu0 %v2064
    %2344 = vmatpush.bf16.msra.mxu0 %v2063
    %2345 = vmatpush.bf16.msra.mxu0 %v2062
    %2346 = vmatpush.bf16.msra.mxu0 %v2061
    %2347 = vmatpush.bf16.msra.mxu0 %v2060
    %2348 = vmatpush.bf16.msra.mxu0 %v2059
    %2349 = vmatpush.bf16.msra.mxu0 %v2058
    %2350 = vmatpush.bf16.msra.mxu0 %v2057
    %2351 = vmatmul.bf16.gmra.mxu0 %v1236
    %v2352 = vpop.f32.mrf.mxu0
    %v2353 = vadd.f32 %v2339, %v2352
    %v2354 = vpop.f32.mrf.mxu0
    %v2355 = vadd.f32 %v2341, %v2354
    %2356 = vdwg.mxu0
    %2357 = vmatpush.bf16.msra.mxu0 %v2072
    %2358 = vmatpush.bf16.msra.mxu0 %v2071
    %2359 = vmatpush.bf16.msra.mxu0 %v2070
    %2360 = vmatpush.bf16.msra.mxu0 %v2069
    %2361 = vmatpush.bf16.msra.mxu0 %v2068
    %2362 = vmatpush.bf16.msra.mxu0 %v2067
    %2363 = vmatpush.bf16.msra.mxu0 %v2066
    %2364 = vmatpush.bf16.msra.mxu0 %v2065
    %2365 = vmatmul.bf16.gmra.mxu0 %v1237
    %v2366 = vpop.f32.mrf.mxu0
    %v2367 = vadd.f32 %v2353, %v2366
    %v2368 = vpop.f32.mrf.mxu0
    %v2369 = vadd.f32 %v2355, %v2368
    %2370 = vdwg.mxu0
    %2371 = vmatpush.bf16.msra.mxu0 %v2080
    %2372 = vmatpush.bf16.msra.mxu0 %v2079
    %2373 = vmatpush.bf16.msra.mxu0 %v2078
    %2374 = vmatpush.bf16.msra.mxu0 %v2077
    %2375 = vmatpush.bf16.msra.mxu0 %v2076
    %2376 = vmatpush.bf16.msra.mxu0 %v2075
    %2377 = vmatpush.bf16.msra.mxu0 %v2074
    %2378 = vmatpush.bf16.msra.mxu0 %v2073
    %2379 = vmatmul.bf16.gmra.mxu0 %v1238
    %v2380 = vpop.f32.mrf.mxu0
    %v2381 = vadd.f32 %v2367, %v2380
    %v2382 = vpop.f32.mrf.mxu0
    %v2383 = vadd.f32 %v2369, %v2382
    %2384 = vdwg.mxu0
    %2385 = vmatpush.bf16.msra.mxu0 %v2088
    %2386 = vmatpush.bf16.msra.mxu0 %v2087
    %2387 = vmatpush.bf16.msra.mxu0 %v2086
    %2388 = vmatpush.bf16.msra.mxu0 %v2085
    %2389 = vmatpush.bf16.msra.mxu0 %v2084
    %2390 = vmatpush.bf16.msra.mxu0 %v2083
    %2391 = vmatpush.bf16.msra.mxu0 %v2082
    %2392 = vmatpush.bf16.msra.mxu0 %v2081
    %2393 = vmatmul.bf16.gmra.mxu0 %v1239
    %v2394 = vpop.f32.mrf.mxu0
    %v2395 = vadd.f32 %v2381, %v2394
    %v2396 = vpop.f32.mrf.mxu0
    %v2397 = vadd.f32 %v2383, %v2396
    %2398 = vdwg.mxu0
    %2399 = vmatpush.bf16.msra.mxu0 %v2096
    %2400 = vmatpush.bf16.msra.mxu0 %v2095
    %2401 = vmatpush.bf16.msra.mxu0 %v2094
    %2402 = vmatpush.bf16.msra.mxu0 %v2093
    %2403 = vmatpush.bf16.msra.mxu0 %v2092
    %2404 = vmatpush.bf16.msra.mxu0 %v2091
    %2405 = vmatpush.bf16.msra.mxu0 %v2090
    %2406 = vmatpush.bf16.msra.mxu0 %v2089
    %2407 = vmatmul.bf16.gmra.mxu0 %v1240
    %v2408 = vpop.f32.mrf.mxu0
    %v2409 = vadd.f32 %v2395, %v2408
    %v2410 = vpop.f32.mrf.mxu0
    %v2411 = vadd.f32 %v2397, %v2410
    %2412 = vdwg.mxu0
    %2413 = vmatpush.bf16.msra.mxu0 %v2104
    %2414 = vmatpush.bf16.msra.mxu0 %v2103
    %2415 = vmatpush.bf16.msra.mxu0 %v2102
    %2416 = vmatpush.bf16.msra.mxu0 %v2101
    %2417 = vmatpush.bf16.msra.mxu0 %v2100
    %2418 = vmatpush.bf16.msra.mxu0 %v2099
    %2419 = vmatpush.bf16.msra.mxu0 %v2098
    %2420 = vmatpush.bf16.msra.mxu0 %v2097
    %2421 = vmatmul.bf16.gmra.mxu0 %v1241
    %v2422 = vpop.f32.mrf.mxu0
    %v2423 = vadd.f32 %v2409, %v2422
    %v2424 = vpop.f32.mrf.mxu0
    %v2425 = vadd.f32 %v2411, %v2424
    %2426 = vdwg.mxu0
    %2427 = vmatpush.bf16.msra.mxu0 %v2112
    %2428 = vmatpush.bf16.msra.mxu0 %v2111
    %2429 = vmatpush.bf16.msra.mxu0 %v2110
    %2430 = vmatpush.bf16.msra.mxu0 %v2109
    %2431 = vmatpush.bf16.msra.mxu0 %v2108
    %2432 = vmatpush.bf16.msra.mxu0 %v2107
    %2433 = vmatpush.bf16.msra.mxu0 %v2106
    %2434 = vmatpush.bf16.msra.mxu0 %v2105
    %2435 = vmatmul.bf16.gmra.mxu0 %v1242
    %v2436 = vpop.f32.mrf.mxu0
    %v2437 = vadd.f32 %v2423, %v2436
    %v2438 = vpop.f32.mrf.mxu0
    %v2439 = vadd.f32 %v2425, %v2438
    %2440 = vdwg.mxu0
    %2441 = vmatpush.bf16.msra.mxu0 %v2120
    %2442 = vmatpush.bf16.msra.mxu0 %v2119
    %2443 = vmatpush.bf16.msra.mxu0 %v2118
    %2444 = vmatpush.bf16.msra.mxu0 %v2117
    %2445 = vmatpush.bf16.msra.mxu0 %v2116
    %2446 = vmatpush.bf16.msra.mxu0 %v2115
    %2447 = vmatpush.bf16.msra.mxu0 %v2114
    %2448 = vmatpush.bf16.msra.mxu0 %v2113
    %2449 = vmatmul.bf16.gmra.mxu0 %v1243
    %v2450 = vpop.f32.mrf.mxu0
    %v2451 = vadd.f32 %v2437, %v2450
    %v2452 = vpop.f32.mrf.mxu0
    %v2453 = vadd.f32 %v2439, %v2452
    %2454 = vdwg.mxu0
    %2455 = vmatpush.bf16.msra.mxu0 %v2128
    %2456 = vmatpush.bf16.msra.mxu0 %v2127
    %2457 = vmatpush.bf16.msra.mxu0 %v2126
    %2458 = vmatpush.bf16.msra.mxu0 %v2125
    %2459 = vmatpush.bf16.msra.mxu0 %v2124
    %2460 = vmatpush.bf16.msra.mxu0 %v2123
    %2461 = vmatpush.bf16.msra.mxu0 %v2122
    %2462 = vmatpush.bf16.msra.mxu0 %v2121
    %2463 = vmatmul.bf16.gmra.mxu0 %v1244
    %v2464 = vpop.f32.mrf.mxu0
    %v2465 = vadd.f32 %v2451, %v2464
    %v2466 = vpop.f32.mrf.mxu0
    %v2467 = vadd.f32 %v2453, %v2466
    %2468 = vdwg.mxu0
    %2469 = vmatpush.bf16.msra.mxu0 %v2136
    %2470 = vmatpush.bf16.msra.mxu0 %v2135
    %2471 = vmatpush.bf16.msra.mxu0 %v2134
    %2472 = vmatpush.bf16.msra.mxu0 %v2133
    %2473 = vmatpush.bf16.msra.mxu0 %v2132
    %2474 = vmatpush.bf16.msra.mxu0 %v2131
    %2475 = vmatpush.bf16.msra.mxu0 %v2130
    %2476 = vmatpush.bf16.msra.mxu0 %v2129
    %2477 = vmatmul.bf16.gmra.mxu0 %v1245
    %v2478 = vpop.f32.mrf.mxu0
    %v2479 = vadd.f32 %v2465, %v2478
    %v2480 = vpop.f32.mrf.mxu0
    %v2481 = vadd.f32 %v2467, %v2480
    %2482 = vdwg.mxu0
    %2483 = vmatpush.bf16.msra.mxu0 %v2144
    %2484 = vmatpush.bf16.msra.mxu0 %v2143
    %2485 = vmatpush.bf16.msra.mxu0 %v2142
    %2486 = vmatpush.bf16.msra.mxu0 %v2141
    %2487 = vmatpush.bf16.msra.mxu0 %v2140
    %2488 = vmatpush.bf16.msra.mxu0 %v2139
    %2489 = vmatpush.bf16.msra.mxu0 %v2138
    %2490 = vmatpush.bf16.msra.mxu0 %v2137
    %2491 = vmatmul.bf16.gmra.mxu0 %v1246
    %v2492 = vpop.f32.mrf.mxu0
    %v2493 = vadd.f32 %v2479, %v2492
    %v2494 = vpop.f32.mrf.mxu0
    %v2495 = vadd.f32 %v2481, %v2494
    %2496 = vdwg.mxu0
    %v2497 = vadd.f32 %v656, %v2493
    %v2498 = vadd.f32 %v657, %v2495
    %v2499 = vld [vmem:[%s2 + $0x6] sm:$0x1]
    %v2500 = vld [vmem:[%s2 + $0x7] sm:$0x1]
    %v2501 = vsel %vm37, %v2497, 0.0
    %2502 = vadd.xlane.f32.xlu0 %v2501
    %v2503 = vpop.xlane.xlu0 %2502
    %v2504 = vsel %vm37, %v2498, 0.0
    %2505 = vadd.xlane.f32.xlu0 %v2504
    %v2506 = vpop.xlane.xlu0 %2505
    %v2507 = vmul.f32 %v2503, %v50
    %v2508 = vmul.f32 %v2506, %v50
    %v2509 = vsub.f32 %v2497, %v2507
    %v2510 = vsub.f32 %v2498, %v2508
    %v2511 = vmul.f32 %v2509, %v2509
    %v2512 = vmul.f32 %v2510, %v2510
    %v2513 = vsel %vm37, %v2511, 0.0
    %2514 = vadd.xlane.f32.xlu0 %v2513
    %v2515 = vpop.xlane.xlu0 %2514
    %v2516 = vsel %vm37, %v2512, 0.0
    %2517 = vadd.xlane.f32.xlu0 %v2516
    %v2518 = vpop.xlane.xlu0 %2517
    %v2519 = vmul.f32 %v2515, 0.032258064
    %v2520 = vmul.f32 %v2518, 0.032258064
    %v2521 = vperm.slane %v2499, 0
    %v2522 = vmul.f32 %v2521, %v2509
    %v2523 = vmul.f32 %v2521, %v2510
    %v2524 = vrsqrt.pop %v2519
    %v2525 = vmul.f32 %v2524, %v2519
    %v2526 = vmul.f32 %v2525, %v2524
    %v2527 = vmul.f32 0.5, %v2526
    %v2528 = vsub.f32 1.5, %v2527
    %v2529 = vmul.f32 %v2524, %v2528
    %v2530 = vmul.f32 %v2519, %v2529
    %vm2531 = vcmp.eq.f32.partialorder %v2519, inf
    %v2532 = vsel %vm2531, %v2519, %v2530
    %vm2533 = vcmp.eq.f32.partialorder %v2519, 0.0
    %v2534 = vand.u32 %v2519, 2147483648
    %v2535 = vsel %vm2533, %v2534, %v2532
    %v2536 = vrsqrt.pop %v2520
    %v2537 = vmul.f32 %v2536, %v2520
    %v2538 = vmul.f32 %v2537, %v2536
    %v2539 = vmul.f32 0.5, %v2538
    %v2540 = vsub.f32 1.5, %v2539
    %v2541 = vmul.f32 %v2536, %v2540
    %v2542 = vmul.f32 %v2520, %v2541
    %vm2543 = vcmp.eq.f32.partialorder %v2520, inf
    %v2544 = vsel %vm2543, %v2520, %v2542
    %vm2545 = vcmp.eq.f32.partialorder %v2520, 0.0
    %v2546 = vand.u32 %v2520, 2147483648
    %v2547 = vsel %vm2545, %v2546, %v2544
    %v2548 = vadd.f32 %v2535, 1e-06
    %v2549 = vadd.f32 %v2547, 1e-06
    %v2550 = vrcp.pop %v2548
    %v2551 = vmul.f32 %v2548, %v2550
    %v2552 = vsub.f32 1.0, %v2551
    %v2553 = vmul.f32 %v2550, %v2552
    %v2554 = vadd.f32 %v2550, %v2553
    %vm2555 = vweird.f32 %v2548
    %vm2556 = vweird.f32 %v2550
    %vm2557 = vmor %vm2555, %vm2556
    %v2558 = vsel %vm2557, %v2550, %v2554
    %v2559 = vand.u32 2147483647, %v2548
    %vm2560 = vcmp.eq.f32.partialorder %v2559, 8.507059e+37
    %v2561 = vand.u32 %v2548, 2147483648
    %v2562 = vor.u32 1.1754944e-38, %v2561
    %v2563 = vsel %vm2560, %v2562, %v2558
    %v2564 = vmul.f32 %v2522, %v2563
    %v2565 = vrcp.pop %v2549
    %v2566 = vmul.f32 %v2549, %v2565
    %v2567 = vsub.f32 1.0, %v2566
    %v2568 = vmul.f32 %v2565, %v2567
    %v2569 = vadd.f32 %v2565, %v2568
    %vm2570 = vweird.f32 %v2549
    %vm2571 = vweird.f32 %v2565
    %vm2572 = vmor %vm2570, %vm2571
    %v2573 = vsel %vm2572, %v2565, %v2569
    %v2574 = vand.u32 2147483647, %v2549
    %vm2575 = vcmp.eq.f32.partialorder %v2574, 8.507059e+37
    %v2576 = vand.u32 %v2549, 2147483648
    %v2577 = vor.u32 1.1754944e-38, %v2576
    %v2578 = vsel %vm2575, %v2577, %v2573
    %v2579 = vmul.f32 %v2523, %v2578
    %v2580 = vperm.slane %v2500, 0
    %v2581 = vadd.f32 %v2564, %v2580
    %v2582 = vadd.f32 %v2579, %v2580
    %v2583 = vpack.c.bf16 %v2582, %v2581
    %2584 = vxpose.xlu0.b32.start [1/16] %v2581, 128
    %2585 = vxpose.xlu0.b32.cont [2/16] %v2582, 128
    %2586 = vxpose.xlu0.b32.cont [3/16] 0.0, 128
    %2587 = vxpose.xlu0.b32.cont [4/16] 0.0, 128
    %2588 = vxpose.xlu0.b32.cont [5/16] 0.0, 128
    %2589 = vxpose.xlu0.b32.cont [6/16] 0.0, 128
    %2590 = vxpose.xlu0.b32.cont [7/16] 0.0, 128
    %2591 = vxpose.xlu0.b32.cont [8/16] 0.0, 128
    %2592 = vxpose.xlu0.b32.cont [9/16] 0.0, 128
    %2593 = vxpose.xlu0.b32.cont [10/16] 0.0, 128
    %2594 = vxpose.xlu0.b32.cont [11/16] 0.0, 128
    %2595 = vxpose.xlu0.b32.cont [12/16] 0.0, 128
    %2596 = vxpose.xlu0.b32.cont [13/16] 0.0, 128
    %2597 = vxpose.xlu0.b32.cont [14/16] 0.0, 128
    %2598 = vxpose.xlu0.b32.cont [15/16] 0.0, 128
    %2599 = vxpose.xlu0.b32.end [16/16] 0.0, 128
    %v2600 = vpop.trf.xlu0
    %v2601 = vpop.trf.xlu0
    %v2602 = vpop.trf.xlu0
    %v2603 = vpop.trf.xlu0
    %v2604 = vpop.trf.xlu0
    %v2605 = vpop.trf.xlu0
    %v2606 = vpop.trf.xlu0
    %v2607 = vpop.trf.xlu0
    %v2608 = vpop.trf.xlu0
    %v2609 = vpop.trf.xlu0
    %v2610 = vpop.trf.xlu0
    %v2611 = vpop.trf.xlu0
    %v2612 = vpop.trf.xlu0
    %v2613 = vpop.trf.xlu0
    %v2614 = vpop.trf.xlu0
    %v2615 = vpop.trf.xlu0
    %v2616 = vpack.c.bf16 %v2601, %v2600
    %v2617 = vpack.c.bf16 %v2603, %v2602
    %s2618 = scalar_lea.vmem %s4, 64
    %v2619 = vld [vmem:[%s2618] sm:$0xf]
    %v2620 = vld [vmem:[%s2618 + $0x4] sm:$0xf]
    %v2621 = vld [vmem:[%s2618 + $0x8] sm:$0xf]
    %v2622 = vld [vmem:[%s2618 + $0xc] sm:$0xf]
    %v2627 = vunpack.c.l.b16 %v2619
    %v2628 = vunpack.c.l.b16 %v2620
    %v2629 = vunpack.c.l.b16 %v2621
    %v2630 = vunpack.c.l.b16 %v2622
    %v2631 = vpack.c.b16 %v2628, %v2627
    %v2632 = vpack.c.b16 %v2630, %v2629
    %v2636 = vsel %vm37, %v2583, 0
    %2638 = vmatpush.bf16.msra.mxu0 0
    %2639 = vmatpush.bf16.msra.mxu0 0
    %2640 = vmatpush.bf16.msra.mxu0 0
    %2641 = vmatpush.bf16.msra.mxu0 0
    %2642 = vmatpush.bf16.msra.mxu0 0
    %2643 = vmatpush.bf16.msra.mxu0 0
    %2644 = vmatpush.bf16.msra.mxu0 %v2632
    %2645 = vmatpush.bf16.msra.mxu0 %v2631
    %2646 = vmatmul.bf16.gmra.mxu0 %v2636
    %v2647 = vpop.f32.mrf.mxu0
    %v2648 = vadd.f32 0.0, %v2647
    %v2649 = vpop.f32.mrf.mxu0
    %v2650 = vadd.f32 0.0, %v2649
    %2651 = vdwg.mxu0
    %v2652 = vpack.c.bf16 %v2650, %v2648
    %v2654 = vsel %vm37, %v2652, 0
    %2656 = vmatpush.bf16.msra.mxu0 0
    %2657 = vmatpush.bf16.msra.mxu0 0
    %2658 = vmatpush.bf16.msra.mxu0 0
    %2659 = vmatpush.bf16.msra.mxu0 0
    %2660 = vmatpush.bf16.msra.mxu0 0
    %2661 = vmatpush.bf16.msra.mxu0 0
    %2662 = vmatpush.bf16.msra.mxu0 %v2617
    %2663 = vmatpush.bf16.msra.mxu0 %v2616
    %2664 = vmatmul.bf16.gmra.mxu0 %v2654
    %v2665 = vpop.f32.mrf.mxu0
    %v2666 = vadd.f32 %v33, %v2665
    %v2667 = vpop.f32.mrf.mxu0
    %v2668 = vadd.f32 %v34, %v2667
    %2669 = vdwg.mxu0
    %v2670 = vsel %vm213, %v2666, -inf
    %2671 = vmax.xlane.f32.xlu0 %v2670
    %v2672 = vpop.xlane.xlu0 %2671
    %v2673 = vsel %vm213, %v2668, -inf
    %2674 = vmax.xlane.f32.xlu0 %v2673
    %v2675 = vpop.xlane.xlu0 %2674
    %v2676 = vsub.f32 %v2666, %v2672
    %v2677 = vsub.f32 %v2668, %v2675
    %v2678 = vmul.f32 %v2676, 1.442695
    %v2679 = vpow.pop %v2678
    %v2680 = vmul.f32 %v2677, 1.442695
    %v2681 = vpow.pop %v2680
    %v2682 = vsel %vm213, %v2679, 0.0
    %2683 = vadd.xlane.f32.xlu0 %v2682
    %v2684 = vpop.xlane.xlu0 %2683
    %v2685 = vsel %vm213, %v2681, 0.0
    %2686 = vadd.xlane.f32.xlu0 %v2685
    %v2687 = vpop.xlane.xlu0 %2686
    %v2688 = vrcp.pop %v2684
    %v2689 = vrcp.pop %v2687
    %v2690 = vmul.f32 %v2679, %v2688
    %v2691 = vmul.f32 %v2681, %v2689
    %s2692 = scalar_lea.vmem %s5, 64
    %v2693 = vld [vmem:[%s2692] sm:$0xf]
    %v2694 = vld [vmem:[%s2692 + $0x4] sm:$0xf]
    %v2695 = vld [vmem:[%s2692 + $0x8] sm:$0xf]
    %v2696 = vld [vmem:[%s2692 + $0xc] sm:$0xf]
    %v2701 = vunpack.c.l.b16 %v2693
    %v2702 = vunpack.c.l.b16 %v2694
    %v2703 = vunpack.c.l.b16 %v2695
    %v2704 = vunpack.c.l.b16 %v2696
    %v2705 = vpack.c.b16 %v2702, %v2701
    %v2706 = vpack.c.b16 %v2704, %v2703
    %2709 = vmatpush.bf16.msra.mxu0 0
    %2710 = vmatpush.bf16.msra.mxu0 0
    %2711 = vmatpush.bf16.msra.mxu0 0
    %2712 = vmatpush.bf16.msra.mxu0 0
    %2713 = vmatpush.bf16.msra.mxu0 0
    %2714 = vmatpush.bf16.msra.mxu0 0
    %2715 = vmatpush.bf16.msra.mxu0 %v2706
    %2716 = vmatpush.bf16.msra.mxu0 %v2705
    %2717 = vmatmul.bf16.gmra.mxu0 %v2636
    %v2718 = vpop.f32.mrf.mxu0
    %v2719 = vadd.f32 0.0, %v2718
    %v2720 = vpop.f32.mrf.mxu0
    %v2721 = vadd.f32 0.0, %v2720
    %2722 = vdwg.mxu0
    %v2723 = vpack.c.bf16 %v2691, %v2690
    %v2724 = vpack.c.bf16 %v2721, %v2719
    %s2725 = scalar_lea.vmem %s4, 80
    %v2726 = vld [vmem:[%s2725] sm:$0xf]
    %v2727 = vld [vmem:[%s2725 + $0x4] sm:$0xf]
    %v2728 = vld [vmem:[%s2725 + $0x8] sm:$0xf]
    %v2729 = vld [vmem:[%s2725 + $0xc] sm:$0xf]
    %v2734 = vunpack.c.l.b16 %v2726
    %v2735 = vunpack.c.l.b16 %v2727
    %v2736 = vunpack.c.l.b16 %v2728
    %v2737 = vunpack.c.l.b16 %v2729
    %v2738 = vpack.c.b16 %v2735, %v2734
    %v2739 = vpack.c.b16 %v2737, %v2736
    %2742 = vmatpush.bf16.msra.mxu0 0
    %2743 = vmatpush.bf16.msra.mxu0 0
    %2744 = vmatpush.bf16.msra.mxu0 0
    %2745 = vmatpush.bf16.msra.mxu0 0
    %2746 = vmatpush.bf16.msra.mxu0 0
    %2747 = vmatpush.bf16.msra.mxu0 0
    %2748 = vmatpush.bf16.msra.mxu0 %v2739
    %2749 = vmatpush.bf16.msra.mxu0 %v2738
    %2750 = vmatmul.bf16.gmra.mxu0 %v2636
    %v2751 = vpop.f32.mrf.mxu0
    %v2752 = vadd.f32 0.0, %v2751
    %v2753 = vpop.f32.mrf.mxu0
    %v2754 = vadd.f32 0.0, %v2753
    %2755 = vdwg.mxu0
    %v2756 = vpack.c.bf16 %v2754, %v2752
    %v2758 = vsel %vm37, %v2756, 0
    %2760 = vmatpush.bf16.msra.mxu0 0
    %2761 = vmatpush.bf16.msra.mxu0 0
    %2762 = vmatpush.bf16.msra.mxu0 0
    %2763 = vmatpush.bf16.msra.mxu0 0
    %2764 = vmatpush.bf16.msra.mxu0 0
    %2765 = vmatpush.bf16.msra.mxu0 0
    %2766 = vmatpush.bf16.msra.mxu0 %v2617
    %2767 = vmatpush.bf16.msra.mxu0 %v2616
    %2768 = vmatmul.bf16.gmra.mxu0 %v2758
    %v2769 = vpop.f32.mrf.mxu0
    %v2770 = vadd.f32 %v33, %v2769
    %v2771 = vpop.f32.mrf.mxu0
    %v2772 = vadd.f32 %v34, %v2771
    %2773 = vdwg.mxu0
    %v2774 = vsel %vm213, %v2770, -inf
    %2775 = vmax.xlane.f32.xlu0 %v2774
    %v2776 = vpop.xlane.xlu0 %2775
    %v2777 = vsel %vm213, %v2772, -inf
    %2778 = vmax.xlane.f32.xlu0 %v2777
    %v2779 = vpop.xlane.xlu0 %2778
    %v2780 = vsub.f32 %v2770, %v2776
    %v2781 = vsub.f32 %v2772, %v2779
    %v2782 = vmul.f32 %v2780, 1.442695
    %v2783 = vpow.pop %v2782
    %v2784 = vmul.f32 %v2781, 1.442695
    %v2785 = vpow.pop %v2784
    %v2786 = vsel %vm213, %v2783, 0.0
    %2787 = vadd.xlane.f32.xlu0 %v2786
    %v2788 = vpop.xlane.xlu0 %2787
    %v2789 = vsel %vm213, %v2785, 0.0
    %2790 = vadd.xlane.f32.xlu0 %v2789
    %v2791 = vpop.xlane.xlu0 %2790
    %v2792 = vrcp.pop %v2788
    %v2793 = vrcp.pop %v2791
    %v2794 = vmul.f32 %v2783, %v2792
    %v2795 = vmul.f32 %v2785, %v2793
    %s2796 = scalar_lea.vmem %s5, 80
    %v2797 = vld [vmem:[%s2796] sm:$0xf]
    %v2798 = vld [vmem:[%s2796 + $0x4] sm:$0xf]
    %v2799 = vld [vmem:[%s2796 + $0x8] sm:$0xf]
    %v2800 = vld [vmem:[%s2796 + $0xc] sm:$0xf]
    %v2805 = vunpack.c.l.b16 %v2797
    %v2806 = vunpack.c.l.b16 %v2798
    %v2807 = vunpack.c.l.b16 %v2799
    %v2808 = vunpack.c.l.b16 %v2800
    %v2809 = vpack.c.b16 %v2806, %v2805
    %v2810 = vpack.c.b16 %v2808, %v2807
    %2813 = vmatpush.bf16.msra.mxu0 0
    %2814 = vmatpush.bf16.msra.mxu0 0
    %2815 = vmatpush.bf16.msra.mxu0 0
    %2816 = vmatpush.bf16.msra.mxu0 0
    %2817 = vmatpush.bf16.msra.mxu0 0
    %2818 = vmatpush.bf16.msra.mxu0 0
    %2819 = vmatpush.bf16.msra.mxu0 %v2810
    %2820 = vmatpush.bf16.msra.mxu0 %v2809
    %2821 = vmatmul.bf16.gmra.mxu0 %v2636
    %v2822 = vpop.f32.mrf.mxu0
    %v2823 = vadd.f32 0.0, %v2822
    %v2824 = vpop.f32.mrf.mxu0
    %v2825 = vadd.f32 0.0, %v2824
    %2826 = vdwg.mxu0
    %v2827 = vpack.c.bf16 %v2795, %v2794
    %v2828 = vpack.c.bf16 %v2825, %v2823
    %v2830 = vsel %vm213, %v2827, 0
    %2832 = vmatpush.bf16.msra.mxu0 0
    %2833 = vmatpush.bf16.msra.mxu0 0
    %2834 = vmatpush.bf16.msra.mxu0 0
    %2835 = vmatpush.bf16.msra.mxu0 0
    %2836 = vmatpush.bf16.msra.mxu0 0
    %2837 = vmatpush.bf16.msra.mxu0 0
    %2838 = vmatpush.bf16.msra.mxu0 0
    %2839 = vmatpush.bf16.msra.mxu0 %v2828
    %2840 = vmatmul.bf16.gmra.mxu0 %v2830
    %v2841 = vpop.f32.mrf.mxu0
    %v2842 = vadd.f32 0.0, %v2841
    %v2843 = vpop.f32.mrf.mxu0
    %v2844 = vadd.f32 0.0, %v2843
    %2845 = vdwg.mxu0
    %v2847 = vsel %vm213, %v2723, 0
    %2849 = vmatpush.bf16.msra.mxu0 0
    %2850 = vmatpush.bf16.msra.mxu0 0
    %2851 = vmatpush.bf16.msra.mxu0 0
    %2852 = vmatpush.bf16.msra.mxu0 0
    %2853 = vmatpush.bf16.msra.mxu0 0
    %2854 = vmatpush.bf16.msra.mxu0 0
    %2855 = vmatpush.bf16.msra.mxu0 0
    %2856 = vmatpush.bf16.msra.mxu0 %v2724
    %2857 = vmatmul.bf16.gmra.mxu0 %v2847
    %v2858 = vpop.f32.mrf.mxu0
    %v2859 = vadd.f32 %v2842, %v2858
    %v2860 = vpop.f32.mrf.mxu0
    %v2861 = vadd.f32 %v2844, %v2860
    %2862 = vdwg.mxu0
    %s2863 = scalar_lea.vmem %s4, 96
    %v2864 = vld [vmem:[%s2863] sm:$0xf]
    %v2865 = vld [vmem:[%s2863 + $0x4] sm:$0xf]
    %v2866 = vld [vmem:[%s2863 + $0x8] sm:$0xf]
    %v2867 = vld [vmem:[%s2863 + $0xc] sm:$0xf]
    %v2872 = vunpack.c.l.b16 %v2864
    %v2873 = vunpack.c.l.b16 %v2865
    %v2874 = vunpack.c.l.b16 %v2866
    %v2875 = vunpack.c.l.b16 %v2867
    %v2876 = vpack.c.b16 %v2873, %v2872
    %v2877 = vpack.c.b16 %v2875, %v2874
    %2880 = vmatpush.bf16.msra.mxu0 0
    %2881 = vmatpush.bf16.msra.mxu0 0
    %2882 = vmatpush.bf16.msra.mxu0 0
    %2883 = vmatpush.bf16.msra.mxu0 0
    %2884 = vmatpush.bf16.msra.mxu0 0
    %2885 = vmatpush.bf16.msra.mxu0 0
    %2886 = vmatpush.bf16.msra.mxu0 %v2877
    %2887 = vmatpush.bf16.msra.mxu0 %v2876
    %2888 = vmatmul.bf16.gmra.mxu0 %v2636
    %v2889 = vpop.f32.mrf.mxu0
    %v2890 = vadd.f32 0.0, %v2889
    %v2891 = vpop.f32.mrf.mxu0
    %v2892 = vadd.f32 0.0, %v2891
    %2893 = vdwg.mxu0
    %v2894 = vpack.c.bf16 %v2892, %v2890
    %v2896 = vsel %vm37, %v2894, 0
    %2898 = vmatpush.bf16.msra.mxu0 0
    %2899 = vmatpush.bf16.msra.mxu0 0
    %2900 = vmatpush.bf16.msra.mxu0 0
    %2901 = vmatpush.bf16.msra.mxu0 0
    %2902 = vmatpush.bf16.msra.mxu0 0
    %2903 = vmatpush.bf16.msra.mxu0 0
    %2904 = vmatpush.bf16.msra.mxu0 %v2617
    %2905 = vmatpush.bf16.msra.mxu0 %v2616
    %2906 = vmatmul.bf16.gmra.mxu0 %v2896
    %v2907 = vpop.f32.mrf.mxu0
    %v2908 = vadd.f32 %v33, %v2907
    %v2909 = vpop.f32.mrf.mxu0
    %v2910 = vadd.f32 %v34, %v2909
    %2911 = vdwg.mxu0
    %v2912 = vsel %vm213, %v2908, -inf
    %2913 = vmax.xlane.f32.xlu0 %v2912
    %v2914 = vpop.xlane.xlu0 %2913
    %v2915 = vsel %vm213, %v2910, -inf
    %2916 = vmax.xlane.f32.xlu0 %v2915
    %v2917 = vpop.xlane.xlu0 %2916
    %v2918 = vsub.f32 %v2908, %v2914
    %v2919 = vsub.f32 %v2910, %v2917
    %v2920 = vmul.f32 %v2918, 1.442695
    %v2921 = vpow.pop %v2920
    %v2922 = vmul.f32 %v2919, 1.442695
    %v2923 = vpow.pop %v2922
    %v2924 = vsel %vm213, %v2921, 0.0
    %2925 = vadd.xlane.f32.xlu0 %v2924
    %v2926 = vpop.xlane.xlu0 %2925
    %v2927 = vsel %vm213, %v2923, 0.0
    %2928 = vadd.xlane.f32.xlu0 %v2927
    %v2929 = vpop.xlane.xlu0 %2928
    %v2930 = vrcp.pop %v2926
    %v2931 = vrcp.pop %v2929
    %v2932 = vmul.f32 %v2921, %v2930
    %v2933 = vmul.f32 %v2923, %v2931
    %s2934 = scalar_lea.vmem %s5, 96
    %v2935 = vld [vmem:[%s2934] sm:$0xf]
    %v2936 = vld [vmem:[%s2934 + $0x4] sm:$0xf]
    %v2937 = vld [vmem:[%s2934 + $0x8] sm:$0xf]
    %v2938 = vld [vmem:[%s2934 + $0xc] sm:$0xf]
    %v2943 = vunpack.c.l.b16 %v2935
    %v2944 = vunpack.c.l.b16 %v2936
    %v2945 = vunpack.c.l.b16 %v2937
    %v2946 = vunpack.c.l.b16 %v2938
    %v2947 = vpack.c.b16 %v2944, %v2943
    %v2948 = vpack.c.b16 %v2946, %v2945
    %2951 = vmatpush.bf16.msra.mxu0 0
    %2952 = vmatpush.bf16.msra.mxu0 0
    %2953 = vmatpush.bf16.msra.mxu0 0
    %2954 = vmatpush.bf16.msra.mxu0 0
    %2955 = vmatpush.bf16.msra.mxu0 0
    %2956 = vmatpush.bf16.msra.mxu0 0
    %2957 = vmatpush.bf16.msra.mxu0 %v2948
    %2958 = vmatpush.bf16.msra.mxu0 %v2947
    %2959 = vmatmul.bf16.gmra.mxu0 %v2636
    %v2960 = vpop.f32.mrf.mxu0
    %v2961 = vadd.f32 0.0, %v2960
    %v2962 = vpop.f32.mrf.mxu0
    %v2963 = vadd.f32 0.0, %v2962
    %2964 = vdwg.mxu0
    %v2965 = vpack.c.bf16 %v2933, %v2932
    %v2966 = vpack.c.bf16 %v2963, %v2961
    %v2968 = vsel %vm213, %v2965, 0
    %2970 = vmatpush.bf16.msra.mxu0 0
    %2971 = vmatpush.bf16.msra.mxu0 0
    %2972 = vmatpush.bf16.msra.mxu0 0
    %2973 = vmatpush.bf16.msra.mxu0 0
    %2974 = vmatpush.bf16.msra.mxu0 0
    %2975 = vmatpush.bf16.msra.mxu0 0
    %2976 = vmatpush.bf16.msra.mxu0 0
    %2977 = vmatpush.bf16.msra.mxu0 %v2966
    %2978 = vmatmul.bf16.gmra.mxu0 %v2968
    %v2979 = vpop.f32.mrf.mxu0
    %v2980 = vadd.f32 0.0, %v2979
    %v2981 = vpop.f32.mrf.mxu0
    %v2982 = vadd.f32 0.0, %v2981
    %2983 = vdwg.mxu0
    %v2984 = vadd.f32 %v2859, %v2980
    %v2985 = vadd.f32 %v2861, %v2982
    %s2986 = scalar_lea.vmem %s4, 112
    %v2987 = vld [vmem:[%s2986] sm:$0xf]
    %v2988 = vld [vmem:[%s2986 + $0x4] sm:$0xf]
    %v2989 = vld [vmem:[%s2986 + $0x8] sm:$0xf]
    %v2990 = vld [vmem:[%s2986 + $0xc] sm:$0xf]
    %v2995 = vunpack.c.l.b16 %v2987
    %v2996 = vunpack.c.l.b16 %v2988
    %v2997 = vunpack.c.l.b16 %v2989
    %v2998 = vunpack.c.l.b16 %v2990
    %v2999 = vpack.c.b16 %v2996, %v2995
    %v3000 = vpack.c.b16 %v2998, %v2997
    %3003 = vmatpush.bf16.msra.mxu0 0
    %3004 = vmatpush.bf16.msra.mxu0 0
    %3005 = vmatpush.bf16.msra.mxu0 0
    %3006 = vmatpush.bf16.msra.mxu0 0
    %3007 = vmatpush.bf16.msra.mxu0 0
    %3008 = vmatpush.bf16.msra.mxu0 0
    %3009 = vmatpush.bf16.msra.mxu0 %v3000
    %3010 = vmatpush.bf16.msra.mxu0 %v2999
    %3011 = vmatmul.bf16.gmra.mxu0 %v2636
    %v3012 = vpop.f32.mrf.mxu0
    %v3013 = vadd.f32 0.0, %v3012
    %v3014 = vpop.f32.mrf.mxu0
    %v3015 = vadd.f32 0.0, %v3014
    %3016 = vdwg.mxu0
    %v3017 = vpack.c.bf16 %v3015, %v3013
    %v3019 = vsel %vm37, %v3017, 0
    %3021 = vmatpush.bf16.msra.mxu0 0
    %3022 = vmatpush.bf16.msra.mxu0 0
    %3023 = vmatpush.bf16.msra.mxu0 0
    %3024 = vmatpush.bf16.msra.mxu0 0
    %3025 = vmatpush.bf16.msra.mxu0 0
    %3026 = vmatpush.bf16.msra.mxu0 0
    %3027 = vmatpush.bf16.msra.mxu0 %v2617
    %3028 = vmatpush.bf16.msra.mxu0 %v2616
    %3029 = vmatmul.bf16.gmra.mxu0 %v3019
    %v3030 = vpop.f32.mrf.mxu0
    %v3031 = vadd.f32 %v33, %v3030
    %v3032 = vpop.f32.mrf.mxu0
    %v3033 = vadd.f32 %v34, %v3032
    %3034 = vdwg.mxu0
    %v3035 = vsel %vm213, %v3031, -inf
    %3036 = vmax.xlane.f32.xlu0 %v3035
    %v3037 = vpop.xlane.xlu0 %3036
    %v3038 = vsel %vm213, %v3033, -inf
    %3039 = vmax.xlane.f32.xlu0 %v3038
    %v3040 = vpop.xlane.xlu0 %3039
    %v3041 = vsub.f32 %v3031, %v3037
    %v3042 = vsub.f32 %v3033, %v3040
    %v3043 = vmul.f32 %v3041, 1.442695
    %v3044 = vpow.pop %v3043
    %v3045 = vmul.f32 %v3042, 1.442695
    %v3046 = vpow.pop %v3045
    %v3047 = vsel %vm213, %v3044, 0.0
    %3048 = vadd.xlane.f32.xlu0 %v3047
    %v3049 = vpop.xlane.xlu0 %3048
    %v3050 = vsel %vm213, %v3046, 0.0
    %3051 = vadd.xlane.f32.xlu0 %v3050
    %v3052 = vpop.xlane.xlu0 %3051
    %v3053 = vrcp.pop %v3049
    %v3054 = vrcp.pop %v3052
    %v3055 = vmul.f32 %v3044, %v3053
    %v3056 = vmul.f32 %v3046, %v3054
    %s3057 = scalar_lea.vmem %s5, 112
    %v3058 = vld [vmem:[%s3057] sm:$0xf]
    %v3059 = vld [vmem:[%s3057 + $0x4] sm:$0xf]
    %v3060 = vld [vmem:[%s3057 + $0x8] sm:$0xf]
    %v3061 = vld [vmem:[%s3057 + $0xc] sm:$0xf]
    %v3066 = vunpack.c.l.b16 %v3058
    %v3067 = vunpack.c.l.b16 %v3059
    %v3068 = vunpack.c.l.b16 %v3060
    %v3069 = vunpack.c.l.b16 %v3061
    %v3070 = vpack.c.b16 %v3067, %v3066
    %v3071 = vpack.c.b16 %v3069, %v3068
    %3074 = vmatpush.bf16.msra.mxu0 0
    %3075 = vmatpush.bf16.msra.mxu0 0
    %3076 = vmatpush.bf16.msra.mxu0 0
    %3077 = vmatpush.bf16.msra.mxu0 0
    %3078 = vmatpush.bf16.msra.mxu0 0
    %3079 = vmatpush.bf16.msra.mxu0 0
    %3080 = vmatpush.bf16.msra.mxu0 %v3071
    %3081 = vmatpush.bf16.msra.mxu0 %v3070
    %3082 = vmatmul.bf16.gmra.mxu0 %v2636
    %v3083 = vpop.f32.mrf.mxu0
    %v3084 = vadd.f32 0.0, %v3083
    %v3085 = vpop.f32.mrf.mxu0
    %v3086 = vadd.f32 0.0, %v3085
    %3087 = vdwg.mxu0
    %v3088 = vpack.c.bf16 %v3056, %v3055
    %v3089 = vpack.c.bf16 %v3086, %v3084
    %v3091 = vsel %vm213, %v3088, 0
    %3093 = vmatpush.bf16.msra.mxu0 0
    %3094 = vmatpush.bf16.msra.mxu0 0
    %3095 = vmatpush.bf16.msra.mxu0 0
    %3096 = vmatpush.bf16.msra.mxu0 0
    %3097 = vmatpush.bf16.msra.mxu0 0
    %3098 = vmatpush.bf16.msra.mxu0 0
    %3099 = vmatpush.bf16.msra.mxu0 0
    %3100 = vmatpush.bf16.msra.mxu0 %v3089
    %3101 = vmatmul.bf16.gmra.mxu0 %v3091
    %v3102 = vpop.f32.mrf.mxu0
    %v3103 = vadd.f32 0.0, %v3102
    %v3104 = vpop.f32.mrf.mxu0
    %v3105 = vadd.f32 0.0, %v3104
    %3106 = vdwg.mxu0
    %v3107 = vadd.f32 %v2984, %v3103
    %v3108 = vadd.f32 %v2985, %v3105
    %v3109 = vadd.f32 %v2497, %v3107
    %v3110 = vadd.f32 %v2498, %v3108
    %v3111 = vld [vmem:[%s2 + $0xa] sm:$0x1]
    %v3112 = vperm.slane %v3111, 0
    %v3113 = vadd.f32 %v3109, %v3112
    %v3114 = vadd.f32 %v3110, %v3112
    %v3115 = vld [vmem:[%s2 + $0x8] sm:$0x1]
    %v3116 = vld [vmem:[%s2 + $0x9] sm:$0x1]
    %v3117 = vsel %vm37, %v3113, 0.0
    %3118 = vadd.xlane.f32.xlu0 %v3117
    %v3119 = vpop.xlane.xlu0 %3118
    %v3120 = vsel %vm37, %v3114, 0.0
    %3121 = vadd.xlane.f32.xlu0 %v3120
    %v3122 = vpop.xlane.xlu0 %3121
    %v3123 = vmul.f32 %v3119, %v50
    %v3124 = vmul.f32 %v3122, %v50
    %v3125 = vsub.f32 %v3113, %v3123
    %v3126 = vsub.f32 %v3114, %v3124
    %v3127 = vmul.f32 %v3125, %v3125
    %v3128 = vmul.f32 %v3126, %v3126
    %v3129 = vsel %vm37, %v3127, 0.0
    %3130 = vadd.xlane.f32.xlu0 %v3129
    %v3131 = vpop.xlane.xlu0 %3130
    %v3132 = vsel %vm37, %v3128, 0.0
    %3133 = vadd.xlane.f32.xlu0 %v3132
    %v3134 = vpop.xlane.xlu0 %3133
    %v3135 = vmul.f32 %v3131, 0.032258064
    %v3136 = vmul.f32 %v3134, 0.032258064
    %v3137 = vperm.slane %v3115, 0
    %v3138 = vmul.f32 %v3137, %v3125
    %v3139 = vmul.f32 %v3137, %v3126
    %v3140 = vrsqrt.pop %v3135
    %v3141 = vmul.f32 %v3140, %v3135
    %v3142 = vmul.f32 %v3141, %v3140
    %v3143 = vmul.f32 0.5, %v3142
    %v3144 = vsub.f32 1.5, %v3143
    %v3145 = vmul.f32 %v3140, %v3144
    %v3146 = vmul.f32 %v3135, %v3145
    %vm3147 = vcmp.eq.f32.partialorder %v3135, inf
    %v3148 = vsel %vm3147, %v3135, %v3146
    %vm3149 = vcmp.eq.f32.partialorder %v3135, 0.0
    %v3150 = vand.u32 %v3135, 2147483648
    %v3151 = vsel %vm3149, %v3150, %v3148
    %v3152 = vrsqrt.pop %v3136
    %v3153 = vmul.f32 %v3152, %v3136
    %v3154 = vmul.f32 %v3153, %v3152
    %v3155 = vmul.f32 0.5, %v3154
    %v3156 = vsub.f32 1.5, %v3155
    %v3157 = vmul.f32 %v3152, %v3156
    %v3158 = vmul.f32 %v3136, %v3157
    %vm3159 = vcmp.eq.f32.partialorder %v3136, inf
    %v3160 = vsel %vm3159, %v3136, %v3158
    %vm3161 = vcmp.eq.f32.partialorder %v3136, 0.0
    %v3162 = vand.u32 %v3136, 2147483648
    %v3163 = vsel %vm3161, %v3162, %v3160
    %v3164 = vadd.f32 %v3151, 1e-06
    %v3165 = vadd.f32 %v3163, 1e-06
    %v3166 = vrcp.pop %v3164
    %v3167 = vmul.f32 %v3164, %v3166
    %v3168 = vsub.f32 1.0, %v3167
    %v3169 = vmul.f32 %v3166, %v3168
    %v3170 = vadd.f32 %v3166, %v3169
    %vm3171 = vweird.f32 %v3164
    %vm3172 = vweird.f32 %v3166
    %vm3173 = vmor %vm3171, %vm3172
    %v3174 = vsel %vm3173, %v3166, %v3170
    %v3175 = vand.u32 2147483647, %v3164
    %vm3176 = vcmp.eq.f32.partialorder %v3175, 8.507059e+37
    %v3177 = vand.u32 %v3164, 2147483648
    %v3178 = vor.u32 1.1754944e-38, %v3177
    %v3179 = vsel %vm3176, %v3178, %v3174
    %v3180 = vmul.f32 %v3138, %v3179
    %v3181 = vrcp.pop %v3165
    %v3182 = vmul.f32 %v3165, %v3181
    %v3183 = vsub.f32 1.0, %v3182
    %v3184 = vmul.f32 %v3181, %v3183
    %v3185 = vadd.f32 %v3181, %v3184
    %vm3186 = vweird.f32 %v3165
    %vm3187 = vweird.f32 %v3181
    %vm3188 = vmor %vm3186, %vm3187
    %v3189 = vsel %vm3188, %v3181, %v3185
    %v3190 = vand.u32 2147483647, %v3165
    %vm3191 = vcmp.eq.f32.partialorder %v3190, 8.507059e+37
    %v3192 = vand.u32 %v3165, 2147483648
    %v3193 = vor.u32 1.1754944e-38, %v3192
    %v3194 = vsel %vm3191, %v3193, %v3189
    %v3195 = vmul.f32 %v3139, %v3194
    %v3196 = vperm.slane %v3116, 0
    %v3197 = vadd.f32 %v3180, %v3196
    %v3198 = vadd.f32 %v3195, %v3196
    %v3199 = vpack.c.bf16 %v3198, %v3197
    %s3200 = scalar_lea.vmem %s6, 256
    %v3201 = vld [vmem:[%s3200] sm:$0xff]
    %v3202 = vld [vmem:[%s3200 + $0x8] sm:$0xff]
    %v3203 = vld [vmem:[%s3200 + $0x10] sm:$0xff]
    %v3204 = vld [vmem:[%s3200 + $0x18] sm:$0xff]
    %v3205 = vld [vmem:[%s3200 + $0x20] sm:$0xff]
    %v3206 = vld [vmem:[%s3200 + $0x28] sm:$0xff]
    %v3207 = vld [vmem:[%s3200 + $0x30] sm:$0xff]
    %v3208 = vld [vmem:[%s3200 + $0x38] sm:$0xff]
    %v3209 = vld [vmem:[%s3200 + $0x40] sm:$0xff]
    %v3210 = vld [vmem:[%s3200 + $0x48] sm:$0xff]
    %v3211 = vld [vmem:[%s3200 + $0x50] sm:$0xff]
    %v3212 = vld [vmem:[%s3200 + $0x58] sm:$0xff]
    %v3213 = vld [vmem:[%s3200 + $0x60] sm:$0xff]
    %v3214 = vld [vmem:[%s3200 + $0x68] sm:$0xff]
    %v3215 = vld [vmem:[%s3200 + $0x70] sm:$0xff]
    %v3216 = vld [vmem:[%s3200 + $0x78] sm:$0xff]
    %v3217 = vld [vmem:[%s3200 + $0x80] sm:$0xff]
    %v3218 = vld [vmem:[%s3200 + $0x88] sm:$0xff]
    %v3219 = vld [vmem:[%s3200 + $0x90] sm:$0xff]
    %v3220 = vld [vmem:[%s3200 + $0x98] sm:$0xff]
    %v3221 = vld [vmem:[%s3200 + $0xa0] sm:$0xff]
    %v3222 = vld [vmem:[%s3200 + $0xa8] sm:$0xff]
    %v3223 = vld [vmem:[%s3200 + $0xb0] sm:$0xff]
    %v3224 = vld [vmem:[%s3200 + $0xb8] sm:$0xff]
    %v3225 = vld [vmem:[%s3200 + $0xc0] sm:$0xff]
    %v3226 = vld [vmem:[%s3200 + $0xc8] sm:$0xff]
    %v3227 = vld [vmem:[%s3200 + $0xd0] sm:$0xff]
    %v3228 = vld [vmem:[%s3200 + $0xd8] sm:$0xff]
    %v3229 = vld [vmem:[%s3200 + $0xe0] sm:$0xff]
    %v3230 = vld [vmem:[%s3200 + $0xe8] sm:$0xff]
    %v3231 = vld [vmem:[%s3200 + $0xf0] sm:$0xff]
    %v3232 = vld [vmem:[%s3200 + $0xf8] sm:$0xff]
    %s3233 = scalar_lea.vmem %s3, 1
    %v3234 = vld [vmem:[%s3233] ss:$2 sm:$0xff]
    %s3235 = scalar_lea.vmem %s3, 17
    %v3236 = vld [vmem:[%s3235] ss:$2 sm:$0xff]
    %v3239 = vperm.slane %v3234, 0
    %v3240 = vperm.slane %v3234, 1
    %v3241 = vperm.slane %v3234, 2
    %v3242 = vperm.slane %v3234, 3
    %v3243 = vperm.slane %v3234, 4
    %v3244 = vperm.slane %v3234, 5
    %v3245 = vperm.slane %v3234, 6
    %v3246 = vperm.slane %v3234, 7
    %v3247 = vperm.slane %v3236, 0
    %v3248 = vperm.slane %v3236, 1
    %v3249 = vperm.slane %v3236, 2
    %v3250 = vperm.slane %v3236, 3
    %v3251 = vperm.slane %v3236, 4
    %v3252 = vperm.slane %v3236, 5
    %v3253 = vperm.slane %v3236, 6
    %v3254 = vperm.slane %v3236, 7
    %v3303 = vunpack.c.l.b16 %v3201
    %v3304 = vunpack.c.h.b16 %v3201
    %v3305 = vunpack.c.l.b16 %v3202
    %v3306 = vunpack.c.h.b16 %v3202
    %v3307 = vunpack.c.l.b16 %v3203
    %v3308 = vunpack.c.h.b16 %v3203
    %v3309 = vunpack.c.l.b16 %v3204
    %v3310 = vunpack.c.h.b16 %v3204
    %v3311 = vunpack.c.l.b16 %v3205
    %v3312 = vunpack.c.h.b16 %v3205
    %v3313 = vunpack.c.l.b16 %v3206
    %v3314 = vunpack.c.h.b16 %v3206
    %v3315 = vunpack.c.l.b16 %v3207
    %v3316 = vunpack.c.h.b16 %v3207
    %v3317 = vunpack.c.l.b16 %v3208
    %v3318 = vunpack.c.h.b16 %v3208
    %v3319 = vunpack.c.l.b16 %v3209
    %v3320 = vunpack.c.h.b16 %v3209
    %v3321 = vunpack.c.l.b16 %v3210
    %v3322 = vunpack.c.h.b16 %v3210
    %v3323 = vunpack.c.l.b16 %v3211
    %v3324 = vunpack.c.h.b16 %v3211
    %v3325 = vunpack.c.l.b16 %v3212
    %v3326 = vunpack.c.h.b16 %v3212
    %v3327 = vunpack.c.l.b16 %v3213
    %v3328 = vunpack.c.h.b16 %v3213
    %v3329 = vunpack.c.l.b16 %v3214
    %v3330 = vunpack.c.h.b16 %v3214
    %v3331 = vunpack.c.l.b16 %v3215
    %v3332 = vunpack.c.h.b16 %v3215
    %v3333 = vunpack.c.l.b16 %v3216
    %v3334 = vunpack.c.h.b16 %v3216
    %v3335 = vunpack.c.l.b16 %v3217
    %v3336 = vunpack.c.h.b16 %v3217
    %v3337 = vunpack.c.l.b16 %v3218
    %v3338 = vunpack.c.h.b16 %v3218
    %v3339 = vunpack.c.l.b16 %v3219
    %v3340 = vunpack.c.h.b16 %v3219
    %v3341 = vunpack.c.l.b16 %v3220
    %v3342 = vunpack.c.h.b16 %v3220
    %v3343 = vunpack.c.l.b16 %v3221
    %v3344 = vunpack.c.h.b16 %v3221
    %v3345 = vunpack.c.l.b16 %v3222
    %v3346 = vunpack.c.h.b16 %v3222
    %v3347 = vunpack.c.l.b16 %v3223
    %v3348 = vunpack.c.h.b16 %v3223
    %v3349 = vunpack.c.l.b16 %v3224
    %v3350 = vunpack.c.h.b16 %v3224
    %v3351 = vunpack.c.l.b16 %v3225
    %v3352 = vunpack.c.h.b16 %v3225
    %v3353 = vunpack.c.l.b16 %v3226
    %v3354 = vunpack.c.h.b16 %v3226
    %v3355 = vunpack.c.l.b16 %v3227
    %v3356 = vunpack.c.h.b16 %v3227
    %v3357 = vunpack.c.l.b16 %v3228
    %v3358 = vunpack.c.h.b16 %v3228
    %v3359 = vunpack.c.l.b16 %v3229
    %v3360 = vunpack.c.h.b16 %v3229
    %v3361 = vunpack.c.l.b16 %v3230
    %v3362 = vunpack.c.h.b16 %v3230
    %v3363 = vunpack.c.l.b16 %v3231
    %v3364 = vunpack.c.h.b16 %v3231
    %v3365 = vunpack.c.l.b16 %v3232
    %v3366 = vunpack.c.h.b16 %v3232
    %v3367 = vpack.c.b16 %v3319, %v3303
    %v3368 = vpack.c.b16 %v3320, %v3304
    %v3369 = vpack.c.b16 %v3321, %v3305
    %v3370 = vpack.c.b16 %v3322, %v3306
    %v3371 = vpack.c.b16 %v3323, %v3307
    %v3372 = vpack.c.b16 %v3324, %v3308
    %v3373 = vpack.c.b16 %v3325, %v3309
    %v3374 = vpack.c.b16 %v3326, %v3310
    %v3375 = vpack.c.b16 %v3327, %v3311
    %v3376 = vpack.c.b16 %v3328, %v3312
    %v3377 = vpack.c.b16 %v3329, %v3313
    %v3378 = vpack.c.b16 %v3330, %v3314
    %v3379 = vpack.c.b16 %v3331, %v3315
    %v3380 = vpack.c.b16 %v3332, %v3316
    %v3381 = vpack.c.b16 %v3333, %v3317
    %v3382 = vpack.c.b16 %v3334, %v3318
    %v3383 = vpack.c.b16 %v3351, %v3335
    %v3384 = vpack.c.b16 %v3352, %v3336
    %v3385 = vpack.c.b16 %v3353, %v3337
    %v3386 = vpack.c.b16 %v3354, %v3338
    %v3387 = vpack.c.b16 %v3355, %v3339
    %v3388 = vpack.c.b16 %v3356, %v3340
    %v3389 = vpack.c.b16 %v3357, %v3341
    %v3390 = vpack.c.b16 %v3358, %v3342
    %v3391 = vpack.c.b16 %v3359, %v3343
    %v3392 = vpack.c.b16 %v3360, %v3344
    %v3393 = vpack.c.b16 %v3361, %v3345
    %v3394 = vpack.c.b16 %v3362, %v3346
    %v3395 = vpack.c.b16 %v3363, %v3347
    %v3396 = vpack.c.b16 %v3364, %v3348
    %v3397 = vpack.c.b16 %v3365, %v3349
    %v3398 = vpack.c.b16 %v3366, %v3350
    %v3432 = vsel %vm37, %v3199, 0
    %3434 = vmatpush.bf16.msra.mxu0 0
    %3435 = vmatpush.bf16.msra.mxu0 0
    %3436 = vmatpush.bf16.msra.mxu0 0
    %3437 = vmatpush.bf16.msra.mxu0 0
    %3438 = vmatpush.bf16.msra.mxu0 0
    %3439 = vmatpush.bf16.msra.mxu0 0
    %3440 = vmatpush.bf16.msra.mxu0 %v3383
    %3441 = vmatpush.bf16.msra.mxu0 %v3367
    %3442 = vmatmul.bf16.gmra.mxu0 %v3432
    %v3443 = vpop.f32.mrf.mxu0
    %v3444 = vadd.f32 %v3239, %v3443
    %v3445 = vpop.f32.mrf.mxu0
    %v3446 = vadd.f32 %v3239, %v3445
    %3447 = vdwg.mxu0
    %3448 = vmatpush.bf16.msra.mxu0 0
    %3449 = vmatpush.bf16.msra.mxu0 0
    %3450 = vmatpush.bf16.msra.mxu0 0
    %3451 = vmatpush.bf16.msra.mxu0 0
    %3452 = vmatpush.bf16.msra.mxu0 0
    %3453 = vmatpush.bf16.msra.mxu0 0
    %3454 = vmatpush.bf16.msra.mxu0 %v3384
    %3455 = vmatpush.bf16.msra.mxu0 %v3368
    %3456 = vmatmul.bf16.gmra.mxu0 %v3432
    %v3457 = vpop.f32.mrf.mxu0
    %v3458 = vadd.f32 %v3240, %v3457
    %v3459 = vpop.f32.mrf.mxu0
    %v3460 = vadd.f32 %v3240, %v3459
    %3461 = vdwg.mxu0
    %3462 = vmatpush.bf16.msra.mxu0 0
    %3463 = vmatpush.bf16.msra.mxu0 0
    %3464 = vmatpush.bf16.msra.mxu0 0
    %3465 = vmatpush.bf16.msra.mxu0 0
    %3466 = vmatpush.bf16.msra.mxu0 0
    %3467 = vmatpush.bf16.msra.mxu0 0
    %3468 = vmatpush.bf16.msra.mxu0 %v3385
    %3469 = vmatpush.bf16.msra.mxu0 %v3369
    %3470 = vmatmul.bf16.gmra.mxu0 %v3432
    %v3471 = vpop.f32.mrf.mxu0
    %v3472 = vadd.f32 %v3241, %v3471
    %v3473 = vpop.f32.mrf.mxu0
    %v3474 = vadd.f32 %v3241, %v3473
    %3475 = vdwg.mxu0
    %3476 = vmatpush.bf16.msra.mxu0 0
    %3477 = vmatpush.bf16.msra.mxu0 0
    %3478 = vmatpush.bf16.msra.mxu0 0
    %3479 = vmatpush.bf16.msra.mxu0 0
    %3480 = vmatpush.bf16.msra.mxu0 0
    %3481 = vmatpush.bf16.msra.mxu0 0
    %3482 = vmatpush.bf16.msra.mxu0 %v3386
    %3483 = vmatpush.bf16.msra.mxu0 %v3370
    %3484 = vmatmul.bf16.gmra.mxu0 %v3432
    %v3485 = vpop.f32.mrf.mxu0
    %v3486 = vadd.f32 %v3242, %v3485
    %v3487 = vpop.f32.mrf.mxu0
    %v3488 = vadd.f32 %v3242, %v3487
    %3489 = vdwg.mxu0
    %3490 = vmatpush.bf16.msra.mxu0 0
    %3491 = vmatpush.bf16.msra.mxu0 0
    %3492 = vmatpush.bf16.msra.mxu0 0
    %3493 = vmatpush.bf16.msra.mxu0 0
    %3494 = vmatpush.bf16.msra.mxu0 0
    %3495 = vmatpush.bf16.msra.mxu0 0
    %3496 = vmatpush.bf16.msra.mxu0 %v3387
    %3497 = vmatpush.bf16.msra.mxu0 %v3371
    %3498 = vmatmul.bf16.gmra.mxu0 %v3432
    %v3499 = vpop.f32.mrf.mxu0
    %v3500 = vadd.f32 %v3243, %v3499
    %v3501 = vpop.f32.mrf.mxu0
    %v3502 = vadd.f32 %v3243, %v3501
    %3503 = vdwg.mxu0
    %3504 = vmatpush.bf16.msra.mxu0 0
    %3505 = vmatpush.bf16.msra.mxu0 0
    %3506 = vmatpush.bf16.msra.mxu0 0
    %3507 = vmatpush.bf16.msra.mxu0 0
    %3508 = vmatpush.bf16.msra.mxu0 0
    %3509 = vmatpush.bf16.msra.mxu0 0
    %3510 = vmatpush.bf16.msra.mxu0 %v3388
    %3511 = vmatpush.bf16.msra.mxu0 %v3372
    %3512 = vmatmul.bf16.gmra.mxu0 %v3432
    %v3513 = vpop.f32.mrf.mxu0
    %v3514 = vadd.f32 %v3244, %v3513
    %v3515 = vpop.f32.mrf.mxu0
    %v3516 = vadd.f32 %v3244, %v3515
    %3517 = vdwg.mxu0
    %3518 = vmatpush.bf16.msra.mxu0 0
    %3519 = vmatpush.bf16.msra.mxu0 0
    %3520 = vmatpush.bf16.msra.mxu0 0
    %3521 = vmatpush.bf16.msra.mxu0 0
    %3522 = vmatpush.bf16.msra.mxu0 0
    %3523 = vmatpush.bf16.msra.mxu0 0
    %3524 = vmatpush.bf16.msra.mxu0 %v3389
    %3525 = vmatpush.bf16.msra.mxu0 %v3373
    %3526 = vmatmul.bf16.gmra.mxu0 %v3432
    %v3527 = vpop.f32.mrf.mxu0
    %v3528 = vadd.f32 %v3245, %v3527
    %v3529 = vpop.f32.mrf.mxu0
    %v3530 = vadd.f32 %v3245, %v3529
    %3531 = vdwg.mxu0
    %3532 = vmatpush.bf16.msra.mxu0 0
    %3533 = vmatpush.bf16.msra.mxu0 0
    %3534 = vmatpush.bf16.msra.mxu0 0
    %3535 = vmatpush.bf16.msra.mxu0 0
    %3536 = vmatpush.bf16.msra.mxu0 0
    %3537 = vmatpush.bf16.msra.mxu0 0
    %3538 = vmatpush.bf16.msra.mxu0 %v3390
    %3539 = vmatpush.bf16.msra.mxu0 %v3374
    %3540 = vmatmul.bf16.gmra.mxu0 %v3432
    %v3541 = vpop.f32.mrf.mxu0
    %v3542 = vadd.f32 %v3246, %v3541
    %v3543 = vpop.f32.mrf.mxu0
    %v3544 = vadd.f32 %v3246, %v3543
    %3545 = vdwg.mxu0
    %3546 = vmatpush.bf16.msra.mxu0 0
    %3547 = vmatpush.bf16.msra.mxu0 0
    %3548 = vmatpush.bf16.msra.mxu0 0
    %3549 = vmatpush.bf16.msra.mxu0 0
    %3550 = vmatpush.bf16.msra.mxu0 0
    %3551 = vmatpush.bf16.msra.mxu0 0
    %3552 = vmatpush.bf16.msra.mxu0 %v3391
    %3553 = vmatpush.bf16.msra.mxu0 %v3375
    %3554 = vmatmul.bf16.gmra.mxu0 %v3432
    %v3555 = vpop.f32.mrf.mxu0
    %v3556 = vadd.f32 %v3247, %v3555
    %v3557 = vpop.f32.mrf.mxu0
    %v3558 = vadd.f32 %v3247, %v3557
    %3559 = vdwg.mxu0
    %3560 = vmatpush.bf16.msra.mxu0 0
    %3561 = vmatpush.bf16.msra.mxu0 0
    %3562 = vmatpush.bf16.msra.mxu0 0
    %3563 = vmatpush.bf16.msra.mxu0 0
    %3564 = vmatpush.bf16.msra.mxu0 0
    %3565 = vmatpush.bf16.msra.mxu0 0
    %3566 = vmatpush.bf16.msra.mxu0 %v3392
    %3567 = vmatpush.bf16.msra.mxu0 %v3376
    %3568 = vmatmul.bf16.gmra.mxu0 %v3432
    %v3569 = vpop.f32.mrf.mxu0
    %v3570 = vadd.f32 %v3248, %v3569
    %v3571 = vpop.f32.mrf.mxu0
    %v3572 = vadd.f32 %v3248, %v3571
    %3573 = vdwg.mxu0
    %3574 = vmatpush.bf16.msra.mxu0 0
    %3575 = vmatpush.bf16.msra.mxu0 0
    %3576 = vmatpush.bf16.msra.mxu0 0
    %3577 = vmatpush.bf16.msra.mxu0 0
    %3578 = vmatpush.bf16.msra.mxu0 0
    %3579 = vmatpush.bf16.msra.mxu0 0
    %3580 = vmatpush.bf16.msra.mxu0 %v3393
    %3581 = vmatpush.bf16.msra.mxu0 %v3377
    %3582 = vmatmul.bf16.gmra.mxu0 %v3432
    %v3583 = vpop.f32.mrf.mxu0
    %v3584 = vadd.f32 %v3249, %v3583
    %v3585 = vpop.f32.mrf.mxu0
    %v3586 = vadd.f32 %v3249, %v3585
    %3587 = vdwg.mxu0
    %3588 = vmatpush.bf16.msra.mxu0 0
    %3589 = vmatpush.bf16.msra.mxu0 0
    %3590 = vmatpush.bf16.msra.mxu0 0
    %3591 = vmatpush.bf16.msra.mxu0 0
    %3592 = vmatpush.bf16.msra.mxu0 0
    %3593 = vmatpush.bf16.msra.mxu0 0
    %3594 = vmatpush.bf16.msra.mxu0 %v3394
    %3595 = vmatpush.bf16.msra.mxu0 %v3378
    %3596 = vmatmul.bf16.gmra.mxu0 %v3432
    %v3597 = vpop.f32.mrf.mxu0
    %v3598 = vadd.f32 %v3250, %v3597
    %v3599 = vpop.f32.mrf.mxu0
    %v3600 = vadd.f32 %v3250, %v3599
    %3601 = vdwg.mxu0
    %3602 = vmatpush.bf16.msra.mxu0 0
    %3603 = vmatpush.bf16.msra.mxu0 0
    %3604 = vmatpush.bf16.msra.mxu0 0
    %3605 = vmatpush.bf16.msra.mxu0 0
    %3606 = vmatpush.bf16.msra.mxu0 0
    %3607 = vmatpush.bf16.msra.mxu0 0
    %3608 = vmatpush.bf16.msra.mxu0 %v3395
    %3609 = vmatpush.bf16.msra.mxu0 %v3379
    %3610 = vmatmul.bf16.gmra.mxu0 %v3432
    %v3611 = vpop.f32.mrf.mxu0
    %v3612 = vadd.f32 %v3251, %v3611
    %v3613 = vpop.f32.mrf.mxu0
    %v3614 = vadd.f32 %v3251, %v3613
    %3615 = vdwg.mxu0
    %3616 = vmatpush.bf16.msra.mxu0 0
    %3617 = vmatpush.bf16.msra.mxu0 0
    %3618 = vmatpush.bf16.msra.mxu0 0
    %3619 = vmatpush.bf16.msra.mxu0 0
    %3620 = vmatpush.bf16.msra.mxu0 0
    %3621 = vmatpush.bf16.msra.mxu0 0
    %3622 = vmatpush.bf16.msra.mxu0 %v3396
    %3623 = vmatpush.bf16.msra.mxu0 %v3380
    %3624 = vmatmul.bf16.gmra.mxu0 %v3432
    %v3625 = vpop.f32.mrf.mxu0
    %v3626 = vadd.f32 %v3252, %v3625
    %v3627 = vpop.f32.mrf.mxu0
    %v3628 = vadd.f32 %v3252, %v3627
    %3629 = vdwg.mxu0
    %3630 = vmatpush.bf16.msra.mxu0 0
    %3631 = vmatpush.bf16.msra.mxu0 0
    %3632 = vmatpush.bf16.msra.mxu0 0
    %3633 = vmatpush.bf16.msra.mxu0 0
    %3634 = vmatpush.bf16.msra.mxu0 0
    %3635 = vmatpush.bf16.msra.mxu0 0
    %3636 = vmatpush.bf16.msra.mxu0 %v3397
    %3637 = vmatpush.bf16.msra.mxu0 %v3381
    %3638 = vmatmul.bf16.gmra.mxu0 %v3432
    %v3639 = vpop.f32.mrf.mxu0
    %v3640 = vadd.f32 %v3253, %v3639
    %v3641 = vpop.f32.mrf.mxu0
    %v3642 = vadd.f32 %v3253, %v3641
    %3643 = vdwg.mxu0
    %3644 = vmatpush.bf16.msra.mxu0 0
    %3645 = vmatpush.bf16.msra.mxu0 0
    %3646 = vmatpush.bf16.msra.mxu0 0
    %3647 = vmatpush.bf16.msra.mxu0 0
    %3648 = vmatpush.bf16.msra.mxu0 0
    %3649 = vmatpush.bf16.msra.mxu0 0
    %3650 = vmatpush.bf16.msra.mxu0 %v3398
    %3651 = vmatpush.bf16.msra.mxu0 %v3382
    %3652 = vmatmul.bf16.gmra.mxu0 %v3432
    %v3653 = vpop.f32.mrf.mxu0
    %v3654 = vadd.f32 %v3254, %v3653
    %v3655 = vpop.f32.mrf.mxu0
    %v3656 = vadd.f32 %v3254, %v3655
    %3657 = vdwg.mxu0
    %v3658 = vmax.f32 %v3444, 0.0
    %v3659 = vmax.f32 %v3458, 0.0
    %v3660 = vmax.f32 %v3472, 0.0
    %v3661 = vmax.f32 %v3486, 0.0
    %v3662 = vmax.f32 %v3500, 0.0
    %v3663 = vmax.f32 %v3514, 0.0
    %v3664 = vmax.f32 %v3528, 0.0
    %v3665 = vmax.f32 %v3542, 0.0
    %v3666 = vmax.f32 %v3556, 0.0
    %v3667 = vmax.f32 %v3570, 0.0
    %v3668 = vmax.f32 %v3584, 0.0
    %v3669 = vmax.f32 %v3598, 0.0
    %v3670 = vmax.f32 %v3612, 0.0
    %v3671 = vmax.f32 %v3626, 0.0
    %v3672 = vmax.f32 %v3640, 0.0
    %v3673 = vmax.f32 %v3654, 0.0
    %v3674 = vmax.f32 %v3446, 0.0
    %v3675 = vmax.f32 %v3460, 0.0
    %v3676 = vmax.f32 %v3474, 0.0
    %v3677 = vmax.f32 %v3488, 0.0
    %v3678 = vmax.f32 %v3502, 0.0
    %v3679 = vmax.f32 %v3516, 0.0
    %v3680 = vmax.f32 %v3530, 0.0
    %v3681 = vmax.f32 %v3544, 0.0
    %v3682 = vmax.f32 %v3558, 0.0
    %v3683 = vmax.f32 %v3572, 0.0
    %v3684 = vmax.f32 %v3586, 0.0
    %v3685 = vmax.f32 %v3600, 0.0
    %v3686 = vmax.f32 %v3614, 0.0
    %v3687 = vmax.f32 %v3628, 0.0
    %v3688 = vmax.f32 %v3642, 0.0
    %v3689 = vmax.f32 %v3656, 0.0
    %v3690 = vpack.c.bf16 %v3674, %v3658
    %v3691 = vpack.c.bf16 %v3675, %v3659
    %v3692 = vpack.c.bf16 %v3676, %v3660
    %v3693 = vpack.c.bf16 %v3677, %v3661
    %v3694 = vpack.c.bf16 %v3678, %v3662
    %v3695 = vpack.c.bf16 %v3679, %v3663
    %v3696 = vpack.c.bf16 %v3680, %v3664
    %v3697 = vpack.c.bf16 %v3681, %v3665
    %v3698 = vpack.c.bf16 %v3682, %v3666
    %v3699 = vpack.c.bf16 %v3683, %v3667
    %v3700 = vpack.c.bf16 %v3684, %v3668
    %v3701 = vpack.c.bf16 %v3685, %v3669
    %v3702 = vpack.c.bf16 %v3686, %v3670
    %v3703 = vpack.c.bf16 %v3687, %v3671
    %v3704 = vpack.c.bf16 %v3688, %v3672
    %v3705 = vpack.c.bf16 %v3689, %v3673
    %s3706 = scalar_lea.vmem %s7, 1024
    %v3707 = vld [vmem:[%s3706] sm:$0xf]
    %v3708 = vld [vmem:[%s3706 + $0x4] sm:$0xf]
    %v3709 = vld [vmem:[%s3706 + $0x8] sm:$0xf]
    %v3710 = vld [vmem:[%s3706 + $0xc] sm:$0xf]
    %v3711 = vld [vmem:[%s3706 + $0x10] sm:$0xf]
    %v3712 = vld [vmem:[%s3706 + $0x14] sm:$0xf]
    %v3713 = vld [vmem:[%s3706 + $0x18] sm:$0xf]
    %v3714 = vld [vmem:[%s3706 + $0x1c] sm:$0xf]
    %v3715 = vld [vmem:[%s3706 + $0x20] sm:$0xf]
    %v3716 = vld [vmem:[%s3706 + $0x24] sm:$0xf]
    %v3717 = vld [vmem:[%s3706 + $0x28] sm:$0xf]
    %v3718 = vld [vmem:[%s3706 + $0x2c] sm:$0xf]
    %v3719 = vld [vmem:[%s3706 + $0x30] sm:$0xf]
    %v3720 = vld [vmem:[%s3706 + $0x34] sm:$0xf]
    %v3721 = vld [vmem:[%s3706 + $0x38] sm:$0xf]
    %v3722 = vld [vmem:[%s3706 + $0x3c] sm:$0xf]
    %v3723 = vld [vmem:[%s3706 + $0x40] sm:$0xf]
    %v3724 = vld [vmem:[%s3706 + $0x44] sm:$0xf]
    %v3725 = vld [vmem:[%s3706 + $0x48] sm:$0xf]
    %v3726 = vld [vmem:[%s3706 + $0x4c] sm:$0xf]
    %v3727 = vld [vmem:[%s3706 + $0x50] sm:$0xf]
    %v3728 = vld [vmem:[%s3706 + $0x54] sm:$0xf]
    %v3729 = vld [vmem:[%s3706 + $0x58] sm:$0xf]
    %v3730 = vld [vmem:[%s3706 + $0x5c] sm:$0xf]
    %v3731 = vld [vmem:[%s3706 + $0x60] sm:$0xf]
    %v3732 = vld [vmem:[%s3706 + $0x64] sm:$0xf]
    %v3733 = vld [vmem:[%s3706 + $0x68] sm:$0xf]
    %v3734 = vld [vmem:[%s3706 + $0x6c] sm:$0xf]
    %v3735 = vld [vmem:[%s3706 + $0x70] sm:$0xf]
    %v3736 = vld [vmem:[%s3706 + $0x74] sm:$0xf]
    %v3737 = vld [vmem:[%s3706 + $0x78] sm:$0xf]
    %v3738 = vld [vmem:[%s3706 + $0x7c] sm:$0xf]
    %v3739 = vld [vmem:[%s3706 + $0x80] sm:$0xf]
    %v3740 = vld [vmem:[%s3706 + $0x84] sm:$0xf]
    %v3741 = vld [vmem:[%s3706 + $0x88] sm:$0xf]
    %v3742 = vld [vmem:[%s3706 + $0x8c] sm:$0xf]
    %v3743 = vld [vmem:[%s3706 + $0x90] sm:$0xf]
    %v3744 = vld [vmem:[%s3706 + $0x94] sm:$0xf]
    %v3745 = vld [vmem:[%s3706 + $0x98] sm:$0xf]
    %v3746 = vld [vmem:[%s3706 + $0x9c] sm:$0xf]
    %v3747 = vld [vmem:[%s3706 + $0xa0] sm:$0xf]
    %v3748 = vld [vmem:[%s3706 + $0xa4] sm:$0xf]
    %v3749 = vld [vmem:[%s3706 + $0xa8] sm:$0xf]
    %v3750 = vld [vmem:[%s3706 + $0xac] sm:$0xf]
    %v3751 = vld [vmem:[%s3706 + $0xb0] sm:$0xf]
    %v3752 = vld [vmem:[%s3706 + $0xb4] sm:$0xf]
    %v3753 = vld [vmem:[%s3706 + $0xb8] sm:$0xf]
    %v3754 = vld [vmem:[%s3706 + $0xbc] sm:$0xf]
    %v3755 = vld [vmem:[%s3706 + $0xc0] sm:$0xf]
    %v3756 = vld [vmem:[%s3706 + $0xc4] sm:$0xf]
    %v3757 = vld [vmem:[%s3706 + $0xc8] sm:$0xf]
    %v3758 = vld [vmem:[%s3706 + $0xcc] sm:$0xf]
    %v3759 = vld [vmem:[%s3706 + $0xd0] sm:$0xf]
    %v3760 = vld [vmem:[%s3706 + $0xd4] sm:$0xf]
    %v3761 = vld [vmem:[%s3706 + $0xd8] sm:$0xf]
    %v3762 = vld [vmem:[%s3706 + $0xdc] sm:$0xf]
    %v3763 = vld [vmem:[%s3706 + $0xe0] sm:$0xf]
    %v3764 = vld [vmem:[%s3706 + $0xe4] sm:$0xf]
    %v3765 = vld [vmem:[%s3706 + $0xe8] sm:$0xf]
    %v3766 = vld [vmem:[%s3706 + $0xec] sm:$0xf]
    %v3767 = vld [vmem:[%s3706 + $0xf0] sm:$0xf]
    %v3768 = vld [vmem:[%s3706 + $0xf4] sm:$0xf]
    %v3769 = vld [vmem:[%s3706 + $0xf8] sm:$0xf]
    %v3770 = vld [vmem:[%s3706 + $0xfc] sm:$0xf]
    %v3771 = vld [vmem:[%s3706 + $0x100] sm:$0xf]
    %v3772 = vld [vmem:[%s3706 + $0x104] sm:$0xf]
    %v3773 = vld [vmem:[%s3706 + $0x108] sm:$0xf]
    %v3774 = vld [vmem:[%s3706 + $0x10c] sm:$0xf]
    %v3775 = vld [vmem:[%s3706 + $0x110] sm:$0xf]
    %v3776 = vld [vmem:[%s3706 + $0x114] sm:$0xf]
    %v3777 = vld [vmem:[%s3706 + $0x118] sm:$0xf]
    %v3778 = vld [vmem:[%s3706 + $0x11c] sm:$0xf]
    %v3779 = vld [vmem:[%s3706 + $0x120] sm:$0xf]
    %v3780 = vld [vmem:[%s3706 + $0x124] sm:$0xf]
    %v3781 = vld [vmem:[%s3706 + $0x128] sm:$0xf]
    %v3782 = vld [vmem:[%s3706 + $0x12c] sm:$0xf]
    %v3783 = vld [vmem:[%s3706 + $0x130] sm:$0xf]
    %v3784 = vld [vmem:[%s3706 + $0x134] sm:$0xf]
    %v3785 = vld [vmem:[%s3706 + $0x138] sm:$0xf]
    %v3786 = vld [vmem:[%s3706 + $0x13c] sm:$0xf]
    %v3787 = vld [vmem:[%s3706 + $0x140] sm:$0xf]
    %v3788 = vld [vmem:[%s3706 + $0x144] sm:$0xf]
    %v3789 = vld [vmem:[%s3706 + $0x148] sm:$0xf]
    %v3790 = vld [vmem:[%s3706 + $0x14c] sm:$0xf]
    %v3791 = vld [vmem:[%s3706 + $0x150] sm:$0xf]
    %v3792 = vld [vmem:[%s3706 + $0x154] sm:$0xf]
    %v3793 = vld [vmem:[%s3706 + $0x158] sm:$0xf]
    %v3794 = vld [vmem:[%s3706 + $0x15c] sm:$0xf]
    %v3795 = vld [vmem:[%s3706 + $0x160] sm:$0xf]
    %v3796 = vld [vmem:[%s3706 + $0x164] sm:$0xf]
    %v3797 = vld [vmem:[%s3706 + $0x168] sm:$0xf]
    %v3798 = vld [vmem:[%s3706 + $0x16c] sm:$0xf]
    %v3799 = vld [vmem:[%s3706 + $0x170] sm:$0xf]
    %v3800 = vld [vmem:[%s3706 + $0x174] sm:$0xf]
    %v3801 = vld [vmem:[%s3706 + $0x178] sm:$0xf]
    %v3802 = vld [vmem:[%s3706 + $0x17c] sm:$0xf]
    %v3803 = vld [vmem:[%s3706 + $0x180] sm:$0xf]
    %v3804 = vld [vmem:[%s3706 + $0x184] sm:$0xf]
    %v3805 = vld [vmem:[%s3706 + $0x188] sm:$0xf]
    %v3806 = vld [vmem:[%s3706 + $0x18c] sm:$0xf]
    %v3807 = vld [vmem:[%s3706 + $0x190] sm:$0xf]
    %v3808 = vld [vmem:[%s3706 + $0x194] sm:$0xf]
    %v3809 = vld [vmem:[%s3706 + $0x198] sm:$0xf]
    %v3810 = vld [vmem:[%s3706 + $0x19c] sm:$0xf]
    %v3811 = vld [vmem:[%s3706 + $0x1a0] sm:$0xf]
    %v3812 = vld [vmem:[%s3706 + $0x1a4] sm:$0xf]
    %v3813 = vld [vmem:[%s3706 + $0x1a8] sm:$0xf]
    %v3814 = vld [vmem:[%s3706 + $0x1ac] sm:$0xf]
    %v3815 = vld [vmem:[%s3706 + $0x1b0] sm:$0xf]
    %v3816 = vld [vmem:[%s3706 + $0x1b4] sm:$0xf]
    %v3817 = vld [vmem:[%s3706 + $0x1b8] sm:$0xf]
    %v3818 = vld [vmem:[%s3706 + $0x1bc] sm:$0xf]
    %v3819 = vld [vmem:[%s3706 + $0x1c0] sm:$0xf]
    %v3820 = vld [vmem:[%s3706 + $0x1c4] sm:$0xf]
    %v3821 = vld [vmem:[%s3706 + $0x1c8] sm:$0xf]
    %v3822 = vld [vmem:[%s3706 + $0x1cc] sm:$0xf]
    %v3823 = vld [vmem:[%s3706 + $0x1d0] sm:$0xf]
    %v3824 = vld [vmem:[%s3706 + $0x1d4] sm:$0xf]
    %v3825 = vld [vmem:[%s3706 + $0x1d8] sm:$0xf]
    %v3826 = vld [vmem:[%s3706 + $0x1dc] sm:$0xf]
    %v3827 = vld [vmem:[%s3706 + $0x1e0] sm:$0xf]
    %v3828 = vld [vmem:[%s3706 + $0x1e4] sm:$0xf]
    %v3829 = vld [vmem:[%s3706 + $0x1e8] sm:$0xf]
    %v3830 = vld [vmem:[%s3706 + $0x1ec] sm:$0xf]
    %v3831 = vld [vmem:[%s3706 + $0x1f0] sm:$0xf]
    %v3832 = vld [vmem:[%s3706 + $0x1f4] sm:$0xf]
    %v3833 = vld [vmem:[%s3706 + $0x1f8] sm:$0xf]
    %v3834 = vld [vmem:[%s3706 + $0x1fc] sm:$0xf]
    %v3835 = vld [vmem:[%s3706 + $0x200] sm:$0xf]
    %v3836 = vld [vmem:[%s3706 + $0x204] sm:$0xf]
    %v3837 = vld [vmem:[%s3706 + $0x208] sm:$0xf]
    %v3838 = vld [vmem:[%s3706 + $0x20c] sm:$0xf]
    %v3839 = vld [vmem:[%s3706 + $0x210] sm:$0xf]
    %v3840 = vld [vmem:[%s3706 + $0x214] sm:$0xf]
    %v3841 = vld [vmem:[%s3706 + $0x218] sm:$0xf]
    %v3842 = vld [vmem:[%s3706 + $0x21c] sm:$0xf]
    %v3843 = vld [vmem:[%s3706 + $0x220] sm:$0xf]
    %v3844 = vld [vmem:[%s3706 + $0x224] sm:$0xf]
    %v3845 = vld [vmem:[%s3706 + $0x228] sm:$0xf]
    %v3846 = vld [vmem:[%s3706 + $0x22c] sm:$0xf]
    %v3847 = vld [vmem:[%s3706 + $0x230] sm:$0xf]
    %v3848 = vld [vmem:[%s3706 + $0x234] sm:$0xf]
    %v3849 = vld [vmem:[%s3706 + $0x238] sm:$0xf]
    %v3850 = vld [vmem:[%s3706 + $0x23c] sm:$0xf]
    %v3851 = vld [vmem:[%s3706 + $0x240] sm:$0xf]
    %v3852 = vld [vmem:[%s3706 + $0x244] sm:$0xf]
    %v3853 = vld [vmem:[%s3706 + $0x248] sm:$0xf]
    %v3854 = vld [vmem:[%s3706 + $0x24c] sm:$0xf]
    %v3855 = vld [vmem:[%s3706 + $0x250] sm:$0xf]
    %v3856 = vld [vmem:[%s3706 + $0x254] sm:$0xf]
    %v3857 = vld [vmem:[%s3706 + $0x258] sm:$0xf]
    %v3858 = vld [vmem:[%s3706 + $0x25c] sm:$0xf]
    %v3859 = vld [vmem:[%s3706 + $0x260] sm:$0xf]
    %v3860 = vld [vmem:[%s3706 + $0x264] sm:$0xf]
    %v3861 = vld [vmem:[%s3706 + $0x268] sm:$0xf]
    %v3862 = vld [vmem:[%s3706 + $0x26c] sm:$0xf]
    %v3863 = vld [vmem:[%s3706 + $0x270] sm:$0xf]
    %v3864 = vld [vmem:[%s3706 + $0x274] sm:$0xf]
    %v3865 = vld [vmem:[%s3706 + $0x278] sm:$0xf]
    %v3866 = vld [vmem:[%s3706 + $0x27c] sm:$0xf]
    %v3867 = vld [vmem:[%s3706 + $0x280] sm:$0xf]
    %v3868 = vld [vmem:[%s3706 + $0x284] sm:$0xf]
    %v3869 = vld [vmem:[%s3706 + $0x288] sm:$0xf]
    %v3870 = vld [vmem:[%s3706 + $0x28c] sm:$0xf]
    %v3871 = vld [vmem:[%s3706 + $0x290] sm:$0xf]
    %v3872 = vld [vmem:[%s3706 + $0x294] sm:$0xf]
    %v3873 = vld [vmem:[%s3706 + $0x298] sm:$0xf]
    %v3874 = vld [vmem:[%s3706 + $0x29c] sm:$0xf]
    %v3875 = vld [vmem:[%s3706 + $0x2a0] sm:$0xf]
    %v3876 = vld [vmem:[%s3706 + $0x2a4] sm:$0xf]
    %v3877 = vld [vmem:[%s3706 + $0x2a8] sm:$0xf]
    %v3878 = vld [vmem:[%s3706 + $0x2ac] sm:$0xf]
    %v3879 = vld [vmem:[%s3706 + $0x2b0] sm:$0xf]
    %v3880 = vld [vmem:[%s3706 + $0x2b4] sm:$0xf]
    %v3881 = vld [vmem:[%s3706 + $0x2b8] sm:$0xf]
    %v3882 = vld [vmem:[%s3706 + $0x2bc] sm:$0xf]
    %v3883 = vld [vmem:[%s3706 + $0x2c0] sm:$0xf]
    %v3884 = vld [vmem:[%s3706 + $0x2c4] sm:$0xf]
    %v3885 = vld [vmem:[%s3706 + $0x2c8] sm:$0xf]
    %v3886 = vld [vmem:[%s3706 + $0x2cc] sm:$0xf]
    %v3887 = vld [vmem:[%s3706 + $0x2d0] sm:$0xf]
    %v3888 = vld [vmem:[%s3706 + $0x2d4] sm:$0xf]
    %v3889 = vld [vmem:[%s3706 + $0x2d8] sm:$0xf]
    %v3890 = vld [vmem:[%s3706 + $0x2dc] sm:$0xf]
    %v3891 = vld [vmem:[%s3706 + $0x2e0] sm:$0xf]
    %v3892 = vld [vmem:[%s3706 + $0x2e4] sm:$0xf]
    %v3893 = vld [vmem:[%s3706 + $0x2e8] sm:$0xf]
    %v3894 = vld [vmem:[%s3706 + $0x2ec] sm:$0xf]
    %v3895 = vld [vmem:[%s3706 + $0x2f0] sm:$0xf]
    %v3896 = vld [vmem:[%s3706 + $0x2f4] sm:$0xf]
    %v3897 = vld [vmem:[%s3706 + $0x2f8] sm:$0xf]
    %v3898 = vld [vmem:[%s3706 + $0x2fc] sm:$0xf]
    %v3899 = vld [vmem:[%s3706 + $0x300] sm:$0xf]
    %v3900 = vld [vmem:[%s3706 + $0x304] sm:$0xf]
    %v3901 = vld [vmem:[%s3706 + $0x308] sm:$0xf]
    %v3902 = vld [vmem:[%s3706 + $0x30c] sm:$0xf]
    %v3903 = vld [vmem:[%s3706 + $0x310] sm:$0xf]
    %v3904 = vld [vmem:[%s3706 + $0x314] sm:$0xf]
    %v3905 = vld [vmem:[%s3706 + $0x318] sm:$0xf]
    %v3906 = vld [vmem:[%s3706 + $0x31c] sm:$0xf]
    %v3907 = vld [vmem:[%s3706 + $0x320] sm:$0xf]
    %v3908 = vld [vmem:[%s3706 + $0x324] sm:$0xf]
    %v3909 = vld [vmem:[%s3706 + $0x328] sm:$0xf]
    %v3910 = vld [vmem:[%s3706 + $0x32c] sm:$0xf]
    %v3911 = vld [vmem:[%s3706 + $0x330] sm:$0xf]
    %v3912 = vld [vmem:[%s3706 + $0x334] sm:$0xf]
    %v3913 = vld [vmem:[%s3706 + $0x338] sm:$0xf]
    %v3914 = vld [vmem:[%s3706 + $0x33c] sm:$0xf]
    %v3915 = vld [vmem:[%s3706 + $0x340] sm:$0xf]
    %v3916 = vld [vmem:[%s3706 + $0x344] sm:$0xf]
    %v3917 = vld [vmem:[%s3706 + $0x348] sm:$0xf]
    %v3918 = vld [vmem:[%s3706 + $0x34c] sm:$0xf]
    %v3919 = vld [vmem:[%s3706 + $0x350] sm:$0xf]
    %v3920 = vld [vmem:[%s3706 + $0x354] sm:$0xf]
    %v3921 = vld [vmem:[%s3706 + $0x358] sm:$0xf]
    %v3922 = vld [vmem:[%s3706 + $0x35c] sm:$0xf]
    %v3923 = vld [vmem:[%s3706 + $0x360] sm:$0xf]
    %v3924 = vld [vmem:[%s3706 + $0x364] sm:$0xf]
    %v3925 = vld [vmem:[%s3706 + $0x368] sm:$0xf]
    %v3926 = vld [vmem:[%s3706 + $0x36c] sm:$0xf]
    %v3927 = vld [vmem:[%s3706 + $0x370] sm:$0xf]
    %v3928 = vld [vmem:[%s3706 + $0x374] sm:$0xf]
    %v3929 = vld [vmem:[%s3706 + $0x378] sm:$0xf]
    %v3930 = vld [vmem:[%s3706 + $0x37c] sm:$0xf]
    %v3931 = vld [vmem:[%s3706 + $0x380] sm:$0xf]
    %v3932 = vld [vmem:[%s3706 + $0x384] sm:$0xf]
    %v3933 = vld [vmem:[%s3706 + $0x388] sm:$0xf]
    %v3934 = vld [vmem:[%s3706 + $0x38c] sm:$0xf]
    %v3935 = vld [vmem:[%s3706 + $0x390] sm:$0xf]
    %v3936 = vld [vmem:[%s3706 + $0x394] sm:$0xf]
    %v3937 = vld [vmem:[%s3706 + $0x398] sm:$0xf]
    %v3938 = vld [vmem:[%s3706 + $0x39c] sm:$0xf]
    %v3939 = vld [vmem:[%s3706 + $0x3a0] sm:$0xf]
    %v3940 = vld [vmem:[%s3706 + $0x3a4] sm:$0xf]
    %v3941 = vld [vmem:[%s3706 + $0x3a8] sm:$0xf]
    %v3942 = vld [vmem:[%s3706 + $0x3ac] sm:$0xf]
    %v3943 = vld [vmem:[%s3706 + $0x3b0] sm:$0xf]
    %v3944 = vld [vmem:[%s3706 + $0x3b4] sm:$0xf]
    %v3945 = vld [vmem:[%s3706 + $0x3b8] sm:$0xf]
    %v3946 = vld [vmem:[%s3706 + $0x3bc] sm:$0xf]
    %v3947 = vld [vmem:[%s3706 + $0x3c0] sm:$0xf]
    %v3948 = vld [vmem:[%s3706 + $0x3c4] sm:$0xf]
    %v3949 = vld [vmem:[%s3706 + $0x3c8] sm:$0xf]
    %v3950 = vld [vmem:[%s3706 + $0x3cc] sm:$0xf]
    %v3951 = vld [vmem:[%s3706 + $0x3d0] sm:$0xf]
    %v3952 = vld [vmem:[%s3706 + $0x3d4] sm:$0xf]
    %v3953 = vld [vmem:[%s3706 + $0x3d8] sm:$0xf]
    %v3954 = vld [vmem:[%s3706 + $0x3dc] sm:$0xf]
    %v3955 = vld [vmem:[%s3706 + $0x3e0] sm:$0xf]
    %v3956 = vld [vmem:[%s3706 + $0x3e4] sm:$0xf]
    %v3957 = vld [vmem:[%s3706 + $0x3e8] sm:$0xf]
    %v3958 = vld [vmem:[%s3706 + $0x3ec] sm:$0xf]
    %v3959 = vld [vmem:[%s3706 + $0x3f0] sm:$0xf]
    %v3960 = vld [vmem:[%s3706 + $0x3f4] sm:$0xf]
    %v3961 = vld [vmem:[%s3706 + $0x3f8] sm:$0xf]
    %v3962 = vld [vmem:[%s3706 + $0x3fc] sm:$0xf]
    %v3963 = vld [vmem:[%s2 + $0xb] sm:$0x1]
    %v3964 = vperm.slane %v3963, 0
    %v4221 = vunpack.c.l.b16 %v3707
    %v4222 = vunpack.c.l.b16 %v3708
    %v4223 = vunpack.c.l.b16 %v3709
    %v4224 = vunpack.c.l.b16 %v3710
    %v4225 = vunpack.c.l.b16 %v3711
    %v4226 = vunpack.c.l.b16 %v3712
    %v4227 = vunpack.c.l.b16 %v3713
    %v4228 = vunpack.c.l.b16 %v3714
    %v4229 = vunpack.c.l.b16 %v3715
    %v4230 = vunpack.c.l.b16 %v3716
    %v4231 = vunpack.c.l.b16 %v3717
    %v4232 = vunpack.c.l.b16 %v3718
    %v4233 = vunpack.c.l.b16 %v3719
    %v4234 = vunpack.c.l.b16 %v3720
    %v4235 = vunpack.c.l.b16 %v3721
    %v4236 = vunpack.c.l.b16 %v3722
    %v4237 = vunpack.c.l.b16 %v3723
    %v4238 = vunpack.c.l.b16 %v3724
    %v4239 = vunpack.c.l.b16 %v3725
    %v4240 = vunpack.c.l.b16 %v3726
    %v4241 = vunpack.c.l.b16 %v3727
    %v4242 = vunpack.c.l.b16 %v3728
    %v4243 = vunpack.c.l.b16 %v3729
    %v4244 = vunpack.c.l.b16 %v3730
    %v4245 = vunpack.c.l.b16 %v3731
    %v4246 = vunpack.c.l.b16 %v3732
    %v4247 = vunpack.c.l.b16 %v3733
    %v4248 = vunpack.c.l.b16 %v3734
    %v4249 = vunpack.c.l.b16 %v3735
    %v4250 = vunpack.c.l.b16 %v3736
    %v4251 = vunpack.c.l.b16 %v3737
    %v4252 = vunpack.c.l.b16 %v3738
    %v4253 = vunpack.c.l.b16 %v3739
    %v4254 = vunpack.c.l.b16 %v3740
    %v4255 = vunpack.c.l.b16 %v3741
    %v4256 = vunpack.c.l.b16 %v3742
    %v4257 = vunpack.c.l.b16 %v3743
    %v4258 = vunpack.c.l.b16 %v3744
    %v4259 = vunpack.c.l.b16 %v3745
    %v4260 = vunpack.c.l.b16 %v3746
    %v4261 = vunpack.c.l.b16 %v3747
    %v4262 = vunpack.c.l.b16 %v3748
    %v4263 = vunpack.c.l.b16 %v3749
    %v4264 = vunpack.c.l.b16 %v3750
    %v4265 = vunpack.c.l.b16 %v3751
    %v4266 = vunpack.c.l.b16 %v3752
    %v4267 = vunpack.c.l.b16 %v3753
    %v4268 = vunpack.c.l.b16 %v3754
    %v4269 = vunpack.c.l.b16 %v3755
    %v4270 = vunpack.c.l.b16 %v3756
    %v4271 = vunpack.c.l.b16 %v3757
    %v4272 = vunpack.c.l.b16 %v3758
    %v4273 = vunpack.c.l.b16 %v3759
    %v4274 = vunpack.c.l.b16 %v3760
    %v4275 = vunpack.c.l.b16 %v3761
    %v4276 = vunpack.c.l.b16 %v3762
    %v4277 = vunpack.c.l.b16 %v3763
    %v4278 = vunpack.c.l.b16 %v3764
    %v4279 = vunpack.c.l.b16 %v3765
    %v4280 = vunpack.c.l.b16 %v3766
    %v4281 = vunpack.c.l.b16 %v3767
    %v4282 = vunpack.c.l.b16 %v3768
    %v4283 = vunpack.c.l.b16 %v3769
    %v4284 = vunpack.c.l.b16 %v3770
    %v4285 = vunpack.c.l.b16 %v3771
    %v4286 = vunpack.c.l.b16 %v3772
    %v4287 = vunpack.c.l.b16 %v3773
    %v4288 = vunpack.c.l.b16 %v3774
    %v4289 = vunpack.c.l.b16 %v3775
    %v4290 = vunpack.c.l.b16 %v3776
    %v4291 = vunpack.c.l.b16 %v3777
    %v4292 = vunpack.c.l.b16 %v3778
    %v4293 = vunpack.c.l.b16 %v3779
    %v4294 = vunpack.c.l.b16 %v3780
    %v4295 = vunpack.c.l.b16 %v3781
    %v4296 = vunpack.c.l.b16 %v3782
    %v4297 = vunpack.c.l.b16 %v3783
    %v4298 = vunpack.c.l.b16 %v3784
    %v4299 = vunpack.c.l.b16 %v3785
    %v4300 = vunpack.c.l.b16 %v3786
    %v4301 = vunpack.c.l.b16 %v3787
    %v4302 = vunpack.c.l.b16 %v3788
    %v4303 = vunpack.c.l.b16 %v3789
    %v4304 = vunpack.c.l.b16 %v3790
    %v4305 = vunpack.c.l.b16 %v3791
    %v4306 = vunpack.c.l.b16 %v3792
    %v4307 = vunpack.c.l.b16 %v3793
    %v4308 = vunpack.c.l.b16 %v3794
    %v4309 = vunpack.c.l.b16 %v3795
    %v4310 = vunpack.c.l.b16 %v3796
    %v4311 = vunpack.c.l.b16 %v3797
    %v4312 = vunpack.c.l.b16 %v3798
    %v4313 = vunpack.c.l.b16 %v3799
    %v4314 = vunpack.c.l.b16 %v3800
    %v4315 = vunpack.c.l.b16 %v3801
    %v4316 = vunpack.c.l.b16 %v3802
    %v4317 = vunpack.c.l.b16 %v3803
    %v4318 = vunpack.c.l.b16 %v3804
    %v4319 = vunpack.c.l.b16 %v3805
    %v4320 = vunpack.c.l.b16 %v3806
    %v4321 = vunpack.c.l.b16 %v3807
    %v4322 = vunpack.c.l.b16 %v3808
    %v4323 = vunpack.c.l.b16 %v3809
    %v4324 = vunpack.c.l.b16 %v3810
    %v4325 = vunpack.c.l.b16 %v3811
    %v4326 = vunpack.c.l.b16 %v3812
    %v4327 = vunpack.c.l.b16 %v3813
    %v4328 = vunpack.c.l.b16 %v3814
    %v4329 = vunpack.c.l.b16 %v3815
    %v4330 = vunpack.c.l.b16 %v3816
    %v4331 = vunpack.c.l.b16 %v3817
    %v4332 = vunpack.c.l.b16 %v3818
    %v4333 = vunpack.c.l.b16 %v3819
    %v4334 = vunpack.c.l.b16 %v3820
    %v4335 = vunpack.c.l.b16 %v3821
    %v4336 = vunpack.c.l.b16 %v3822
    %v4337 = vunpack.c.l.b16 %v3823
    %v4338 = vunpack.c.l.b16 %v3824
    %v4339 = vunpack.c.l.b16 %v3825
    %v4340 = vunpack.c.l.b16 %v3826
    %v4341 = vunpack.c.l.b16 %v3827
    %v4342 = vunpack.c.l.b16 %v3828
    %v4343 = vunpack.c.l.b16 %v3829
    %v4344 = vunpack.c.l.b16 %v3830
    %v4345 = vunpack.c.l.b16 %v3831
    %v4346 = vunpack.c.l.b16 %v3832
    %v4347 = vunpack.c.l.b16 %v3833
    %v4348 = vunpack.c.l.b16 %v3834
    %v4349 = vunpack.c.l.b16 %v3835
    %v4350 = vunpack.c.l.b16 %v3836
    %v4351 = vunpack.c.l.b16 %v3837
    %v4352 = vunpack.c.l.b16 %v3838
    %v4353 = vunpack.c.l.b16 %v3839
    %v4354 = vunpack.c.l.b16 %v3840
    %v4355 = vunpack.c.l.b16 %v3841
    %v4356 = vunpack.c.l.b16 %v3842
    %v4357 = vunpack.c.l.b16 %v3843
    %v4358 = vunpack.c.l.b16 %v3844
    %v4359 = vunpack.c.l.b16 %v3845
    %v4360 = vunpack.c.l.b16 %v3846
    %v4361 = vunpack.c.l.b16 %v3847
    %v4362 = vunpack.c.l.b16 %v3848
    %v4363 = vunpack.c.l.b16 %v3849
    %v4364 = vunpack.c.l.b16 %v3850
    %v4365 = vunpack.c.l.b16 %v3851
    %v4366 = vunpack.c.l.b16 %v3852
    %v4367 = vunpack.c.l.b16 %v3853
    %v4368 = vunpack.c.l.b16 %v3854
    %v4369 = vunpack.c.l.b16 %v3855
    %v4370 = vunpack.c.l.b16 %v3856
    %v4371 = vunpack.c.l.b16 %v3857
    %v4372 = vunpack.c.l.b16 %v3858
    %v4373 = vunpack.c.l.b16 %v3859
    %v4374 = vunpack.c.l.b16 %v3860
    %v4375 = vunpack.c.l.b16 %v3861
    %v4376 = vunpack.c.l.b16 %v3862
    %v4377 = vunpack.c.l.b16 %v3863
    %v4378 = vunpack.c.l.b16 %v3864
    %v4379 = vunpack.c.l.b16 %v3865
    %v4380 = vunpack.c.l.b16 %v3866
    %v4381 = vunpack.c.l.b16 %v3867
    %v4382 = vunpack.c.l.b16 %v3868
    %v4383 = vunpack.c.l.b16 %v3869
    %v4384 = vunpack.c.l.b16 %v3870
    %v4385 = vunpack.c.l.b16 %v3871
    %v4386 = vunpack.c.l.b16 %v3872
    %v4387 = vunpack.c.l.b16 %v3873
    %v4388 = vunpack.c.l.b16 %v3874
    %v4389 = vunpack.c.l.b16 %v3875
    %v4390 = vunpack.c.l.b16 %v3876
    %v4391 = vunpack.c.l.b16 %v3877
    %v4392 = vunpack.c.l.b16 %v3878
    %v4393 = vunpack.c.l.b16 %v3879
    %v4394 = vunpack.c.l.b16 %v3880
    %v4395 = vunpack.c.l.b16 %v3881
    %v4396 = vunpack.c.l.b16 %v3882
    %v4397 = vunpack.c.l.b16 %v3883
    %v4398 = vunpack.c.l.b16 %v3884
    %v4399 = vunpack.c.l.b16 %v3885
    %v4400 = vunpack.c.l.b16 %v3886
    %v4401 = vunpack.c.l.b16 %v3887
    %v4402 = vunpack.c.l.b16 %v3888
    %v4403 = vunpack.c.l.b16 %v3889
    %v4404 = vunpack.c.l.b16 %v3890
    %v4405 = vunpack.c.l.b16 %v3891
    %v4406 = vunpack.c.l.b16 %v3892
    %v4407 = vunpack.c.l.b16 %v3893
    %v4408 = vunpack.c.l.b16 %v3894
    %v4409 = vunpack.c.l.b16 %v3895
    %v4410 = vunpack.c.l.b16 %v3896
    %v4411 = vunpack.c.l.b16 %v3897
    %v4412 = vunpack.c.l.b16 %v3898
    %v4413 = vunpack.c.l.b16 %v3899
    %v4414 = vunpack.c.l.b16 %v3900
    %v4415 = vunpack.c.l.b16 %v3901
    %v4416 = vunpack.c.l.b16 %v3902
    %v4417 = vunpack.c.l.b16 %v3903
    %v4418 = vunpack.c.l.b16 %v3904
    %v4419 = vunpack.c.l.b16 %v3905
    %v4420 = vunpack.c.l.b16 %v3906
    %v4421 = vunpack.c.l.b16 %v3907
    %v4422 = vunpack.c.l.b16 %v3908
    %v4423 = vunpack.c.l.b16 %v3909
    %v4424 = vunpack.c.l.b16 %v3910
    %v4425 = vunpack.c.l.b16 %v3911
    %v4426 = vunpack.c.l.b16 %v3912
    %v4427 = vunpack.c.l.b16 %v3913
    %v4428 = vunpack.c.l.b16 %v3914
    %v4429 = vunpack.c.l.b16 %v3915
    %v4430 = vunpack.c.l.b16 %v3916
    %v4431 = vunpack.c.l.b16 %v3917
    %v4432 = vunpack.c.l.b16 %v3918
    %v4433 = vunpack.c.l.b16 %v3919
    %v4434 = vunpack.c.l.b16 %v3920
    %v4435 = vunpack.c.l.b16 %v3921
    %v4436 = vunpack.c.l.b16 %v3922
    %v4437 = vunpack.c.l.b16 %v3923
    %v4438 = vunpack.c.l.b16 %v3924
    %v4439 = vunpack.c.l.b16 %v3925
    %v4440 = vunpack.c.l.b16 %v3926
    %v4441 = vunpack.c.l.b16 %v3927
    %v4442 = vunpack.c.l.b16 %v3928
    %v4443 = vunpack.c.l.b16 %v3929
    %v4444 = vunpack.c.l.b16 %v3930
    %v4445 = vunpack.c.l.b16 %v3931
    %v4446 = vunpack.c.l.b16 %v3932
    %v4447 = vunpack.c.l.b16 %v3933
    %v4448 = vunpack.c.l.b16 %v3934
    %v4449 = vunpack.c.l.b16 %v3935
    %v4450 = vunpack.c.l.b16 %v3936
    %v4451 = vunpack.c.l.b16 %v3937
    %v4452 = vunpack.c.l.b16 %v3938
    %v4453 = vunpack.c.l.b16 %v3939
    %v4454 = vunpack.c.l.b16 %v3940
    %v4455 = vunpack.c.l.b16 %v3941
    %v4456 = vunpack.c.l.b16 %v3942
    %v4457 = vunpack.c.l.b16 %v3943
    %v4458 = vunpack.c.l.b16 %v3944
    %v4459 = vunpack.c.l.b16 %v3945
    %v4460 = vunpack.c.l.b16 %v3946
    %v4461 = vunpack.c.l.b16 %v3947
    %v4462 = vunpack.c.l.b16 %v3948
    %v4463 = vunpack.c.l.b16 %v3949
    %v4464 = vunpack.c.l.b16 %v3950
    %v4465 = vunpack.c.l.b16 %v3951
    %v4466 = vunpack.c.l.b16 %v3952
    %v4467 = vunpack.c.l.b16 %v3953
    %v4468 = vunpack.c.l.b16 %v3954
    %v4469 = vunpack.c.l.b16 %v3955
    %v4470 = vunpack.c.l.b16 %v3956
    %v4471 = vunpack.c.l.b16 %v3957
    %v4472 = vunpack.c.l.b16 %v3958
    %v4473 = vunpack.c.l.b16 %v3959
    %v4474 = vunpack.c.l.b16 %v3960
    %v4475 = vunpack.c.l.b16 %v3961
    %v4476 = vunpack.c.l.b16 %v3962
    %v4477 = vpack.c.b16 %v4222, %v4221
    %v4478 = vpack.c.b16 %v4224, %v4223
    %v4479 = vpack.c.b16 %v4226, %v4225
    %v4480 = vpack.c.b16 %v4228, %v4227
    %v4481 = vpack.c.b16 %v4230, %v4229
    %v4482 = vpack.c.b16 %v4232, %v4231
    %v4483 = vpack.c.b16 %v4234, %v4233
    %v4484 = vpack.c.b16 %v4236, %v4235
    %v4485 = vpack.c.b16 %v4238, %v4237
    %v4486 = vpack.c.b16 %v4240, %v4239
    %v4487 = vpack.c.b16 %v4242, %v4241
    %v4488 = vpack.c.b16 %v4244, %v4243
    %v4489 = vpack.c.b16 %v4246, %v4245
    %v4490 = vpack.c.b16 %v4248, %v4247
    %v4491 = vpack.c.b16 %v4250, %v4249
    %v4492 = vpack.c.b16 %v4252, %v4251
    %v4493 = vpack.c.b16 %v4254, %v4253
    %v4494 = vpack.c.b16 %v4256, %v4255
    %v4495 = vpack.c.b16 %v4258, %v4257
    %v4496 = vpack.c.b16 %v4260, %v4259
    %v4497 = vpack.c.b16 %v4262, %v4261
    %v4498 = vpack.c.b16 %v4264, %v4263
    %v4499 = vpack.c.b16 %v4266, %v4265
    %v4500 = vpack.c.b16 %v4268, %v4267
    %v4501 = vpack.c.b16 %v4270, %v4269
    %v4502 = vpack.c.b16 %v4272, %v4271
    %v4503 = vpack.c.b16 %v4274, %v4273
    %v4504 = vpack.c.b16 %v4276, %v4275
    %v4505 = vpack.c.b16 %v4278, %v4277
    %v4506 = vpack.c.b16 %v4280, %v4279
    %v4507 = vpack.c.b16 %v4282, %v4281
    %v4508 = vpack.c.b16 %v4284, %v4283
    %v4509 = vpack.c.b16 %v4286, %v4285
    %v4510 = vpack.c.b16 %v4288, %v4287
    %v4511 = vpack.c.b16 %v4290, %v4289
    %v4512 = vpack.c.b16 %v4292, %v4291
    %v4513 = vpack.c.b16 %v4294, %v4293
    %v4514 = vpack.c.b16 %v4296, %v4295
    %v4515 = vpack.c.b16 %v4298, %v4297
    %v4516 = vpack.c.b16 %v4300, %v4299
    %v4517 = vpack.c.b16 %v4302, %v4301
    %v4518 = vpack.c.b16 %v4304, %v4303
    %v4519 = vpack.c.b16 %v4306, %v4305
    %v4520 = vpack.c.b16 %v4308, %v4307
    %v4521 = vpack.c.b16 %v4310, %v4309
    %v4522 = vpack.c.b16 %v4312, %v4311
    %v4523 = vpack.c.b16 %v4314, %v4313
    %v4524 = vpack.c.b16 %v4316, %v4315
    %v4525 = vpack.c.b16 %v4318, %v4317
    %v4526 = vpack.c.b16 %v4320, %v4319
    %v4527 = vpack.c.b16 %v4322, %v4321
    %v4528 = vpack.c.b16 %v4324, %v4323
    %v4529 = vpack.c.b16 %v4326, %v4325
    %v4530 = vpack.c.b16 %v4328, %v4327
    %v4531 = vpack.c.b16 %v4330, %v4329
    %v4532 = vpack.c.b16 %v4332, %v4331
    %v4533 = vpack.c.b16 %v4334, %v4333
    %v4534 = vpack.c.b16 %v4336, %v4335
    %v4535 = vpack.c.b16 %v4338, %v4337
    %v4536 = vpack.c.b16 %v4340, %v4339
    %v4537 = vpack.c.b16 %v4342, %v4341
    %v4538 = vpack.c.b16 %v4344, %v4343
    %v4539 = vpack.c.b16 %v4346, %v4345
    %v4540 = vpack.c.b16 %v4348, %v4347
    %v4541 = vpack.c.b16 %v4350, %v4349
    %v4542 = vpack.c.b16 %v4352, %v4351
    %v4543 = vpack.c.b16 %v4354, %v4353
    %v4544 = vpack.c.b16 %v4356, %v4355
    %v4545 = vpack.c.b16 %v4358, %v4357
    %v4546 = vpack.c.b16 %v4360, %v4359
    %v4547 = vpack.c.b16 %v4362, %v4361
    %v4548 = vpack.c.b16 %v4364, %v4363
    %v4549 = vpack.c.b16 %v4366, %v4365
    %v4550 = vpack.c.b16 %v4368, %v4367
    %v4551 = vpack.c.b16 %v4370, %v4369
    %v4552 = vpack.c.b16 %v4372, %v4371
    %v4553 = vpack.c.b16 %v4374, %v4373
    %v4554 = vpack.c.b16 %v4376, %v4375
    %v4555 = vpack.c.b16 %v4378, %v4377
    %v4556 = vpack.c.b16 %v4380, %v4379
    %v4557 = vpack.c.b16 %v4382, %v4381
    %v4558 = vpack.c.b16 %v4384, %v4383
    %v4559 = vpack.c.b16 %v4386, %v4385
    %v4560 = vpack.c.b16 %v4388, %v4387
    %v4561 = vpack.c.b16 %v4390, %v4389
    %v4562 = vpack.c.b16 %v4392, %v4391
    %v4563 = vpack.c.b16 %v4394, %v4393
    %v4564 = vpack.c.b16 %v4396, %v4395
    %v4565 = vpack.c.b16 %v4398, %v4397
    %v4566 = vpack.c.b16 %v4400, %v4399
    %v4567 = vpack.c.b16 %v4402, %v4401
    %v4568 = vpack.c.b16 %v4404, %v4403
    %v4569 = vpack.c.b16 %v4406, %v4405
    %v4570 = vpack.c.b16 %v4408, %v4407
    %v4571 = vpack.c.b16 %v4410, %v4409
    %v4572 = vpack.c.b16 %v4412, %v4411
    %v4573 = vpack.c.b16 %v4414, %v4413
    %v4574 = vpack.c.b16 %v4416, %v4415
    %v4575 = vpack.c.b16 %v4418, %v4417
    %v4576 = vpack.c.b16 %v4420, %v4419
    %v4577 = vpack.c.b16 %v4422, %v4421
    %v4578 = vpack.c.b16 %v4424, %v4423
    %v4579 = vpack.c.b16 %v4426, %v4425
    %v4580 = vpack.c.b16 %v4428, %v4427
    %v4581 = vpack.c.b16 %v4430, %v4429
    %v4582 = vpack.c.b16 %v4432, %v4431
    %v4583 = vpack.c.b16 %v4434, %v4433
    %v4584 = vpack.c.b16 %v4436, %v4435
    %v4585 = vpack.c.b16 %v4438, %v4437
    %v4586 = vpack.c.b16 %v4440, %v4439
    %v4587 = vpack.c.b16 %v4442, %v4441
    %v4588 = vpack.c.b16 %v4444, %v4443
    %v4589 = vpack.c.b16 %v4446, %v4445
    %v4590 = vpack.c.b16 %v4448, %v4447
    %v4591 = vpack.c.b16 %v4450, %v4449
    %v4592 = vpack.c.b16 %v4452, %v4451
    %v4593 = vpack.c.b16 %v4454, %v4453
    %v4594 = vpack.c.b16 %v4456, %v4455
    %v4595 = vpack.c.b16 %v4458, %v4457
    %v4596 = vpack.c.b16 %v4460, %v4459
    %v4597 = vpack.c.b16 %v4462, %v4461
    %v4598 = vpack.c.b16 %v4464, %v4463
    %v4599 = vpack.c.b16 %v4466, %v4465
    %v4600 = vpack.c.b16 %v4468, %v4467
    %v4601 = vpack.c.b16 %v4470, %v4469
    %v4602 = vpack.c.b16 %v4472, %v4471
    %v4603 = vpack.c.b16 %v4474, %v4473
    %v4604 = vpack.c.b16 %v4476, %v4475
    %4733 = vmatpush.bf16.msra.mxu0 %v4484
    %4734 = vmatpush.bf16.msra.mxu0 %v4483
    %4735 = vmatpush.bf16.msra.mxu0 %v4482
    %4736 = vmatpush.bf16.msra.mxu0 %v4481
    %4737 = vmatpush.bf16.msra.mxu0 %v4480
    %4738 = vmatpush.bf16.msra.mxu0 %v4479
    %4739 = vmatpush.bf16.msra.mxu0 %v4478
    %4740 = vmatpush.bf16.msra.mxu0 %v4477
    %4741 = vmatmul.bf16.gmra.mxu0 %v3690
    %v4742 = vpop.f32.mrf.mxu0
    %v4743 = vadd.f32 %v3964, %v4742
    %v4744 = vpop.f32.mrf.mxu0
    %v4745 = vadd.f32 %v3964, %v4744
    %4746 = vdwg.mxu0
    %4747 = vmatpush.bf16.msra.mxu0 %v4492
    %4748 = vmatpush.bf16.msra.mxu0 %v4491
    %4749 = vmatpush.bf16.msra.mxu0 %v4490
    %4750 = vmatpush.bf16.msra.mxu0 %v4489
    %4751 = vmatpush.bf16.msra.mxu0 %v4488
    %4752 = vmatpush.bf16.msra.mxu0 %v4487
    %4753 = vmatpush.bf16.msra.mxu0 %v4486
    %4754 = vmatpush.bf16.msra.mxu0 %v4485
    %4755 = vmatmul.bf16.gmra.mxu0 %v3691
    %v4756 = vpop.f32.mrf.mxu0
    %v4757 = vadd.f32 %v4743, %v4756
    %v4758 = vpop.f32.mrf.mxu0
    %v4759 = vadd.f32 %v4745, %v4758
    %4760 = vdwg.mxu0
    %4761 = vmatpush.bf16.msra.mxu0 %v4500
    %4762 = vmatpush.bf16.msra.mxu0 %v4499
    %4763 = vmatpush.bf16.msra.mxu0 %v4498
    %4764 = vmatpush.bf16.msra.mxu0 %v4497
    %4765 = vmatpush.bf16.msra.mxu0 %v4496
    %4766 = vmatpush.bf16.msra.mxu0 %v4495
    %4767 = vmatpush.bf16.msra.mxu0 %v4494
    %4768 = vmatpush.bf16.msra.mxu0 %v4493
    %4769 = vmatmul.bf16.gmra.mxu0 %v3692
    %v4770 = vpop.f32.mrf.mxu0
    %v4771 = vadd.f32 %v4757, %v4770
    %v4772 = vpop.f32.mrf.mxu0
    %v4773 = vadd.f32 %v4759, %v4772
    %4774 = vdwg.mxu0
    %4775 = vmatpush.bf16.msra.mxu0 %v4508
    %4776 = vmatpush.bf16.msra.mxu0 %v4507
    %4777 = vmatpush.bf16.msra.mxu0 %v4506
    %4778 = vmatpush.bf16.msra.mxu0 %v4505
    %4779 = vmatpush.bf16.msra.mxu0 %v4504
    %4780 = vmatpush.bf16.msra.mxu0 %v4503
    %4781 = vmatpush.bf16.msra.mxu0 %v4502
    %4782 = vmatpush.bf16.msra.mxu0 %v4501
    %4783 = vmatmul.bf16.gmra.mxu0 %v3693
    %v4784 = vpop.f32.mrf.mxu0
    %v4785 = vadd.f32 %v4771, %v4784
    %v4786 = vpop.f32.mrf.mxu0
    %v4787 = vadd.f32 %v4773, %v4786
    %4788 = vdwg.mxu0
    %4789 = vmatpush.bf16.msra.mxu0 %v4516
    %4790 = vmatpush.bf16.msra.mxu0 %v4515
    %4791 = vmatpush.bf16.msra.mxu0 %v4514
    %4792 = vmatpush.bf16.msra.mxu0 %v4513
    %4793 = vmatpush.bf16.msra.mxu0 %v4512
    %4794 = vmatpush.bf16.msra.mxu0 %v4511
    %4795 = vmatpush.bf16.msra.mxu0 %v4510
    %4796 = vmatpush.bf16.msra.mxu0 %v4509
    %4797 = vmatmul.bf16.gmra.mxu0 %v3694
    %v4798 = vpop.f32.mrf.mxu0
    %v4799 = vadd.f32 %v4785, %v4798
    %v4800 = vpop.f32.mrf.mxu0
    %v4801 = vadd.f32 %v4787, %v4800
    %4802 = vdwg.mxu0
    %4803 = vmatpush.bf16.msra.mxu0 %v4524
    %4804 = vmatpush.bf16.msra.mxu0 %v4523
    %4805 = vmatpush.bf16.msra.mxu0 %v4522
    %4806 = vmatpush.bf16.msra.mxu0 %v4521
    %4807 = vmatpush.bf16.msra.mxu0 %v4520
    %4808 = vmatpush.bf16.msra.mxu0 %v4519
    %4809 = vmatpush.bf16.msra.mxu0 %v4518
    %4810 = vmatpush.bf16.msra.mxu0 %v4517
    %4811 = vmatmul.bf16.gmra.mxu0 %v3695
    %v4812 = vpop.f32.mrf.mxu0
    %v4813 = vadd.f32 %v4799, %v4812
    %v4814 = vpop.f32.mrf.mxu0
    %v4815 = vadd.f32 %v4801, %v4814
    %4816 = vdwg.mxu0
    %4817 = vmatpush.bf16.msra.mxu0 %v4532
    %4818 = vmatpush.bf16.msra.mxu0 %v4531
    %4819 = vmatpush.bf16.msra.mxu0 %v4530
    %4820 = vmatpush.bf16.msra.mxu0 %v4529
    %4821 = vmatpush.bf16.msra.mxu0 %v4528
    %4822 = vmatpush.bf16.msra.mxu0 %v4527
    %4823 = vmatpush.bf16.msra.mxu0 %v4526
    %4824 = vmatpush.bf16.msra.mxu0 %v4525
    %4825 = vmatmul.bf16.gmra.mxu0 %v3696
    %v4826 = vpop.f32.mrf.mxu0
    %v4827 = vadd.f32 %v4813, %v4826
    %v4828 = vpop.f32.mrf.mxu0
    %v4829 = vadd.f32 %v4815, %v4828
    %4830 = vdwg.mxu0
    %4831 = vmatpush.bf16.msra.mxu0 %v4540
    %4832 = vmatpush.bf16.msra.mxu0 %v4539
    %4833 = vmatpush.bf16.msra.mxu0 %v4538
    %4834 = vmatpush.bf16.msra.mxu0 %v4537
    %4835 = vmatpush.bf16.msra.mxu0 %v4536
    %4836 = vmatpush.bf16.msra.mxu0 %v4535
    %4837 = vmatpush.bf16.msra.mxu0 %v4534
    %4838 = vmatpush.bf16.msra.mxu0 %v4533
    %4839 = vmatmul.bf16.gmra.mxu0 %v3697
    %v4840 = vpop.f32.mrf.mxu0
    %v4841 = vadd.f32 %v4827, %v4840
    %v4842 = vpop.f32.mrf.mxu0
    %v4843 = vadd.f32 %v4829, %v4842
    %4844 = vdwg.mxu0
    %4845 = vmatpush.bf16.msra.mxu0 %v4548
    %4846 = vmatpush.bf16.msra.mxu0 %v4547
    %4847 = vmatpush.bf16.msra.mxu0 %v4546
    %4848 = vmatpush.bf16.msra.mxu0 %v4545
    %4849 = vmatpush.bf16.msra.mxu0 %v4544
    %4850 = vmatpush.bf16.msra.mxu0 %v4543
    %4851 = vmatpush.bf16.msra.mxu0 %v4542
    %4852 = vmatpush.bf16.msra.mxu0 %v4541
    %4853 = vmatmul.bf16.gmra.mxu0 %v3698
    %v4854 = vpop.f32.mrf.mxu0
    %v4855 = vadd.f32 %v4841, %v4854
    %v4856 = vpop.f32.mrf.mxu0
    %v4857 = vadd.f32 %v4843, %v4856
    %4858 = vdwg.mxu0
    %4859 = vmatpush.bf16.msra.mxu0 %v4556
    %4860 = vmatpush.bf16.msra.mxu0 %v4555
    %4861 = vmatpush.bf16.msra.mxu0 %v4554
    %4862 = vmatpush.bf16.msra.mxu0 %v4553
    %4863 = vmatpush.bf16.msra.mxu0 %v4552
    %4864 = vmatpush.bf16.msra.mxu0 %v4551
    %4865 = vmatpush.bf16.msra.mxu0 %v4550
    %4866 = vmatpush.bf16.msra.mxu0 %v4549
    %4867 = vmatmul.bf16.gmra.mxu0 %v3699
    %v4868 = vpop.f32.mrf.mxu0
    %v4869 = vadd.f32 %v4855, %v4868
    %v4870 = vpop.f32.mrf.mxu0
    %v4871 = vadd.f32 %v4857, %v4870
    %4872 = vdwg.mxu0
    %4873 = vmatpush.bf16.msra.mxu0 %v4564
    %4874 = vmatpush.bf16.msra.mxu0 %v4563
    %4875 = vmatpush.bf16.msra.mxu0 %v4562
    %4876 = vmatpush.bf16.msra.mxu0 %v4561
    %4877 = vmatpush.bf16.msra.mxu0 %v4560
    %4878 = vmatpush.bf16.msra.mxu0 %v4559
    %4879 = vmatpush.bf16.msra.mxu0 %v4558
    %4880 = vmatpush.bf16.msra.mxu0 %v4557
    %4881 = vmatmul.bf16.gmra.mxu0 %v3700
    %v4882 = vpop.f32.mrf.mxu0
    %v4883 = vadd.f32 %v4869, %v4882
    %v4884 = vpop.f32.mrf.mxu0
    %v4885 = vadd.f32 %v4871, %v4884
    %4886 = vdwg.mxu0
    %4887 = vmatpush.bf16.msra.mxu0 %v4572
    %4888 = vmatpush.bf16.msra.mxu0 %v4571
    %4889 = vmatpush.bf16.msra.mxu0 %v4570
    %4890 = vmatpush.bf16.msra.mxu0 %v4569
    %4891 = vmatpush.bf16.msra.mxu0 %v4568
    %4892 = vmatpush.bf16.msra.mxu0 %v4567
    %4893 = vmatpush.bf16.msra.mxu0 %v4566
    %4894 = vmatpush.bf16.msra.mxu0 %v4565
    %4895 = vmatmul.bf16.gmra.mxu0 %v3701
    %v4896 = vpop.f32.mrf.mxu0
    %v4897 = vadd.f32 %v4883, %v4896
    %v4898 = vpop.f32.mrf.mxu0
    %v4899 = vadd.f32 %v4885, %v4898
    %4900 = vdwg.mxu0
    %4901 = vmatpush.bf16.msra.mxu0 %v4580
    %4902 = vmatpush.bf16.msra.mxu0 %v4579
    %4903 = vmatpush.bf16.msra.mxu0 %v4578
    %4904 = vmatpush.bf16.msra.mxu0 %v4577
    %4905 = vmatpush.bf16.msra.mxu0 %v4576
    %4906 = vmatpush.bf16.msra.mxu0 %v4575
    %4907 = vmatpush.bf16.msra.mxu0 %v4574
    %4908 = vmatpush.bf16.msra.mxu0 %v4573
    %4909 = vmatmul.bf16.gmra.mxu0 %v3702
    %v4910 = vpop.f32.mrf.mxu0
    %v4911 = vadd.f32 %v4897, %v4910
    %v4912 = vpop.f32.mrf.mxu0
    %v4913 = vadd.f32 %v4899, %v4912
    %4914 = vdwg.mxu0
    %4915 = vmatpush.bf16.msra.mxu0 %v4588
    %4916 = vmatpush.bf16.msra.mxu0 %v4587
    %4917 = vmatpush.bf16.msra.mxu0 %v4586
    %4918 = vmatpush.bf16.msra.mxu0 %v4585
    %4919 = vmatpush.bf16.msra.mxu0 %v4584
    %4920 = vmatpush.bf16.msra.mxu0 %v4583
    %4921 = vmatpush.bf16.msra.mxu0 %v4582
    %4922 = vmatpush.bf16.msra.mxu0 %v4581
    %4923 = vmatmul.bf16.gmra.mxu0 %v3703
    %v4924 = vpop.f32.mrf.mxu0
    %v4925 = vadd.f32 %v4911, %v4924
    %v4926 = vpop.f32.mrf.mxu0
    %v4927 = vadd.f32 %v4913, %v4926
    %4928 = vdwg.mxu0
    %4929 = vmatpush.bf16.msra.mxu0 %v4596
    %4930 = vmatpush.bf16.msra.mxu0 %v4595
    %4931 = vmatpush.bf16.msra.mxu0 %v4594
    %4932 = vmatpush.bf16.msra.mxu0 %v4593
    %4933 = vmatpush.bf16.msra.mxu0 %v4592
    %4934 = vmatpush.bf16.msra.mxu0 %v4591
    %4935 = vmatpush.bf16.msra.mxu0 %v4590
    %4936 = vmatpush.bf16.msra.mxu0 %v4589
    %4937 = vmatmul.bf16.gmra.mxu0 %v3704
    %v4938 = vpop.f32.mrf.mxu0
    %v4939 = vadd.f32 %v4925, %v4938
    %v4940 = vpop.f32.mrf.mxu0
    %v4941 = vadd.f32 %v4927, %v4940
    %4942 = vdwg.mxu0
    %4943 = vmatpush.bf16.msra.mxu0 %v4604
    %4944 = vmatpush.bf16.msra.mxu0 %v4603
    %4945 = vmatpush.bf16.msra.mxu0 %v4602
    %4946 = vmatpush.bf16.msra.mxu0 %v4601
    %4947 = vmatpush.bf16.msra.mxu0 %v4600
    %4948 = vmatpush.bf16.msra.mxu0 %v4599
    %4949 = vmatpush.bf16.msra.mxu0 %v4598
    %4950 = vmatpush.bf16.msra.mxu0 %v4597
    %4951 = vmatmul.bf16.gmra.mxu0 %v3705
    %v4952 = vpop.f32.mrf.mxu0
    %v4953 = vadd.f32 %v4939, %v4952
    %v4954 = vpop.f32.mrf.mxu0
    %v4955 = vadd.f32 %v4941, %v4954
    %4956 = vdwg.mxu0
    %v4957 = vadd.f32 %v3113, %v4953
    %v4958 = vadd.f32 %v3114, %v4955
    %v4959 = vld [vmem:[%s2 + $0xc] sm:$0x1]
    %v4960 = vld [vmem:[%s2 + $0xd] sm:$0x1]
    %v4961 = vsel %vm37, %v4957, 0.0
    %4962 = vadd.xlane.f32.xlu0 %v4961
    %v4963 = vpop.xlane.xlu0 %4962
    %v4964 = vsel %vm37, %v4958, 0.0
    %4965 = vadd.xlane.f32.xlu0 %v4964
    %v4966 = vpop.xlane.xlu0 %4965
    %v4967 = vmul.f32 %v4963, %v50
    %v4968 = vmul.f32 %v4966, %v50
    %v4969 = vsub.f32 %v4957, %v4967
    %v4970 = vsub.f32 %v4958, %v4968
    %v4971 = vmul.f32 %v4969, %v4969
    %v4972 = vmul.f32 %v4970, %v4970
    %v4973 = vsel %vm37, %v4971, 0.0
    %4974 = vadd.xlane.f32.xlu0 %v4973
    %v4975 = vpop.xlane.xlu0 %4974
    %v4976 = vsel %vm37, %v4972, 0.0
    %4977 = vadd.xlane.f32.xlu0 %v4976
    %v4978 = vpop.xlane.xlu0 %4977
    %v4979 = vmul.f32 %v4975, 0.032258064
    %v4980 = vmul.f32 %v4978, 0.032258064
    %v4981 = vperm.slane %v4959, 0
    %v4982 = vmul.f32 %v4981, %v4969
    %v4983 = vmul.f32 %v4981, %v4970
    %v4984 = vrsqrt.pop %v4979
    %v4985 = vmul.f32 %v4984, %v4979
    %v4986 = vmul.f32 %v4985, %v4984
    %v4987 = vmul.f32 0.5, %v4986
    %v4988 = vsub.f32 1.5, %v4987
    %v4989 = vmul.f32 %v4984, %v4988
    %v4990 = vmul.f32 %v4979, %v4989
    %vm4991 = vcmp.eq.f32.partialorder %v4979, inf
    %v4992 = vsel %vm4991, %v4979, %v4990
    %vm4993 = vcmp.eq.f32.partialorder %v4979, 0.0
    %v4994 = vand.u32 %v4979, 2147483648
    %v4995 = vsel %vm4993, %v4994, %v4992
    %v4996 = vrsqrt.pop %v4980
    %v4997 = vmul.f32 %v4996, %v4980
    %v4998 = vmul.f32 %v4997, %v4996
    %v4999 = vmul.f32 0.5, %v4998
    %v5000 = vsub.f32 1.5, %v4999
    %v5001 = vmul.f32 %v4996, %v5000
    %v5002 = vmul.f32 %v4980, %v5001
    %vm5003 = vcmp.eq.f32.partialorder %v4980, inf
    %v5004 = vsel %vm5003, %v4980, %v5002
    %vm5005 = vcmp.eq.f32.partialorder %v4980, 0.0
    %v5006 = vand.u32 %v4980, 2147483648
    %v5007 = vsel %vm5005, %v5006, %v5004
    %v5008 = vadd.f32 %v4995, 1e-06
    %v5009 = vadd.f32 %v5007, 1e-06
    %v5010 = vrcp.pop %v5008
    %v5011 = vmul.f32 %v5008, %v5010
    %v5012 = vsub.f32 1.0, %v5011
    %v5013 = vmul.f32 %v5010, %v5012
    %v5014 = vadd.f32 %v5010, %v5013
    %vm5015 = vweird.f32 %v5008
    %vm5016 = vweird.f32 %v5010
    %vm5017 = vmor %vm5015, %vm5016
    %v5018 = vsel %vm5017, %v5010, %v5014
    %v5019 = vand.u32 2147483647, %v5008
    %vm5020 = vcmp.eq.f32.partialorder %v5019, 8.507059e+37
    %v5021 = vand.u32 %v5008, 2147483648
    %v5022 = vor.u32 1.1754944e-38, %v5021
    %v5023 = vsel %vm5020, %v5022, %v5018
    %v5024 = vmul.f32 %v4982, %v5023
    %v5025 = vrcp.pop %v5009
    %v5026 = vmul.f32 %v5009, %v5025
    %v5027 = vsub.f32 1.0, %v5026
    %v5028 = vmul.f32 %v5025, %v5027
    %v5029 = vadd.f32 %v5025, %v5028
    %vm5030 = vweird.f32 %v5009
    %vm5031 = vweird.f32 %v5025
    %vm5032 = vmor %vm5030, %vm5031
    %v5033 = vsel %vm5032, %v5025, %v5029
    %v5034 = vand.u32 2147483647, %v5009
    %vm5035 = vcmp.eq.f32.partialorder %v5034, 8.507059e+37
    %v5036 = vand.u32 %v5009, 2147483648
    %v5037 = vor.u32 1.1754944e-38, %v5036
    %v5038 = vsel %vm5035, %v5037, %v5033
    %v5039 = vmul.f32 %v4983, %v5038
    %v5040 = vperm.slane %v4960, 0
    %v5041 = vadd.f32 %v5024, %v5040
    %v5042 = vadd.f32 %v5039, %v5040
    %5043 = vst.msk [vmem:[#allocation2] sm:$0xff] %vm37, %v5041
    %5044 = vst.msk [vmem:[#allocation2 + $0x8] sm:$0xff] %vm37, %v5042
    // Predicated region
    $region34: #{transformer_forward.1} parent=1 // pred_check
      _
    $region35: #{transformer_forward.1} parent=1 // pred_check_branch
      %5046 = sbr.rel (0) target = $region37
    $region36: #{transformer_forward.1} parent=1 // pred_region
      %5048 = vsyncadd [#allocation3], 0
      %s5049 = sshll.u32 [#allocation2], 4
      %s5050 = int_to_ptr.vmem [resolvable:$true] %s5049
      %s5051 = sshll.u32 %s8, 4
      %s5052 = int_to_ptr.hbm [resolvable:$true] %s5051
      %5057 = dma.vmem_to_hbm [thread:$0]  %s5050, 256, %s5052, [#allocation3], 128, 128, 8
    $region37: #{transformer_forward.1} parent=1 // pred_fallthru
      _
    // Predicated region
    $region38: #{transformer_forward.1} parent=1 // pred_check
      _
    $region39: #{transformer_forward.1} parent=1 // pred_check_branch
      %5059 = sbr.rel (0) target = $region41
    $region40: #{transformer_forward.1} parent=1 // pred_region
      %5061 = dma.done [#allocation3], 256
    $region41: #{transformer_forward.1} parent=1 // pred_fallthru
      _
    %5062 = vsyncpa [#allocation3], 1

</llo_original>
